<compile_context>
chip_gen: v7x
topology: tpu7x:2x2x1
jax: 0.10.0
libtpu: 0.0.40
codegen_flags: <defaults>
</compile_context>

<pallas_src>
import functools

import jax
import jax.numpy as jnp
from jax.experimental import pallas as pl
from jax.experimental.pallas import tpu as pltpu


# ----------------------------------------------------------------------------
# Pallas kernels
# ----------------------------------------------------------------------------

def _linear_kernel(x_ref, w_ref, b_ref, o_ref, *, relu):
    # y = relu?(x @ w + b)
    y = jnp.dot(x_ref[...], w_ref[...], preferred_element_type=jnp.float32)
    y = y + b_ref[...]
    if relu:
        y = jnp.maximum(y, 0.0)
    o_ref[...] = y.astype(o_ref.dtype)


def _linear_residual_kernel(x_ref, w_ref, b_ref, r_ref, o_ref, *, relu):
    # y = relu?((x @ w + b) + residual)   -- fused "W(u) + K(u)" branch
    y = jnp.dot(x_ref[...], w_ref[...], preferred_element_type=jnp.float32)
    y = y + b_ref[...] + r_ref[...]
    if relu:
        y = jnp.maximum(y, 0.0)
    o_ref[...] = y.astype(o_ref.dtype)


def _residual_head_kernel(x_ref, w_ref, b_ref, r_ref,
                          w1_ref, b1_ref, w2_ref, b2_ref, o_ref):
    # Layer-3 W-branch (no ReLU) + spectral residual, then fc1+ReLU+fc2, all
    # fused: the (tn, pack*width) post-layer activation and the (tn, pack*128)
    # fc1 intermediate live only in VMEM / vregs.
    y = jnp.dot(x_ref[...], w_ref[...], preferred_element_type=jnp.float32)
    y = y + b_ref[...] + r_ref[...]
    h = jnp.dot(y, w1_ref[...], preferred_element_type=jnp.float32)
    h = jnp.maximum(h + b1_ref[...], 0.0)
    out = jnp.dot(h, w2_ref[...], preferred_element_type=jnp.float32)
    o_ref[...] = (out + b2_ref[...]).astype(o_ref.dtype)


# ----------------------------------------------------------------------------
# Wrappers
# ----------------------------------------------------------------------------

@functools.lru_cache(maxsize=None)
def _vmem_limit_bytes():
    """Scoped-VMEM limit: generous, but clamped to physical capacity - headroom."""
    cap = 64 * 1024 * 1024
    try:
        cap = int(pltpu.get_tpu_info().vmem_capacity_bytes)
    except Exception:
        pass
    return int(max(32 << 20, min(cap - (16 << 20), 100 << 20)))


def _compiler_params():
    return pltpu.CompilerParams(dimension_semantics=("parallel",),
                                vmem_limit_bytes=_vmem_limit_bytes())


def _row_tile(n_rows, max_rows):
    """Row tile: multiple of 8, <= max_rows, and giving >= 2 grid steps when
    possible so v7x's two TensorCores both get work (harmless on 1-TC chips)."""
    if n_rows <= 16:
        return n_rows                      # too small to split into 8-aligned halves
    half = -(-n_rows // 2)                 # ceil(n/2)
    tile = min(max_rows, 8 * (-(-half // 8)))
    return min(tile, n_rows)


def pallas_linear(x, w, b, *, relu=False, max_rows=2048):
    """y = relu?(x @ w + b).  x: (N, Cin), w: (Cin, Cout), b: (1, Cout)."""
    N, Cin = x.shape
    Cout = w.shape[1]
    tn = _row_tile(N, max_rows)
    grid = pl.cdiv(N, tn)
    return pl.pallas_call(
        functools.partial(_linear_kernel, relu=relu),
        out_shape=jax.ShapeDtypeStruct((N, Cout), x.dtype),
        grid_spec=pltpu.PrefetchScalarGridSpec(
            num_scalar_prefetch=0,
            grid=(grid,),
            in_specs=[
                pl.BlockSpec((tn, Cin), lambda i: (i, 0)),
                pl.BlockSpec((Cin, Cout), lambda i: (0, 0)),
                pl.BlockSpec((1, Cout), lambda i: (0, 0)),
            ],
            out_specs=pl.BlockSpec((tn, Cout), lambda i: (i, 0)),
        ),
        compiler_params=_compiler_params(),
    )(x, w, b)


def pallas_linear_residual(x, w, b, res, *, relu=False, max_rows=2048):
    """y = relu?(x @ w + b + res); the x buffer is donated to the output."""
    N, Cin = x.shape
    Cout = w.shape[1]
    tn = _row_tile(N, max_rows)
    grid = pl.cdiv(N, tn)
    return pl.pallas_call(
        functools.partial(_linear_residual_kernel, relu=relu),
        out_shape=jax.ShapeDtypeStruct((N, Cout), x.dtype),
        grid_spec=pltpu.PrefetchScalarGridSpec(
            num_scalar_prefetch=0,
            grid=(grid,),
            in_specs=[
                pl.BlockSpec((tn, Cin), lambda i: (i, 0)),
                pl.BlockSpec((Cin, Cout), lambda i: (0, 0)),
                pl.BlockSpec((1, Cout), lambda i: (0, 0)),
                pl.BlockSpec((tn, Cout), lambda i: (i, 0)),
            ],
            out_specs=pl.BlockSpec((tn, Cout), lambda i: (i, 0)),
        ),
        input_output_aliases={0: 0},
        compiler_params=_compiler_params(),
    )(x, w, b, res)


def pallas_residual_head(x, w, b, res, w1, b1, w2, b2, *, max_rows=1024):
    """Fused: (x @ w + b + res) -> fc1 -> ReLU -> fc2.
    max_rows kept at 1024 so the (tn, pack*128) f32 fc1 intermediate plus
    double-buffered blocks stay well inside v7x's 64 MiB VMEM."""
    N, Cin = x.shape
    H1 = w1.shape[1]
    Cout = w2.shape[1]
    tn = _row_tile(N, max_rows)
    grid = pl.cdiv(N, tn)
    return pl.pallas_call(
        _residual_head_kernel,
        out_shape=jax.ShapeDtypeStruct((N, Cout), x.dtype),
        grid_spec=pltpu.PrefetchScalarGridSpec(
            num_scalar_prefetch=0,
            grid=(grid,),
            in_specs=[
                pl.BlockSpec((tn, Cin), lambda i: (i, 0)),
                pl.BlockSpec((Cin, Cin), lambda i: (0, 0)),
                pl.BlockSpec((1, Cin), lambda i: (0, 0)),
                pl.BlockSpec((tn, Cin), lambda i: (i, 0)),
                pl.BlockSpec((Cin, H1), lambda i: (0, 0)),
                pl.BlockSpec((1, H1), lambda i: (0, 0)),
                pl.BlockSpec((H1, Cout), lambda i: (0, 0)),
                pl.BlockSpec((1, Cout), lambda i: (0, 0)),
            ],
            out_specs=pl.BlockSpec((tn, Cout), lambda i: (i, 0)),
        ),
        compiler_params=_compiler_params(),
    )(x, w, b, res, w1, b1, w2, b2)


# ----------------------------------------------------------------------------
# Spectral convolution, channels-last (FFT in plain JAX — no Pallas FFT)
# ----------------------------------------------------------------------------

def spectral_conv2d_nhwc(x, w1, w2, modes1, modes2):
    """x: (B, H, W, Cin) f32;  w1, w2: (Cin, Cout, m1, m2) complex64."""
    B, H, W, _ = x.shape
    Cout = w1.shape[1]
    Wf = W // 2 + 1
    # TODO(synk): FFT has no Pallas equivalent; rfft2/irfft2 stay in plain JAX.
    x_ft = jnp.fft.rfft2(x, axes=(1, 2))  # (B, H, Wf, Cin) complex64
    # TODO(synk): complex mode-mix einsum is over tiny (modes x modes) corners,
    # far below (8,128) tiling; kept in plain JAX.
    top = jnp.einsum('bxyi,ioxy->bxyo', x_ft[:, :modes1, :modes2, :], w1)
    bot = jnp.einsum('bxyi,ioxy->bxyo', x_ft[:, H - modes1:, :modes2, :], w2)
    if H >= 2 * modes1 and modes2 <= Wf:
        # Assemble the truncated spectrum from the two corner blocks via
        # concat + pad (single fused write) instead of full-size zeros + 2 scatters.
        mid = jnp.zeros((B, H - 2 * modes1, modes2, Cout), dtype=jnp.complex64)
        cols = jnp.concatenate([top, mid, bot], axis=1)          # (B, H, m2, Cout)
        out_ft = jnp.pad(cols, ((0, 0), (0, 0), (0, Wf - modes2), (0, 0)))
    else:  # degenerate / overlapping-mode fallback — matches reference scatters
        out_ft = jnp.zeros((B, H, Wf, Cout), dtype=jnp.complex64)
        out_ft = out_ft.at[:, :modes1, :modes2, :].set(top)
        out_ft = out_ft.at[:, -modes1:, :modes2, :].set(bot)
    return jnp.fft.irfft2(out_ft, s=(H, W), axes=(1, 2)).astype(x.dtype)


# ----------------------------------------------------------------------------
# FNO2d parameters + forward
# ----------------------------------------------------------------------------

def init_fno2d_params(key, modes1, modes2, width):
    ks = list(jax.random.split(key, 32))
    nxt = lambda: ks.pop()

    def lin(k, fan_in, fan_out):
        k1, k2 = jax.random.split(k)
        bound = 1.0 / jnp.sqrt(fan_in)
        w = jax.random.uniform(k1, (fan_out, fan_in), jnp.float32, -bound, bound)
        b = jax.random.uniform(k2, (fan_out,), jnp.float32, -bound, bound)
        return w, b

    def spec(k, cin, cout):
        k1, k2 = jax.random.split(k)
        scale = 1.0 / (cin * cout)
        shape = (cin, cout, modes1, modes2)
        wr = jax.random.uniform(k1, shape, jnp.float32)
        wi = jax.random.uniform(k2, shape, jnp.float32)
        return (scale * (wr + 1j * wi)).astype(jnp.complex64)

    p = {}
    p["fc0_w"], p["fc0_b"] = lin(nxt(), 3, width)
    for l in range(4):
        p[f"conv{l}_w1"] = spec(nxt(), width, width)
        p[f"conv{l}_w2"] = spec(nxt(), width, width)
        # Conv1d(width, width, 1): weight (out, in, 1) squeezed to (out, in)
        wl, bl = lin(nxt(), width, width)
        p[f"w{l}_w"] = wl
        p[f"w{l}_b"] = bl
    p["fc1_w"], p["fc1_b"] = lin(nxt(), width, 128)
    p["fc2_w"], p["fc2_b"] = lin(nxt(), 128, 1)
    return p


def prepare_params(params, pack):
    """One-time weight packing: transpose to (Cin, Cout) and replicate block-
    diagonally `pack` times so the slab layout (N/pack, pack*C) is lane-dense
    (and the MXU contraction dim becomes pack*width)."""
    eye = jnp.eye(pack, dtype=jnp.float32)

    def blk(w_oi, b):
        w_io = jnp.asarray(w_oi).T                         # (Cin, Cout)
        w_blk = jnp.kron(eye, w_io)                        # (pack*Cin, pack*Cout)
        b_blk = jnp.tile(jnp.asarray(b), pack).reshape(1, -1)
        return w_blk, b_blk

    prep = {"pack": pack}
    prep["fc0_w"], prep["fc0_b"] = blk(params["fc0_w"], params["fc0_b"])
    for l in range(4):
        prep[f"w{l}_w"], prep[f"w{l}_b"] = blk(params[f"w{l}_w"], params[f"w{l}_b"])
        prep[f"conv{l}_w1"] = params[f"conv{l}_w1"]
        prep[f"conv{l}_w2"] = params[f"conv{l}_w2"]
    prep["fc1_w"], prep["fc1_b"] = blk(params["fc1_w"], params["fc1_b"])
    prep["fc2_w"], prep["fc2_b"] = blk(params["fc2_w"], params["fc2_b"])
    return prep


def choose_pack(n_points):
    """pack=8 fills the 256-wide MXU on v6e/v7x; pack=4 on v5e and older."""
    try:
        kind = jax.devices()[0].device_kind.lower()
    except Exception:
        kind = ""
    preferred = 4 if any(v in kind for v in ("v5", "v4", "v3", "v2")) else 8
    for p in (preferred, 8, 4, 2, 1):
        if n_points % p == 0:
            return p
    return 1


def fno2d_forward(prep, x, modes1, modes2, width, pack):
    """x: (B, Sx, Sy, 3) float32  ->  (B, Sx, Sy, 1).  Channels-last throughout."""
    B, Sx, Sy, _ = x.shape
    N = B * Sx * Sy
    assert N % pack == 0, (
        f"N={N} must be divisible by pack={pack}; re-run prepare_params with a "
        f"compatible pack for this input size.")
    Ns = N // pack  # slab rows; (N, C) viewed as (Ns, pack*C) -- free reshape

    # fc0: lift 3 -> width   (Pallas, slab layout)
    x_slab = x.reshape(Ns, pack * 3)
    h_slab = pallas_linear(x_slab, prep["fc0_w"], prep["fc0_b"])  # (Ns, pack*width)

    # Fourier layers 0..2: spectral conv (JAX FFT) + fused W-branch/add/ReLU.
    for l in range(3):
        h_nhwc = h_slab.reshape(B, Sx, Sy, width)                 # free reshape
        x1 = spectral_conv2d_nhwc(h_nhwc, prep[f"conv{l}_w1"],
                                  prep[f"conv{l}_w2"], modes1, modes2)
        res_slab = x1.reshape(Ns, pack * width)                   # free reshape
        h_slab = pallas_linear_residual(
            h_slab, prep[f"w{l}_w"], prep[f"w{l}_b"], res_slab, relu=True)

    # Fourier layer 3 (no ReLU) fused with fc1+ReLU+fc2: the post-layer-3
    # activation and the (N,128) fc1 intermediate never round-trip HBM.
    h_nhwc = h_slab.reshape(B, Sx, Sy, width)
    x1 = spectral_conv2d_nhwc(h_nhwc, prep["conv3_w1"], prep["conv3_w2"],
                              modes1, modes2)
    res_slab = x1.reshape(Ns, pack * width)
    out_slab = pallas_residual_head(
        h_slab, prep["w3_w"], prep["w3_b"], res_slab,
        prep["fc1_w"], prep["fc1_b"], prep["fc2_w"], prep["fc2_b"])  # (Ns, pack)
    return out_slab.reshape(B, Sx, Sy, 1)


if __name__ == "__main__":
    modes1, modes2, width = 4, 4, 32
    B, S = 2, 16

    key = jax.random.PRNGKey(0)
    kp, kx = jax.random.split(key)
    params = init_fno2d_params(kp, modes1, modes2, width)
    x = jax.random.normal(kx, (B, S, S, 3), dtype=jnp.float32)

    N = B * S * S
    pack = choose_pack(N)
    prep = prepare_params(params, pack)

    fwd = jax.jit(functools.partial(
        fno2d_forward, modes1=modes1, modes2=modes2, width=width, pack=pack))
    y = fwd(prep, x)
    jax.block_until_ready(y)
    assert y.shape == (B, S, S, 1), y.shape
    print("KERNEL_OK")
</pallas_src>

<mosaic_0001>
module attributes {stable_mosaic.version = 11 : i64} {
  func.func @_linear_kernel(%arg0: i32, %arg1: memref<32x24xf32, #tpu.memory_space<vmem>>, %arg2: memref<24x256xf32, #tpu.memory_space<vmem>>, %arg3: memref<1x256xf32, #tpu.memory_space<vmem>>, %arg4: memref<32x256xf32, #tpu.memory_space<vmem>>) attributes {dimension_semantics = [#tpu.dimension_semantics<parallel>], iteration_bounds = array<i64: 2>, scalar_prefetch = 0 : i64, scratch_operands = 0 : i64, tpu.core_type = #tpu.core_type<tc>, window_params = [{transform_indices = @transform_0, window_bounds = array<i64: 32, 24>}, {pipeline_mode = #tpu.pipeline_mode<synchronous>, transform_indices = @transform_1, window_bounds = array<i64: 24, 256>}, {pipeline_mode = #tpu.pipeline_mode<synchronous>, transform_indices = @transform_2, window_bounds = array<i64: 1, 256>}, {transform_indices = @transform_3, window_bounds = array<i64: 32, 256>}]} {
    %c0 = arith.constant 0 : index
    %c0_0 = arith.constant 0 : index
    %0 = vector.load %arg1[%c0, %c0_0] : memref<32x24xf32, #tpu.memory_space<vmem>>, vector<32x24xf32>
    %c0_1 = arith.constant 0 : index
    %c0_2 = arith.constant 0 : index
    %1 = vector.load %arg2[%c0_1, %c0_2] : memref<24x256xf32, #tpu.memory_space<vmem>>, vector<24x256xf32>
    %cst = arith.constant dense<0.000000e+00> : vector<32x256xf32>
    %2 = tpu.matmul %0, %1, %cst {dimension_numbers = #tpu.dot_dimension_numbers<[1], [0], [0], [1], [0, 0, 1, 1], [], []>} : vector<32x24xf32>, vector<24x256xf32>, vector<32x256xf32> -> vector<32x256xf32>
    %c0_3 = arith.constant 0 : index
    %c0_4 = arith.constant 0 : index
    %3 = vector.load %arg3[%c0_3, %c0_4] : memref<1x256xf32, #tpu.memory_space<vmem>>, vector<1x256xf32>
    %4 = vector.broadcast %3 : vector<1x256xf32> to vector<32x256xf32>
    %5 = arith.addf %2, %4 : vector<32x256xf32>
    %c0_5 = arith.constant 0 : index
    %c0_6 = arith.constant 0 : index
    %6 = vector.load %arg4[%c0_5, %c0_6] : memref<32x256xf32, #tpu.memory_space<vmem>>, vector<32x256xf32>
    tpu.vector_store %arg4[%c0_5, %c0_6], %5 {strides = array<i32>} : memref<32x256xf32, #tpu.memory_space<vmem>>, vector<32x256xf32>,
    return
  }
  func.func @transform_0(%arg0: i32) -> (i32, i32) {
    %c0_i32 = arith.constant 0 : i32
    %c0_i32_0 = arith.constant 0 : i32
    return %arg0, %c0_i32 : i32, i32
  }
  func.func @transform_1(%arg0: i32) -> (i32, i32) {
    %c0_i32 = arith.constant 0 : i32
    %c0_i32_0 = arith.constant 0 : i32
    %c0_i32_1 = arith.constant 0 : i32
    return %c0_i32, %c0_i32_0 : i32, i32
  }
  func.func @transform_2(%arg0: i32) -> (i32, i32) {
    %c0_i32 = arith.constant 0 : i32
    %c0_i32_0 = arith.constant 0 : i32
    %c0_i32_1 = arith.constant 0 : i32
    return %c0_i32, %c0_i32_0 : i32, i32
  }
  func.func @transform_3(%arg0: i32) -> (i32, i32) {
    %c0_i32 = arith.constant 0 : i32
    %c0_i32_0 = arith.constant 0 : i32
    return %arg0, %c0_i32 : i32, i32
  }
}

module attributes {stable_mosaic.version = 11 : i64} {
  func.func @_linear_residual_kernel(%arg0: i32, %arg1: memref<32x256xf32, #tpu.memory_space<vmem>>, %arg2: memref<256x256xf32, #tpu.memory_space<vmem>>, %arg3: memref<1x256xf32, #tpu.memory_space<vmem>>, %arg4: memref<32x256xf32, #tpu.memory_space<vmem>>, %arg5: memref<32x256xf32, #tpu.memory_space<vmem>>) attributes {dimension_semantics = [#tpu.dimension_semantics<parallel>], iteration_bounds = array<i64: 2>, scalar_prefetch = 0 : i64, scratch_operands = 0 : i64, tpu.core_type = #tpu.core_type<tc>, window_params = [{transform_indices = @transform_0, window_bounds = array<i64: 32, 256>}, {pipeline_mode = #tpu.pipeline_mode<synchronous>, transform_indices = @transform_1, window_bounds = array<i64: 256, 256>}, {pipeline_mode = #tpu.pipeline_mode<synchronous>, transform_indices = @transform_2, window_bounds = array<i64: 1, 256>}, {transform_indices = @transform_3, window_bounds = array<i64: 32, 256>}, {transform_indices = @transform_4, window_bounds = array<i64: 32, 256>}]} {
    %c0 = arith.constant 0 : index
    %c0_0 = arith.constant 0 : index
    %0 = vector.load %arg1[%c0, %c0_0] : memref<32x256xf32, #tpu.memory_space<vmem>>, vector<32x256xf32>
    %c0_1 = arith.constant 0 : index
    %c0_2 = arith.constant 0 : index
    %1 = vector.load %arg2[%c0_1, %c0_2] : memref<256x256xf32, #tpu.memory_space<vmem>>, vector<256x256xf32>
    %cst = arith.constant dense<0.000000e+00> : vector<32x256xf32>
    %2 = tpu.matmul %0, %1, %cst {dimension_numbers = #tpu.dot_dimension_numbers<[1], [0], [0], [1], [0, 0, 1, 1], [], []>} : vector<32x256xf32>, vector<256x256xf32>, vector<32x256xf32> -> vector<32x256xf32>
    %c0_3 = arith.constant 0 : index
    %c0_4 = arith.constant 0 : index
    %3 = vector.load %arg3[%c0_3, %c0_4] : memref<1x256xf32, #tpu.memory_space<vmem>>, vector<1x256xf32>
    %4 = vector.broadcast %3 : vector<1x256xf32> to vector<32x256xf32>
    %5 = arith.addf %2, %4 : vector<32x256xf32>
    %c0_5 = arith.constant 0 : index
    %c0_6 = arith.constant 0 : index
    %6 = vector.load %arg4[%c0_5, %c0_6] : memref<32x256xf32, #tpu.memory_space<vmem>>, vector<32x256xf32>
    %7 = arith.addf %5, %6 : vector<32x256xf32>
    %cst_7 = arith.constant 0.000000e+00 : f32
    %8 = vector.broadcast %cst_7 : f32 to vector<32x256xf32>
    %9 = arith.maximumf %7, %8 : vector<32x256xf32>
    %c0_8 = arith.constant 0 : index
    %c0_9 = arith.constant 0 : index
    %10 = vector.load %arg5[%c0_8, %c0_9] : memref<32x256xf32, #tpu.memory_space<vmem>>, vector<32x256xf32>
    tpu.vector_store %arg5[%c0_8, %c0_9], %9 {strides = array<i32>} : memref<32x256xf32, #tpu.memory_space<vmem>>, vector<32x256xf32>,
    return
  }
  func.func @transform_0(%arg0: i32) -> (i32, i32) {
    %c0_i32 = arith.constant 0 : i32
    %c0_i32_0 = arith.constant 0 : i32
    return %arg0, %c0_i32 : i32, i32
  }
  func.func @transform_1(%arg0: i32) -> (i32, i32) {
    %c0_i32 = arith.constant 0 : i32
    %c0_i32_0 = arith.constant 0 : i32
    %c0_i32_1 = arith.constant 0 : i32
    return %c0_i32, %c0_i32_0 : i32, i32
  }
  func.func @transform_2(%arg0: i32) -> (i32, i32) {
    %c0_i32 = arith.constant 0 : i32
    %c0_i32_0 = arith.constant 0 : i32
    %c0_i32_1 = arith.constant 0 : i32
    return %c0_i32, %c0_i32_0 : i32, i32
  }
  func.func @transform_3(%arg0: i32) -> (i32, i32) {
    %c0_i32 = arith.constant 0 : i32
    %c0_i32_0 = arith.constant 0 : i32
    return %arg0, %c0_i32 : i32, i32
  }
  func.func @transform_4(%arg0: i32) -> (i32, i32) {
    %c0_i32 = arith.constant 0 : i32
    %c0_i32_0 = arith.constant 0 : i32
    return %arg0, %c0_i32 : i32, i32
  }
}

module attributes {stable_mosaic.version = 11 : i64} {
  func.func @_residual_head_kernel(%arg0: i32, %arg1: memref<32x256xf32, #tpu.memory_space<vmem>>, %arg2: memref<256x256xf32, #tpu.memory_space<vmem>>, %arg3: memref<1x256xf32, #tpu.memory_space<vmem>>, %arg4: memref<32x256xf32, #tpu.memory_space<vmem>>, %arg5: memref<256x1024xf32, #tpu.memory_space<vmem>>, %arg6: memref<1x1024xf32, #tpu.memory_space<vmem>>, %arg7: memref<1024x8xf32, #tpu.memory_space<vmem>>, %arg8: memref<1x8xf32, #tpu.memory_space<vmem>>, %arg9: memref<32x8xf32, #tpu.memory_space<vmem>>) attributes {dimension_semantics = [#tpu.dimension_semantics<parallel>], iteration_bounds = array<i64: 2>, scalar_prefetch = 0 : i64, scratch_operands = 0 : i64, tpu.core_type = #tpu.core_type<tc>, window_params = [{transform_indices = @transform_0, window_bounds = array<i64: 32, 256>}, {pipeline_mode = #tpu.pipeline_mode<synchronous>, transform_indices = @transform_1, window_bounds = array<i64: 256, 256>}, {pipeline_mode = #tpu.pipeline_mode<synchronous>, transform_indices = @transform_2, window_bounds = array<i64: 1, 256>}, {transform_indices = @transform_3, window_bounds = array<i64: 32, 256>}, {pipeline_mode = #tpu.pipeline_mode<synchronous>, transform_indices = @transform_4, window_bounds = array<i64: 256, 1024>}, {pipeline_mode = #tpu.pipeline_mode<synchronous>, transform_indices = @transform_5, window_bounds = array<i64: 1, 1024>}, {pipeline_mode = #tpu.pipeline_mode<synchronous>, transform_indices = @transform_6, window_bounds = array<i64: 1024, 8>}, {pipeline_mode = #tpu.pipeline_mode<synchronous>, transform_indices = @transform_7, window_bounds = array<i64: 1, 8>}, {transform_indices = @transform_8, window_bounds = array<i64: 32, 8>}]} {
    %c0 = arith.constant 0 : index
    %c0_0 = arith.constant 0 : index
    %0 = vector.load %arg1[%c0, %c0_0] : memref<32x256xf32, #tpu.memory_space<vmem>>, vector<32x256xf32>
    %c0_1 = arith.constant 0 : index
    %c0_2 = arith.constant 0 : index
    %1 = vector.load %arg2[%c0_1, %c0_2] : memref<256x256xf32, #tpu.memory_space<vmem>>, vector<256x256xf32>
    %cst = arith.constant dense<0.000000e+00> : vector<32x256xf32>
    %2 = tpu.matmul %0, %1, %cst {dimension_numbers = #tpu.dot_dimension_numbers<[1], [0], [0], [1], [0, 0, 1, 1], [], []>} : vector<32x256xf32>, vector<256x256xf32>, vector<32x256xf32> -> vector<32x256xf32>
    %c0_3 = arith.constant 0 : index
    %c0_4 = arith.constant 0 : index
    %3 = vector.load %arg3[%c0_3, %c0_4] : memref<1x256xf32, #tpu.memory_space<vmem>>, vector<1x256xf32>
    %4 = vector.broadcast %3 : vector<1x256xf32> to vector<32x256xf32>
    %5 = arith.addf %2, %4 : vector<32x256xf32>
    %c0_5 = arith.constant 0 : index
    %c0_6 = arith.constant 0 : index
    %6 = vector.load %arg4[%c0_5, %c0_6] : memref<32x256xf32, #tpu.memory_space<vmem>>, vector<32x256xf32>
    %7 = arith.addf %5, %6 : vector<32x256xf32>
    %c0_7 = arith.constant 0 : index
    %c0_8 = arith.constant 0 : index
    %8 = vector.load %arg5[%c0_7, %c0_8] : memref<256x1024xf32, #tpu.memory_space<vmem>>, vector<256x1024xf32>
    %cst_9 = arith.constant dense<0.000000e+00> : vector<32x1024xf32>
    %9 = tpu.matmul %7, %8, %cst_9 {dimension_numbers = #tpu.dot_dimension_numbers<[1], [0], [0], [1], [0, 0, 1, 1], [], []>} : vector<32x256xf32>, vector<256x1024xf32>, vector<32x1024xf32> -> vector<32x1024xf32>
    %c0_10 = arith.constant 0 : index
    %c0_11 = arith.constant 0 : index
    %10 = vector.load %arg6[%c0_10, %c0_11] : memref<1x1024xf32, #tpu.memory_space<vmem>>, vector<1x1024xf32>
    %11 = vector.broadcast %10 : vector<1x1024xf32> to vector<32x1024xf32>
    %12 = arith.addf %9, %11 : vector<32x1024xf32>
    %cst_12 = arith.constant 0.000000e+00 : f32
    %13 = vector.broadcast %cst_12 : f32 to vector<32x1024xf32>
    %14 = arith.maximumf %12, %13 : vector<32x1024xf32>
    %c0_13 = arith.constant 0 : index
    %c0_14 = arith.constant 0 : index
    %15 = vector.load %arg7[%c0_13, %c0_14] : memref<1024x8xf32, #tpu.memory_space<vmem>>, vector<1024x8xf32>
    %cst_15 = arith.constant dense<0.000000e+00> : vector<32x8xf32>
    %16 = tpu.matmul %14, %15, %cst_15 {dimension_numbers = #tpu.dot_dimension_numbers<[1], [0], [0], [1], [0, 0, 1, 1], [], []>} : vector<32x1024xf32>, vector<1024x8xf32>, vector<32x8xf32> -> vector<32x8xf32>
    %c0_16 = arith.constant 0 : index
    %c0_17 = arith.constant 0 : index
    %17 = vector.load %arg8[%c0_16, %c0_17] : memref<1x8xf32, #tpu.memory_space<vmem>>, vector<1x8xf32>
    %18 = vector.broadcast %17 : vector<1x8xf32> to vector<32x8xf32>
    %19 = arith.addf %16, %18 : vector<32x8xf32>
    %c0_18 = arith.constant 0 : index
    %c0_19 = arith.constant 0 : index
    %20 = vector.load %arg9[%c0_18, %c0_19] : memref<32x8xf32, #tpu.memory_space<vmem>>, vector<32x8xf32>
    tpu.vector_store %arg9[%c0_18, %c0_19], %19 {strides = array<i32>} : memref<32x8xf32, #tpu.memory_space<vmem>>, vector<32x8xf32>,
    return
  }
  func.func @transform_0(%arg0: i32) -> (i32, i32) {
    %c0_i32 = arith.constant 0 : i32
    %c0_i32_0 = arith.constant 0 : i32
    return %arg0, %c0_i32 : i32, i32
  }
  func.func @transform_1(%arg0: i32) -> (i32, i32) {
    %c0_i32 = arith.constant 0 : i32
    %c0_i32_0 = arith.constant 0 : i32
    %c0_i32_1 = arith.constant 0 : i32
    return %c0_i32, %c0_i32_0 : i32, i32
  }
  func.func @transform_2(%arg0: i32) -> (i32, i32) {
    %c0_i32 = arith.constant 0 : i32
    %c0_i32_0 = arith.constant 0 : i32
    %c0_i32_1 = arith.constant 0 : i32
    return %c0_i32, %c0_i32_0 : i32, i32
  }
  func.func @transform_3(%arg0: i32) -> (i32, i32) {
    %c0_i32 = arith.constant 0 : i32
    %c0_i32_0 = arith.constant 0 : i32
    return %arg0, %c0_i32 : i32, i32
  }
  func.func @transform_4(%arg0: i32) -> (i32, i32) {
    %c0_i32 = arith.constant 0 : i32
    %c0_i32_0 = arith.constant 0 : i32
    %c0_i32_1 = arith.constant 0 : i32
    return %c0_i32, %c0_i32_0 : i32, i32
  }
  func.func @transform_5(%arg0: i32) -> (i32, i32) {
    %c0_i32 = arith.constant 0 : i32
    %c0_i32_0 = arith.constant 0 : i32
    %c0_i32_1 = arith.constant 0 : i32
    return %c0_i32, %c0_i32_0 : i32, i32
  }
  func.func @transform_6(%arg0: i32) -> (i32, i32) {
    %c0_i32 = arith.constant 0 : i32
    %c0_i32_0 = arith.constant 0 : i32
    %c0_i32_1 = arith.constant 0 : i32
    return %c0_i32, %c0_i32_0 : i32, i32
  }
  func.func @transform_7(%arg0: i32) -> (i32, i32) {
    %c0_i32 = arith.constant 0 : i32
    %c0_i32_0 = arith.constant 0 : i32
    %c0_i32_1 = arith.constant 0 : i32
    return %c0_i32, %c0_i32_0 : i32, i32
  }
  func.func @transform_8(%arg0: i32) -> (i32, i32) {
    %c0_i32 = arith.constant 0 : i32
    %c0_i32_0 = arith.constant 0 : i32
    return %arg0, %c0_i32 : i32, i32
  }
}

</mosaic_0001>

<llo_original>
// kernel: fno2d_forward.5
$region0: #{fno2d_forward.5}
  #allocation0 [shape = 'u32[]', space=smem, size = 0x4, offset = 0x4, fixed_abs, tag = 'smem constant byte address 0x4 - core index']
  #allocation1 [shape = 'u32[144,128]{1,0:T(1,128)}', space=vmem, size = 0x12000, scoped, tag = 'internal scratch']
  %s0 = inlined_call_operand.vmem [shape: f32[64,24], index: 0, kind: input, shape index: {}]
  %s1 = inlined_call_operand.vmem [shape: f32[24,256], index: 1, kind: input, shape index: {}]
  %s2 = inlined_call_operand.vmem [shape: f32[1,256], index: 2, kind: input, shape index: {}]
  %s3 = inlined_call_operand.vmem [shape: f32[64,256], index: 3, kind: output, shape index: {}]
  %s4 = sld [smem:[#allocation0]]
  $region45: #{fno2d_forward.5} parent=0
    _
  %s6 = ssub.s32 1, %s4
  %s7 = scalar_select 0, %s6, %s4
  loop: start=0, step=1, limit=4
  $region2: #{fno2d_forward.5} parent=0 // loop_pre_header
    _
  $region3: #{fno2d_forward.5} parent=0 // loop_header
    %s9 = sphi 0, %s13
    %p10 = scmp.ge.s32.totalorder %s9, 4
    %s19 = sphi 0, %s21
    %s22 = sphi 0, %s19
    %s23 = sphi 0, %s22
    %s39 = sphi 0, %s23
    %s43 = sphi 0, %s43
    %s45 = sphi 0, %s43
    %s46 = sphi 0, %s45
    %s60 = sphi 0, %s46
    %s64 = sphi 0, %s64
    %s66 = sphi 0, %s64
    %s67 = sphi 0, %s66
    %s81 = sphi 0, %s67
    %s87 = sphi 0, %s89
    %s90 = sphi 0, %s87
    %s91 = sphi 0, %s90
    %s107 = sphi 0, %s91
  $region4: #{fno2d_forward.5} parent=0 // loop_header_branch
    %12 = sbr.rel (%p10) target = $region8
  $region5: #{fno2d_forward.5} parent=0 // loop_body
    %s14 = ssub.s32 %s9, 1
    %s15 = ssub.s32 %s9, 2
    %s16 = sadd.s32 %s9, 1
    %s17 = ssub.s32 %s9, %s16
    %p18 = scmp.eq.s32.totalorder %s17, 0
    %s20 = sadd.s32 %s19, 1
    %s21 = scalar_select %p18, %s19, %s20
    %p24 = pneg %p18
    %p25 = scmp.eq.s32.totalorder %s9, 1
    %p26 = por %p24, %p25
    %p27 = scmp.ne.s32.totalorder %s19, %s22
    %p28 = scmp.eq.s32.totalorder %s9, 0
    %p29 = por %p27, %p28
    %p30 = scmp.ne.s32.totalorder %s19, %s22
    %p31 = scmp.eq.s32.totalorder %s14, 1
    %p32 = por %p30, %p31
    %p33 = scmp.ne.s32.totalorder %s22, %s23
    %p34 = scmp.eq.s32.totalorder %s14, 0
    %p35 = por %p33, %p34
    %p36 = scmp.ne.s32.totalorder %s22, %s23
    %p37 = scmp.eq.s32.totalorder %s15, 1
    %p38 = por %p36, %p37
    %p40 = scmp.ne.s32.totalorder %s23, %s39
    %p41 = scmp.eq.s32.totalorder %s15, 0
    %p42 = por %p40, %p41
    %s44 = sadd.s32 %s43, 1
    %p47 = scmp.eq.s32.totalorder %s9, 1
    %p48 = scmp.ne.s32.totalorder %s43, %s45
    %p49 = scmp.eq.s32.totalorder %s9, 0
    %p50 = por %p48, %p49
    %p51 = scmp.ne.s32.totalorder %s43, %s45
    %p52 = scmp.eq.s32.totalorder %s14, 1
    %p53 = por %p51, %p52
    %p54 = scmp.ne.s32.totalorder %s45, %s46
    %p55 = scmp.eq.s32.totalorder %s14, 0
    %p56 = por %p54, %p55
    %p57 = scmp.ne.s32.totalorder %s45, %s46
    %p58 = scmp.eq.s32.totalorder %s15, 1
    %p59 = por %p57, %p58
    %p61 = scmp.ne.s32.totalorder %s46, %s60
    %p62 = scmp.eq.s32.totalorder %s15, 0
    %p63 = por %p61, %p62
    %s65 = sadd.s32 %s64, 1
    %p68 = scmp.eq.s32.totalorder %s9, 1
    %p69 = scmp.ne.s32.totalorder %s64, %s66
    %p70 = scmp.eq.s32.totalorder %s9, 0
    %p71 = por %p69, %p70
    %p72 = scmp.ne.s32.totalorder %s64, %s66
    %p73 = scmp.eq.s32.totalorder %s14, 1
    %p74 = por %p72, %p73
    %p75 = scmp.ne.s32.totalorder %s66, %s67
    %p76 = scmp.eq.s32.totalorder %s14, 0
    %p77 = por %p75, %p76
    %p78 = scmp.ne.s32.totalorder %s66, %s67
    %p79 = scmp.eq.s32.totalorder %s15, 1
    %p80 = por %p78, %p79
    %p82 = scmp.ne.s32.totalorder %s67, %s81
    %p83 = scmp.eq.s32.totalorder %s15, 0
    %p84 = por %p82, %p83
    %s85 = ssub.s32 %s9, %s16
    %p86 = scmp.eq.s32.totalorder %s85, 0
    %s88 = sadd.s32 %s87, 1
    %s89 = scalar_select %p86, %s87, %s88
    %p92 = pneg %p86
    %p93 = scmp.eq.s32.totalorder %s9, 1
    %p94 = por %p92, %p93
    %p95 = scmp.ne.s32.totalorder %s87, %s90
    %p96 = scmp.eq.s32.totalorder %s9, 0
    %p97 = por %p95, %p96
    %p98 = scmp.ne.s32.totalorder %s87, %s90
    %p99 = scmp.eq.s32.totalorder %s14, 1
    %p100 = por %p98, %p99
    %p101 = scmp.ne.s32.totalorder %s90, %s91
    %p102 = scmp.eq.s32.totalorder %s14, 0
    %p103 = por %p101, %p102
    %p104 = scmp.ne.s32.totalorder %s90, %s91
    %p105 = scmp.eq.s32.totalorder %s15, 1
    %p106 = por %p104, %p105
    %p108 = scmp.ne.s32.totalorder %s91, %s107
    %p109 = scmp.eq.s32.totalorder %s15, 0
    %p110 = por %p108, %p109
    %p111 = scmp.le.s32.totalorder 1, %s9
    %p112 = scmp.lt.s32.totalorder %s9, 3
    %p113 = pnand %p111, %p112
    %p114 = pneg %p113
    // Predicated region
    $region9: #{fno2d_forward.5} parent=5 // pred_check
      _
    $region10: #{fno2d_forward.5} parent=5 // pred_check_branch
      %116 = sbr.rel (%p113) target = $region12
    $region11: #{fno2d_forward.5} parent=5 // pred_region
      %s117 = ssub.s32 %s9, 1
      // Predicated region
      $region13: #{fno2d_forward.5} parent=11 // pred_check
        %p118 = pneg %p56
      $region14: #{fno2d_forward.5} parent=11 // pred_check_branch
        %120 = sbr.rel (%p118) target = $region16
      $region15: #{fno2d_forward.5} parent=11 // pred_region
        _
      $region16: #{fno2d_forward.5} parent=11 // pred_fallthru
        _
      // Predicated region
      $region17: #{fno2d_forward.5} parent=11 // pred_check
        %p121 = pneg %p77
      $region18: #{fno2d_forward.5} parent=11 // pred_check_branch
        %123 = sbr.rel (%p121) target = $region20
      $region19: #{fno2d_forward.5} parent=11 // pred_region
        _
      $region20: #{fno2d_forward.5} parent=11 // pred_fallthru
        _
    $region12: #{fno2d_forward.5} parent=5 // pred_fallthru
      _
    %p124 = scmp.lt.s32.totalorder %s9, 2
    // Predicated region
    $region21: #{fno2d_forward.5} parent=5 // pred_check
      %p125 = pneg %p124
    $region22: #{fno2d_forward.5} parent=5 // pred_check_branch
      %127 = sbr.rel (%p125) target = $region24
    $region23: #{fno2d_forward.5} parent=5 // pred_region
      // Predicated region
      $region25: #{fno2d_forward.5} parent=23 // pred_check
        %p128 = pneg %p29
      $region26: #{fno2d_forward.5} parent=23 // pred_check_branch
        %130 = sbr.rel (%p128) target = $region28
      $region27: #{fno2d_forward.5} parent=23 // pred_region
        %s131 = smul.u32 4, %s9
        %p132 = scmp.lt.s32.totalorder %s131, 7
        %s133 = scalar_select %p132, %s131, 7
        %s134 = smul.addr %s133, 8
        %s135 = scalar_lea.vmem %s0, %s134
        %s136 = smul.u32 4, %s9
      $region28: #{fno2d_forward.5} parent=23 // pred_fallthru
        _
    $region24: #{fno2d_forward.5} parent=5 // pred_fallthru
      _
    %p137 = scmp.le.s32.totalorder 1, %s9
    %p138 = scmp.lt.s32.totalorder %s9, 3
    %p139 = pnand %p137, %p138
    %p140 = pneg %p139
    // Predicated region
    $region29: #{fno2d_forward.5} parent=5 // pred_check
      _
    $region30: #{fno2d_forward.5} parent=5 // pred_check_branch
      %142 = sbr.rel (%p139) target = $region32
    $region31: #{fno2d_forward.5} parent=5 // pred_region
      %s143 = ssub.s32 %s9, 1
      %s144 = smul.u32 4, %s14
      %p145 = scmp.lt.s32.totalorder %s144, 7
      %s146 = scalar_select %p145, %s144, 7
      %s147 = smul.addr %s146, 8
      %s148 = scalar_lea.vmem %s0, %s147
      %p149 = pneg %p35
      %p150 = pneg %p32
      %p151 = pneg %p56
      %p152 = pneg %p53
      %p153 = pneg %p77
      %p154 = pneg %p74
      %p155 = pneg %p103
      %p156 = pneg %p100
      %s157 = smul.u32 4, %s14
      %p158 = scmp.lt.s32.totalorder %s157, 7
      %s159 = scalar_select %p158, %s157, 7
      %s160 = smul.addr %s159, 2
      %s161 = smul.addr %s160, 8
      %s162 = scalar_lea.vmem %s3, %s161
      %s163 = smul.u32 4, %s14
      %p164 = scmp.lt.s32.totalorder %s163, 7
      %s165 = scalar_select %p164, %s163, 7
      %s166 = smul.addr %s165, 8
      %s167 = scalar_lea.vmem %s0, %s166
      %s168 = smul.u32 4, %s14
      %s169 = smul.u32 4, %s14
      %p170 = scmp.lt.s32.totalorder %s169, 7
      %s171 = scalar_select %p170, %s169, 7
      %s172 = smul.addr %s171, 2
      %s173 = smul.addr %s172, 8
      %s174 = scalar_lea.vmem %s3, %s173
      %s175 = smul.u32 4, %s14
      %v176 = vld [vmem:[%s167] sm:$0xff]
      %v177 = vld [vmem:[%s167 + $0x8] sm:$0xff]
      %v178 = vld [vmem:[%s167 + $0x10] sm:$0xff]
      %v179 = vld [vmem:[%s167 + $0x18] sm:$0xff]
      %v180 = vld [vmem:[%s1] sm:$0xff]
      %v181 = vld [vmem:[%s1 + $0x8] sm:$0xff]
      %v182 = vld [vmem:[%s1 + $0x10] sm:$0xff]
      %v183 = vld [vmem:[%s1 + $0x18] sm:$0xff]
      %v184 = vld [vmem:[%s1 + $0x20] sm:$0xff]
      %v185 = vld [vmem:[%s1 + $0x28] sm:$0xff]
      %v186 = vld [vmem:[%s2] sm:$0x3]
      %v188 = vlaneseq
      %v189 = vshrl.u32 %v188, 7
      %v190 = vsub.s32 0, %v189
      %v191 = vrot.slane %v186, %v190
      %v192 = vlaneseq
      %v193 = vshrl.u32 %v192, 7
      %v194 = vsub.s32 1, %v193
      %v195 = vrot.slane %v186, %v194
      %vm198 = vcmask 195584
      %v200 = vsel %vm198, %v176, 0
      %v203 = vsel %vm198, %v177, 0
      %v206 = vsel %vm198, %v178, 0
      %v209 = vsel %vm198, %v179, 0
      %211 = vmatprep.subr.mxu0 %v181
      %212 = vmatpush1.msra.mxu0 %v180
      %213 = vmatprep.subr.mxu0 %v183
      %214 = vmatpush1.msra.mxu0 %v182
      %215 = vmatprep.subr.mxu0 %v185
      %216 = vmatpush1.msra.mxu0 %v184
      %217 = vmatprep.subr.mxu0 0.0
      %218 = vmatpush1.msra.mxu0 0.0
      %219 = vmatprep.subr.mxu0 0.0
      %220 = vmatpush1.msra.mxu0 0.0
      %221 = vmatprep.subr.mxu0 0.0
      %222 = vmatpush1.msra.mxu0 0.0
      %223 = vmatprep.subr.mxu0 0.0
      %224 = vmatpush1.msra.mxu0 0.0
      %225 = vmatprep.subr.mxu0 0.0
      %226 = vmatpush1.msra.mxu0 0.0
      %227 = vmatprep.subr.mxu0 0.0
      %228 = vmatpush1.msra.mxu0 0.0
      %229 = vmatprep.subr.mxu0 0.0
      %230 = vmatpush1.msra.mxu0 0.0
      %231 = vmatprep.subr.mxu0 0.0
      %232 = vmatpush1.msra.mxu0 0.0
      %233 = vmatprep.subr.mxu0 0.0
      %234 = vmatpush1.msra.mxu0 0.0
      %235 = vmatprep.subr.mxu0 0.0
      %236 = vmatpush1.msra.mxu0 0.0
      %237 = vmatprep.subr.mxu0 0.0
      %238 = vmatpush1.msra.mxu0 0.0
      %239 = vmatprep.subr.mxu0 0.0
      %240 = vmatpush1.msra.mxu0 0.0
      %241 = vmatprep.subr.mxu0 0.0
      %242 = vmatpush1.msra.mxu0 0.0
      %243 = vmatprep.subr.mxu0 0.0
      %244 = vmatpush1.msra.mxu0 0.0
      %245 = vmatprep.subr.mxu0 0.0
      %246 = vmatpush1.msra.mxu0 0.0
      %247 = vmatprep.subr.mxu0 0.0
      %248 = vmatpush1.msra.mxu0 0.0
      %249 = vmatprep.subr.mxu0 0.0
      %250 = vmatpush1.msra.mxu0 0.0
      %251 = vmatprep.subr.mxu0 0.0
      %252 = vmatpush1.msra.mxu0 0.0
      %253 = vmatprep.subr.mxu0 0.0
      %254 = vmatpush1.msra.mxu0 0.0
      %255 = vmatprep.subr.mxu0 0.0
      %256 = vmatpush1.msra.mxu0 0.0
      %257 = vmatprep.subr.mxu0 0.0
      %258 = vmatpush1.msra.mxu0 0.0
      %259 = vmatprep.subr.mxu0 0.0
      %260 = vmatpush1.msra.mxu0 0.0
      %261 = vmatprep.subr.mxu0 0.0
      %262 = vmatpush1.msra.mxu0 0.0
      %263 = vmatprep.subr.mxu0 0.0
      %264 = vmatpush1.msra.mxu0 0.0
      %265 = vmatprep.subr.mxu0 0.0
      %266 = vmatpush1.msra.mxu0 0.0
      %267 = vmatprep.subr.mxu0 0.0
      %268 = vmatpush1.msra.mxu0 0.0
      %269 = vmatprep.subr.mxu0 0.0
      %270 = vmatpush1.msra.mxu0 0.0
      %271 = vmatprep.subr.mxu0 0.0
      %272 = vmatpush1.msra.mxu0 0.0
      %273 = vmatprep.subr.mxu0 0.0
      %274 = vmatpush1.msra.mxu0 0.0
      %275 = vmatprep.mubr.f32.mxu0 0.0
      %276 = vmatmul.mubr.f32.gmra.mrb[0].mxu0 %v200
      %v277 = vpop.f32.mrb[0].mxu0
      %v278 = vadd.f32 %v191, %v277
      %v279 = vpop.f32.mrb[0].mxu0
      %v280 = vadd.f32 %v195, %v279
      %281 = vmatprep.mubr.f32.mxu0 0.0
      %282 = vmatmul.mubr.f32.gmra.mrb[0].mxu0 %v203
      %v283 = vpop.f32.mrb[0].mxu0
      %v284 = vadd.f32 %v191, %v283
      %v285 = vpop.f32.mrb[0].mxu0
      %v286 = vadd.f32 %v195, %v285
      %287 = vmatprep.mubr.f32.mxu0 0.0
      %288 = vmatmul.mubr.f32.gmra.mrb[0].mxu0 %v206
      %v289 = vpop.f32.mrb[0].mxu0
      %v290 = vadd.f32 %v191, %v289
      %v291 = vpop.f32.mrb[0].mxu0
      %v292 = vadd.f32 %v195, %v291
      %293 = vmatprep.mubr.f32.mxu0 0.0
      %294 = vmatmul.mubr.f32.gmra.mrb[0].mxu0 %v209
      %v295 = vpop.f32.mrb[0].mxu0
      %v296 = vadd.f32 %v191, %v295
      %v297 = vpop.f32.mrb[0].mxu0
      %v298 = vadd.f32 %v195, %v297
      %299 = vdwg.mxu0
      %300 = vst [vmem:[%s174] sm:$0xff] %v278
      %301 = vst [vmem:[%s174 + $0x8] sm:$0xff] %v280
      %302 = vst [vmem:[%s174 + $0x10] sm:$0xff] %v284
      %303 = vst [vmem:[%s174 + $0x18] sm:$0xff] %v286
      %304 = vst [vmem:[%s174 + $0x20] sm:$0xff] %v290
      %305 = vst [vmem:[%s174 + $0x28] sm:$0xff] %v292
      %306 = vst [vmem:[%s174 + $0x30] sm:$0xff] %v296
      %307 = vst [vmem:[%s174 + $0x38] sm:$0xff] %v298
      %s308 = smul.u32 4, %s14
      %p309 = scmp.lt.s32.totalorder %s308, 7
      %s310 = scalar_select %p309, %s308, 7
      %s311 = smul.addr %s310, 2
      %s312 = smul.addr %s311, 8
      %s313 = scalar_lea.vmem %s3, %s312
      // Predicated region
      $region33: #{fno2d_forward.5} parent=31 // pred_check
        %p314 = pneg %p100
      $region34: #{fno2d_forward.5} parent=31 // pred_check_branch
        %316 = sbr.rel (%p314) target = $region36
      $region35: #{fno2d_forward.5} parent=31 // pred_region
        %s317 = smul.u32 4, %s14
      $region36: #{fno2d_forward.5} parent=31 // pred_fallthru
        _
    $region32: #{fno2d_forward.5} parent=5 // pred_fallthru
      _
    %p318 = scmp.le.s32.totalorder 2, %s9
    // Predicated region
    $region37: #{fno2d_forward.5} parent=5 // pred_check
      %p319 = pneg %p318
    $region38: #{fno2d_forward.5} parent=5 // pred_check_branch
      %321 = sbr.rel (%p319) target = $region40
    $region39: #{fno2d_forward.5} parent=5 // pred_region
      %s322 = ssub.s32 %s9, 2
      // Predicated region
      $region41: #{fno2d_forward.5} parent=39 // pred_check
        %p323 = pneg %p106
      $region42: #{fno2d_forward.5} parent=39 // pred_check_branch
        %325 = sbr.rel (%p323) target = $region44
      $region43: #{fno2d_forward.5} parent=39 // pred_region
        %s326 = smul.u32 4, %s15
        %p327 = scmp.lt.s32.totalorder %s326, 7
        %s328 = scalar_select %p327, %s326, 7
        %s329 = smul.addr %s328, 2
        %s330 = smul.addr %s329, 8
        %s331 = scalar_lea.vmem %s3, %s330
      $region44: #{fno2d_forward.5} parent=39 // pred_fallthru
        _
    $region40: #{fno2d_forward.5} parent=5 // pred_fallthru
      _
  $region6: #{fno2d_forward.5} parent=0 // loop_footer
    %s13 = sadd.s32 1, %s9
  $region7: #{fno2d_forward.5} parent=0 // loop_footer_branch
    %8 = sbr.rel target = $region3
  $region8: #{fno2d_forward.5} parent=0 // loop_exit
    _

// kernel: custom-call
$region0: #{custom-call}
  %s0 = inlined_call_operand.hbm [shape: c64[32,32,4,4], index: 0, kind: input, shape index: {}]
  %s1 = inlined_call_operand.vmem [shape: f32[32,32,4,4], index: 1, kind: output, shape index: {}]
  $region1: #{custom-call} parent=0
    #allocation0 [shape = 's32[1]{0}', space=sflag, size = 0x4, scoped, tag = 'scoped memory for custom-call']
    %2 = vsyncpa [#allocation0], 0
    %s3 = sshll.u32 %s1, 4
    %s4 = int_to_ptr.vmem [resolvable:$true] %s3
    %6 = dma.hbm_to_vmem [thread:$0]  %s0, 8192, %s4, [#allocation0]
    %7 = dma.done [#allocation0], 8192
    %8 = vsyncpa [#allocation0], 1

// kernel: custom-call.1
$region0: #{custom-call.1}
  %s0 = inlined_call_operand.hbm [shape: c64[32,32,4,4], index: 0, kind: input, shape index: {}]
  %s1 = inlined_call_operand.vmem [shape: f32[32,32,4,4], index: 1, kind: output, shape index: {}]
  %s2 = scalar_lea.hbm %s0, 8192
  $region1: #{custom-call.1} parent=0
    #allocation0 [shape = 's32[1]{0}', space=sflag, size = 0x4, scoped, tag = 'scoped memory for custom-call.1']
    %3 = vsyncpa [#allocation0], 0
    %s4 = sshll.u32 %s1, 4
    %s5 = int_to_ptr.vmem [resolvable:$true] %s4
    %7 = dma.hbm_to_vmem [thread:$0]  %s2, 8192, %s5, [#allocation0]
    %8 = dma.done [#allocation0], 8192
    %9 = vsyncpa [#allocation0], 1

// kernel: reverse.8
$region0: #{reverse.8}
  #allocation0 [shape = 's32[1]{0}', space=sflag, size = 0x4, scoped, tag = 'scoped memory for reverse.8']
  %s0 = inlined_call_operand.vmem [shape: f32[2,32,16,7], index: 0, kind: input, shape index: {}]
  %s1 = inlined_call_operand.vmem [shape: f32[2,32,16,7], index: 1, kind: output, shape index: {}]
  %s2 = scalar_lea.vmem %s0, 96
  %v3 = vld [vmem:[%s2] sm:$0xff]
  %4 = vst [vmem:[%s1] sm:$0xff] %v3
  %s5 = scalar_lea.vmem %s0, 208
  %v6 = vld [vmem:[%s5] sm:$0xff]
  %s7 = scalar_lea.vmem %s1, 112
  %8 = vst [vmem:[%s7] sm:$0xff] %v6
  %s9 = scalar_lea.vmem %s0, 80
  %v10 = vld [vmem:[%s9] sm:$0xff]
  %s11 = scalar_lea.vmem %s1, 16
  %12 = vst [vmem:[%s11] sm:$0xff] %v10
  %s13 = scalar_lea.vmem %s0, 192
  %v14 = vld [vmem:[%s13] sm:$0xff]
  %s15 = scalar_lea.vmem %s1, 128
  %16 = vst [vmem:[%s15] sm:$0xff] %v14
  %s17 = scalar_lea.vmem %s0, 64
  %v18 = vld [vmem:[%s17] sm:$0xff]
  %s19 = scalar_lea.vmem %s1, 32
  %20 = vst [vmem:[%s19] sm:$0xff] %v18
  %s21 = scalar_lea.vmem %s0, 176
  %v22 = vld [vmem:[%s21] sm:$0xff]
  %s23 = scalar_lea.vmem %s1, 144
  %24 = vst [vmem:[%s23] sm:$0xff] %v22
  %s25 = scalar_lea.vmem %s0, 48
  %v26 = vld [vmem:[%s25] sm:$0xff]
  %s27 = scalar_lea.vmem %s1, 48
  %28 = vst [vmem:[%s27] sm:$0xff] %v26
  %s29 = scalar_lea.vmem %s0, 160
  %v30 = vld [vmem:[%s29] sm:$0xff]
  %s31 = scalar_lea.vmem %s1, 160
  %32 = vst [vmem:[%s31] sm:$0xff] %v30
  %s33 = scalar_lea.vmem %s0, 32
  %v34 = vld [vmem:[%s33] sm:$0xff]
  %s35 = scalar_lea.vmem %s1, 64
  %36 = vst [vmem:[%s35] sm:$0xff] %v34
  %s37 = scalar_lea.vmem %s0, 144
  %v38 = vld [vmem:[%s37] sm:$0xff]
  %s39 = scalar_lea.vmem %s1, 176
  %40 = vst [vmem:[%s39] sm:$0xff] %v38
  %s41 = scalar_lea.vmem %s0, 16
  %v42 = vld [vmem:[%s41] sm:$0xff]
  %s43 = scalar_lea.vmem %s1, 80
  %44 = vst [vmem:[%s43] sm:$0xff] %v42
  %s45 = scalar_lea.vmem %s0, 128
  %v46 = vld [vmem:[%s45] sm:$0xff]
  %s47 = scalar_lea.vmem %s1, 192
  %48 = vst [vmem:[%s47] sm:$0xff] %v46
  %v49 = vld [vmem:[%s0] sm:$0xff]
  %s50 = scalar_lea.vmem %s1, 96
  %51 = vst [vmem:[%s50] sm:$0xff] %v49
  %s52 = scalar_lea.vmem %s0, 112
  %v53 = vld [vmem:[%s52] sm:$0xff]
  %s54 = scalar_lea.vmem %s1, 208
  %55 = vst [vmem:[%s54] sm:$0xff] %v53
  %s56 = scalar_lea.vmem %s0, 104
  %v57 = vld [vmem:[%s56] sm:$0xff]
  %s58 = scalar_lea.vmem %s1, 8
  %59 = vst [vmem:[%s58] sm:$0xff] %v57
  %s60 = scalar_lea.vmem %s0, 216
  %v61 = vld [vmem:[%s60] sm:$0xff]
  %s62 = scalar_lea.vmem %s1, 120
  %63 = vst [vmem:[%s62] sm:$0xff] %v61
  %s64 = scalar_lea.vmem %s0, 88
  %v65 = vld [vmem:[%s64] sm:$0xff]
  %s66 = scalar_lea.vmem %s1, 24
  %67 = vst [vmem:[%s66] sm:$0xff] %v65
  %s68 = scalar_lea.vmem %s0, 200
  %v69 = vld [vmem:[%s68] sm:$0xff]
  %s70 = scalar_lea.vmem %s1, 136
  %71 = vst [vmem:[%s70] sm:$0xff] %v69
  %s72 = scalar_lea.vmem %s0, 72
  %v73 = vld [vmem:[%s72] sm:$0xff]
  %s74 = scalar_lea.vmem %s1, 40
  %75 = vst [vmem:[%s74] sm:$0xff] %v73
  %s76 = scalar_lea.vmem %s0, 184
  %v77 = vld [vmem:[%s76] sm:$0xff]
  %s78 = scalar_lea.vmem %s1, 152
  %79 = vst [vmem:[%s78] sm:$0xff] %v77
  %s80 = scalar_lea.vmem %s0, 56
  %v81 = vld [vmem:[%s80] sm:$0xff]
  %s82 = scalar_lea.vmem %s1, 56
  %83 = vst [vmem:[%s82] sm:$0xff] %v81
  %s84 = scalar_lea.vmem %s0, 168
  %v85 = vld [vmem:[%s84] sm:$0xff]
  %s86 = scalar_lea.vmem %s1, 168
  %87 = vst [vmem:[%s86] sm:$0xff] %v85
  %s88 = scalar_lea.vmem %s0, 40
  %v89 = vld [vmem:[%s88] sm:$0xff]
  %s90 = scalar_lea.vmem %s1, 72
  %91 = vst [vmem:[%s90] sm:$0xff] %v89
  %s92 = scalar_lea.vmem %s0, 152
  %v93 = vld [vmem:[%s92] sm:$0xff]
  %s94 = scalar_lea.vmem %s1, 184
  %95 = vst [vmem:[%s94] sm:$0xff] %v93
  %s96 = scalar_lea.vmem %s0, 24
  %v97 = vld [vmem:[%s96] sm:$0xff]
  %s98 = scalar_lea.vmem %s1, 88
  %99 = vst [vmem:[%s98] sm:$0xff] %v97
  %s100 = scalar_lea.vmem %s0, 136
  %v101 = vld [vmem:[%s100] sm:$0xff]
  %s102 = scalar_lea.vmem %s1, 200
  %103 = vst [vmem:[%s102] sm:$0xff] %v101
  %s104 = scalar_lea.vmem %s0, 8
  %v105 = vld [vmem:[%s104] sm:$0xff]
  %s106 = scalar_lea.vmem %s1, 104
  %107 = vst [vmem:[%s106] sm:$0xff] %v105
  %s108 = scalar_lea.vmem %s0, 120
  %v109 = vld [vmem:[%s108] sm:$0xff]
  %s110 = scalar_lea.vmem %s1, 216
  %111 = vst [vmem:[%s110] sm:$0xff] %v109

// kernel: fno2d_forward.6
$region0: #{fno2d_forward.6}
  #allocation0 [shape = 'u32[]', space=smem, size = 0x4, offset = 0x4, fixed_abs, tag = 'smem constant byte address 0x4 - core index']
  #allocation1 [shape = 'u32[144,128]{1,0:T(1,128)}', space=vmem, size = 0x12000, scoped, tag = 'internal scratch']
  %s0 = inlined_call_operand.vmem [shape: f32[64,256], index: 0, kind: input, shape index: {}, may-alias: {0,4}]
  %s1 = inlined_call_operand.vmem [shape: f32[256,256], index: 1, kind: input, shape index: {}]
  %s2 = inlined_call_operand.vmem [shape: f32[1,256], index: 2, kind: input, shape index: {}]
  %s3 = inlined_call_operand.vmem [shape: f32[64,256], index: 3, kind: input, shape index: {}]
  %s4 = inlined_call_operand.vmem [shape: f32[64,256], index: 4, kind: output, shape index: {}, may-alias: {0,4}]
  %s5 = sld [smem:[#allocation0]]
  $region49: #{fno2d_forward.6} parent=0
    _
  %s7 = ssub.s32 1, %s5
  %s8 = scalar_select 0, %s7, %s5
  loop: start=0, step=1, limit=4
  $region2: #{fno2d_forward.6} parent=0 // loop_pre_header
    _
  $region3: #{fno2d_forward.6} parent=0 // loop_header
    %s10 = sphi 0, %s14
    %p11 = scmp.ge.s32.totalorder %s10, 4
    %s20 = sphi 0, %s22
    %s23 = sphi 0, %s20
    %s24 = sphi 0, %s23
    %s40 = sphi 0, %s24
    %s44 = sphi 0, %s44
    %s46 = sphi 0, %s44
    %s47 = sphi 0, %s46
    %s61 = sphi 0, %s47
    %s65 = sphi 0, %s65
    %s67 = sphi 0, %s65
    %s68 = sphi 0, %s67
    %s82 = sphi 0, %s68
    %s88 = sphi 0, %s90
    %s91 = sphi 0, %s88
    %s92 = sphi 0, %s91
    %s108 = sphi 0, %s92
    %s114 = sphi 0, %s116
    %s117 = sphi 0, %s114
    %s118 = sphi 0, %s117
    %s134 = sphi 0, %s118
  $region4: #{fno2d_forward.6} parent=0 // loop_header_branch
    %13 = sbr.rel (%p11) target = $region8
  $region5: #{fno2d_forward.6} parent=0 // loop_body
    %s15 = ssub.s32 %s10, 1
    %s16 = ssub.s32 %s10, 2
    %s17 = sadd.s32 %s10, 1
    %s18 = ssub.s32 %s10, %s17
    %p19 = scmp.eq.s32.totalorder %s18, 0
    %s21 = sadd.s32 %s20, 1
    %s22 = scalar_select %p19, %s20, %s21
    %p25 = pneg %p19
    %p26 = scmp.eq.s32.totalorder %s10, 1
    %p27 = por %p25, %p26
    %p28 = scmp.ne.s32.totalorder %s20, %s23
    %p29 = scmp.eq.s32.totalorder %s10, 0
    %p30 = por %p28, %p29
    %p31 = scmp.ne.s32.totalorder %s20, %s23
    %p32 = scmp.eq.s32.totalorder %s15, 1
    %p33 = por %p31, %p32
    %p34 = scmp.ne.s32.totalorder %s23, %s24
    %p35 = scmp.eq.s32.totalorder %s15, 0
    %p36 = por %p34, %p35
    %p37 = scmp.ne.s32.totalorder %s23, %s24
    %p38 = scmp.eq.s32.totalorder %s16, 1
    %p39 = por %p37, %p38
    %p41 = scmp.ne.s32.totalorder %s24, %s40
    %p42 = scmp.eq.s32.totalorder %s16, 0
    %p43 = por %p41, %p42
    %s45 = sadd.s32 %s44, 1
    %p48 = scmp.eq.s32.totalorder %s10, 1
    %p49 = scmp.ne.s32.totalorder %s44, %s46
    %p50 = scmp.eq.s32.totalorder %s10, 0
    %p51 = por %p49, %p50
    %p52 = scmp.ne.s32.totalorder %s44, %s46
    %p53 = scmp.eq.s32.totalorder %s15, 1
    %p54 = por %p52, %p53
    %p55 = scmp.ne.s32.totalorder %s46, %s47
    %p56 = scmp.eq.s32.totalorder %s15, 0
    %p57 = por %p55, %p56
    %p58 = scmp.ne.s32.totalorder %s46, %s47
    %p59 = scmp.eq.s32.totalorder %s16, 1
    %p60 = por %p58, %p59
    %p62 = scmp.ne.s32.totalorder %s47, %s61
    %p63 = scmp.eq.s32.totalorder %s16, 0
    %p64 = por %p62, %p63
    %s66 = sadd.s32 %s65, 1
    %p69 = scmp.eq.s32.totalorder %s10, 1
    %p70 = scmp.ne.s32.totalorder %s65, %s67
    %p71 = scmp.eq.s32.totalorder %s10, 0
    %p72 = por %p70, %p71
    %p73 = scmp.ne.s32.totalorder %s65, %s67
    %p74 = scmp.eq.s32.totalorder %s15, 1
    %p75 = por %p73, %p74
    %p76 = scmp.ne.s32.totalorder %s67, %s68
    %p77 = scmp.eq.s32.totalorder %s15, 0
    %p78 = por %p76, %p77
    %p79 = scmp.ne.s32.totalorder %s67, %s68
    %p80 = scmp.eq.s32.totalorder %s16, 1
    %p81 = por %p79, %p80
    %p83 = scmp.ne.s32.totalorder %s68, %s82
    %p84 = scmp.eq.s32.totalorder %s16, 0
    %p85 = por %p83, %p84
    %s86 = ssub.s32 %s10, %s17
    %p87 = scmp.eq.s32.totalorder %s86, 0
    %s89 = sadd.s32 %s88, 1
    %s90 = scalar_select %p87, %s88, %s89
    %p93 = pneg %p87
    %p94 = scmp.eq.s32.totalorder %s10, 1
    %p95 = por %p93, %p94
    %p96 = scmp.ne.s32.totalorder %s88, %s91
    %p97 = scmp.eq.s32.totalorder %s10, 0
    %p98 = por %p96, %p97
    %p99 = scmp.ne.s32.totalorder %s88, %s91
    %p100 = scmp.eq.s32.totalorder %s15, 1
    %p101 = por %p99, %p100
    %p102 = scmp.ne.s32.totalorder %s91, %s92
    %p103 = scmp.eq.s32.totalorder %s15, 0
    %p104 = por %p102, %p103
    %p105 = scmp.ne.s32.totalorder %s91, %s92
    %p106 = scmp.eq.s32.totalorder %s16, 1
    %p107 = por %p105, %p106
    %p109 = scmp.ne.s32.totalorder %s92, %s108
    %p110 = scmp.eq.s32.totalorder %s16, 0
    %p111 = por %p109, %p110
    %s112 = ssub.s32 %s10, %s17
    %p113 = scmp.eq.s32.totalorder %s112, 0
    %s115 = sadd.s32 %s114, 1
    %s116 = scalar_select %p113, %s114, %s115
    %p119 = pneg %p113
    %p120 = scmp.eq.s32.totalorder %s10, 1
    %p121 = por %p119, %p120
    %p122 = scmp.ne.s32.totalorder %s114, %s117
    %p123 = scmp.eq.s32.totalorder %s10, 0
    %p124 = por %p122, %p123
    %p125 = scmp.ne.s32.totalorder %s114, %s117
    %p126 = scmp.eq.s32.totalorder %s15, 1
    %p127 = por %p125, %p126
    %p128 = scmp.ne.s32.totalorder %s117, %s118
    %p129 = scmp.eq.s32.totalorder %s15, 0
    %p130 = por %p128, %p129
    %p131 = scmp.ne.s32.totalorder %s117, %s118
    %p132 = scmp.eq.s32.totalorder %s16, 1
    %p133 = por %p131, %p132
    %p135 = scmp.ne.s32.totalorder %s118, %s134
    %p136 = scmp.eq.s32.totalorder %s16, 0
    %p137 = por %p135, %p136
    %p138 = scmp.le.s32.totalorder 1, %s10
    %p139 = scmp.lt.s32.totalorder %s10, 3
    %p140 = pnand %p138, %p139
    %p141 = pneg %p140
    // Predicated region
    $region9: #{fno2d_forward.6} parent=5 // pred_check
      _
    $region10: #{fno2d_forward.6} parent=5 // pred_check_branch
      %143 = sbr.rel (%p140) target = $region12
    $region11: #{fno2d_forward.6} parent=5 // pred_region
      %s144 = ssub.s32 %s10, 1
      // Predicated region
      $region13: #{fno2d_forward.6} parent=11 // pred_check
        %p145 = pneg %p57
      $region14: #{fno2d_forward.6} parent=11 // pred_check_branch
        %147 = sbr.rel (%p145) target = $region16
      $region15: #{fno2d_forward.6} parent=11 // pred_region
        _
      $region16: #{fno2d_forward.6} parent=11 // pred_fallthru
        _
      // Predicated region
      $region17: #{fno2d_forward.6} parent=11 // pred_check
        %p148 = pneg %p78
      $region18: #{fno2d_forward.6} parent=11 // pred_check_branch
        %150 = sbr.rel (%p148) target = $region20
      $region19: #{fno2d_forward.6} parent=11 // pred_region
        _
      $region20: #{fno2d_forward.6} parent=11 // pred_fallthru
        _
    $region12: #{fno2d_forward.6} parent=5 // pred_fallthru
      _
    %p151 = scmp.lt.s32.totalorder %s10, 2
    // Predicated region
    $region21: #{fno2d_forward.6} parent=5 // pred_check
      %p152 = pneg %p151
    $region22: #{fno2d_forward.6} parent=5 // pred_check_branch
      %154 = sbr.rel (%p152) target = $region24
    $region23: #{fno2d_forward.6} parent=5 // pred_region
      // Predicated region
      $region25: #{fno2d_forward.6} parent=23 // pred_check
        %p155 = pneg %p30
      $region26: #{fno2d_forward.6} parent=23 // pred_check_branch
        %157 = sbr.rel (%p155) target = $region28
      $region27: #{fno2d_forward.6} parent=23 // pred_region
        %s158 = smul.u32 4, %s10
        %p159 = scmp.lt.s32.totalorder %s158, 7
        %s160 = scalar_select %p159, %s158, 7
        %s161 = smul.addr %s160, 2
        %s162 = smul.addr %s161, 8
        %s163 = scalar_lea.vmem %s0, %s162
        %s164 = smul.u32 4, %s10
      $region28: #{fno2d_forward.6} parent=23 // pred_fallthru
        _
      // Predicated region
      $region29: #{fno2d_forward.6} parent=23 // pred_check
        %p165 = pneg %p98
      $region30: #{fno2d_forward.6} parent=23 // pred_check_branch
        %167 = sbr.rel (%p165) target = $region32
      $region31: #{fno2d_forward.6} parent=23 // pred_region
        %s168 = smul.u32 4, %s10
        %p169 = scmp.lt.s32.totalorder %s168, 7
        %s170 = scalar_select %p169, %s168, 7
        %s171 = smul.addr %s170, 2
        %s172 = smul.addr %s171, 8
        %s173 = scalar_lea.vmem %s3, %s172
        %s174 = smul.u32 4, %s10
      $region32: #{fno2d_forward.6} parent=23 // pred_fallthru
        _
    $region24: #{fno2d_forward.6} parent=5 // pred_fallthru
      _
    %p175 = scmp.le.s32.totalorder 1, %s10
    %p176 = scmp.lt.s32.totalorder %s10, 3
    %p177 = pnand %p175, %p176
    %p178 = pneg %p177
    // Predicated region
    $region33: #{fno2d_forward.6} parent=5 // pred_check
      _
    $region34: #{fno2d_forward.6} parent=5 // pred_check_branch
      %180 = sbr.rel (%p177) target = $region36
    $region35: #{fno2d_forward.6} parent=5 // pred_region
      %s181 = ssub.s32 %s10, 1
      %s182 = smul.u32 4, %s15
      %p183 = scmp.lt.s32.totalorder %s182, 7
      %s184 = scalar_select %p183, %s182, 7
      %s185 = smul.addr %s184, 2
      %s186 = smul.addr %s185, 8
      %s187 = scalar_lea.vmem %s0, %s186
      %p188 = pneg %p36
      %p189 = pneg %p33
      %p190 = pneg %p57
      %p191 = pneg %p54
      %p192 = pneg %p78
      %p193 = pneg %p75
      %s194 = smul.u32 4, %s15
      %p195 = scmp.lt.s32.totalorder %s194, 7
      %s196 = scalar_select %p195, %s194, 7
      %s197 = smul.addr %s196, 2
      %s198 = smul.addr %s197, 8
      %s199 = scalar_lea.vmem %s3, %s198
      %p200 = pneg %p104
      %p201 = pneg %p101
      %p202 = pneg %p130
      %p203 = pneg %p127
      %s204 = smul.u32 4, %s15
      %p205 = scmp.lt.s32.totalorder %s204, 7
      %s206 = scalar_select %p205, %s204, 7
      %s207 = smul.addr %s206, 2
      %s208 = smul.addr %s207, 8
      %s209 = scalar_lea.vmem %s4, %s208
      %s210 = smul.u32 4, %s15
      %p211 = scmp.lt.s32.totalorder %s210, 7
      %s212 = scalar_select %p211, %s210, 7
      %s213 = smul.addr %s212, 2
      %s214 = smul.addr %s213, 8
      %s215 = scalar_lea.vmem %s0, %s214
      %s216 = smul.u32 4, %s15
      %s217 = smul.u32 4, %s15
      %p218 = scmp.lt.s32.totalorder %s217, 7
      %s219 = scalar_select %p218, %s217, 7
      %s220 = smul.addr %s219, 2
      %s221 = smul.addr %s220, 8
      %s222 = scalar_lea.vmem %s3, %s221
      %s223 = smul.u32 4, %s15
      %s224 = smul.u32 4, %s15
      %p225 = scmp.lt.s32.totalorder %s224, 7
      %s226 = scalar_select %p225, %s224, 7
      %s227 = smul.addr %s226, 2
      %s228 = smul.addr %s227, 8
      %s229 = scalar_lea.vmem %s4, %s228
      %s230 = smul.u32 4, %s15
      %v231 = vld [vmem:[%s215] sm:$0xff]
      %v232 = vld [vmem:[%s215 + $0x8] sm:$0xff]
      %v233 = vld [vmem:[%s215 + $0x10] sm:$0xff]
      %v234 = vld [vmem:[%s215 + $0x18] sm:$0xff]
      %v235 = vld [vmem:[%s215 + $0x20] sm:$0xff]
      %v236 = vld [vmem:[%s215 + $0x28] sm:$0xff]
      %v237 = vld [vmem:[%s215 + $0x30] sm:$0xff]
      %v238 = vld [vmem:[%s215 + $0x38] sm:$0xff]
      %v239 = vld [vmem:[%s1] sm:$0xff]
      %v240 = vld [vmem:[%s1 + $0x8] sm:$0xff]
      %v241 = vld [vmem:[%s1 + $0x10] sm:$0xff]
      %v242 = vld [vmem:[%s1 + $0x18] sm:$0xff]
      %v243 = vld [vmem:[%s1 + $0x20] sm:$0xff]
      %v244 = vld [vmem:[%s1 + $0x28] sm:$0xff]
      %v245 = vld [vmem:[%s1 + $0x30] sm:$0xff]
      %v246 = vld [vmem:[%s1 + $0x38] sm:$0xff]
      %v247 = vld [vmem:[%s1 + $0x40] sm:$0xff]
      %v248 = vld [vmem:[%s1 + $0x48] sm:$0xff]
      %v249 = vld [vmem:[%s1 + $0x50] sm:$0xff]
      %v250 = vld [vmem:[%s1 + $0x58] sm:$0xff]
      %v251 = vld [vmem:[%s1 + $0x60] sm:$0xff]
      %v252 = vld [vmem:[%s1 + $0x68] sm:$0xff]
      %v253 = vld [vmem:[%s1 + $0x70] sm:$0xff]
      %v254 = vld [vmem:[%s1 + $0x78] sm:$0xff]
      %v255 = vld [vmem:[%s1 + $0x80] sm:$0xff]
      %v256 = vld [vmem:[%s1 + $0x88] sm:$0xff]
      %v257 = vld [vmem:[%s1 + $0x90] sm:$0xff]
      %v258 = vld [vmem:[%s1 + $0x98] sm:$0xff]
      %v259 = vld [vmem:[%s1 + $0xa0] sm:$0xff]
      %v260 = vld [vmem:[%s1 + $0xa8] sm:$0xff]
      %v261 = vld [vmem:[%s1 + $0xb0] sm:$0xff]
      %v262 = vld [vmem:[%s1 + $0xb8] sm:$0xff]
      %v263 = vld [vmem:[%s1 + $0xc0] sm:$0xff]
      %v264 = vld [vmem:[%s1 + $0xc8] sm:$0xff]
      %v265 = vld [vmem:[%s1 + $0xd0] sm:$0xff]
      %v266 = vld [vmem:[%s1 + $0xd8] sm:$0xff]
      %v267 = vld [vmem:[%s1 + $0xe0] sm:$0xff]
      %v268 = vld [vmem:[%s1 + $0xe8] sm:$0xff]
      %v269 = vld [vmem:[%s1 + $0xf0] sm:$0xff]
      %v270 = vld [vmem:[%s1 + $0xf8] sm:$0xff]
      %v271 = vld [vmem:[%s1 + $0x100] sm:$0xff]
      %v272 = vld [vmem:[%s1 + $0x108] sm:$0xff]
      %v273 = vld [vmem:[%s1 + $0x110] sm:$0xff]
      %v274 = vld [vmem:[%s1 + $0x118] sm:$0xff]
      %v275 = vld [vmem:[%s1 + $0x120] sm:$0xff]
      %v276 = vld [vmem:[%s1 + $0x128] sm:$0xff]
      %v277 = vld [vmem:[%s1 + $0x130] sm:$0xff]
      %v278 = vld [vmem:[%s1 + $0x138] sm:$0xff]
      %v279 = vld [vmem:[%s1 + $0x140] sm:$0xff]
      %v280 = vld [vmem:[%s1 + $0x148] sm:$0xff]
      %v281 = vld [vmem:[%s1 + $0x150] sm:$0xff]
      %v282 = vld [vmem:[%s1 + $0x158] sm:$0xff]
      %v283 = vld [vmem:[%s1 + $0x160] sm:$0xff]
      %v284 = vld [vmem:[%s1 + $0x168] sm:$0xff]
      %v285 = vld [vmem:[%s1 + $0x170] sm:$0xff]
      %v286 = vld [vmem:[%s1 + $0x178] sm:$0xff]
      %v287 = vld [vmem:[%s1 + $0x180] sm:$0xff]
      %v288 = vld [vmem:[%s1 + $0x188] sm:$0xff]
      %v289 = vld [vmem:[%s1 + $0x190] sm:$0xff]
      %v290 = vld [vmem:[%s1 + $0x198] sm:$0xff]
      %v291 = vld [vmem:[%s1 + $0x1a0] sm:$0xff]
      %v292 = vld [vmem:[%s1 + $0x1a8] sm:$0xff]
      %v293 = vld [vmem:[%s1 + $0x1b0] sm:$0xff]
      %v294 = vld [vmem:[%s1 + $0x1b8] sm:$0xff]
      %v295 = vld [vmem:[%s1 + $0x1c0] sm:$0xff]
      %v296 = vld [vmem:[%s1 + $0x1c8] sm:$0xff]
      %v297 = vld [vmem:[%s1 + $0x1d0] sm:$0xff]
      %v298 = vld [vmem:[%s1 + $0x1d8] sm:$0xff]
      %v299 = vld [vmem:[%s1 + $0x1e0] sm:$0xff]
      %v300 = vld [vmem:[%s1 + $0x1e8] sm:$0xff]
      %v301 = vld [vmem:[%s1 + $0x1f0] sm:$0xff]
      %v302 = vld [vmem:[%s1 + $0x1f8] sm:$0xff]
      %v303 = vld [vmem:[%s2] sm:$0x3]
      %v305 = vlaneseq
      %v306 = vshrl.u32 %v305, 7
      %v307 = vsub.s32 0, %v306
      %v308 = vrot.slane %v303, %v307
      %v309 = vlaneseq
      %v310 = vshrl.u32 %v309, 7
      %v311 = vsub.s32 1, %v310
      %v312 = vrot.slane %v303, %v311
      %315 = vmatprep.subr.mxu0 %v240
      %316 = vmatpush1.msra.mxu0 %v239
      %317 = vmatprep.subr.mxu0 %v242
      %318 = vmatpush1.msra.mxu0 %v241
      %319 = vmatprep.subr.mxu0 %v244
      %320 = vmatpush1.msra.mxu0 %v243
      %321 = vmatprep.subr.mxu0 %v246
      %322 = vmatpush1.msra.mxu0 %v245
      %323 = vmatprep.subr.mxu0 %v248
      %324 = vmatpush1.msra.mxu0 %v247
      %325 = vmatprep.subr.mxu0 %v250
      %326 = vmatpush1.msra.mxu0 %v249
      %327 = vmatprep.subr.mxu0 %v252
      %328 = vmatpush1.msra.mxu0 %v251
      %329 = vmatprep.subr.mxu0 %v254
      %330 = vmatpush1.msra.mxu0 %v253
      %331 = vmatprep.subr.mxu0 %v256
      %332 = vmatpush1.msra.mxu0 %v255
      %333 = vmatprep.subr.mxu0 %v258
      %334 = vmatpush1.msra.mxu0 %v257
      %335 = vmatprep.subr.mxu0 %v260
      %336 = vmatpush1.msra.mxu0 %v259
      %337 = vmatprep.subr.mxu0 %v262
      %338 = vmatpush1.msra.mxu0 %v261
      %339 = vmatprep.subr.mxu0 %v264
      %340 = vmatpush1.msra.mxu0 %v263
      %341 = vmatprep.subr.mxu0 %v266
      %342 = vmatpush1.msra.mxu0 %v265
      %343 = vmatprep.subr.mxu0 %v268
      %344 = vmatpush1.msra.mxu0 %v267
      %345 = vmatprep.subr.mxu0 %v270
      %346 = vmatpush1.msra.mxu0 %v269
      %347 = vmatprep.subr.mxu0 %v272
      %348 = vmatpush1.msra.mxu0 %v271
      %349 = vmatprep.subr.mxu0 %v274
      %350 = vmatpush1.msra.mxu0 %v273
      %351 = vmatprep.subr.mxu0 %v276
      %352 = vmatpush1.msra.mxu0 %v275
      %353 = vmatprep.subr.mxu0 %v278
      %354 = vmatpush1.msra.mxu0 %v277
      %355 = vmatprep.subr.mxu0 %v280
      %356 = vmatpush1.msra.mxu0 %v279
      %357 = vmatprep.subr.mxu0 %v282
      %358 = vmatpush1.msra.mxu0 %v281
      %359 = vmatprep.subr.mxu0 %v284
      %360 = vmatpush1.msra.mxu0 %v283
      %361 = vmatprep.subr.mxu0 %v286
      %362 = vmatpush1.msra.mxu0 %v285
      %363 = vmatprep.subr.mxu0 %v288
      %364 = vmatpush1.msra.mxu0 %v287
      %365 = vmatprep.subr.mxu0 %v290
      %366 = vmatpush1.msra.mxu0 %v289
      %367 = vmatprep.subr.mxu0 %v292
      %368 = vmatpush1.msra.mxu0 %v291
      %369 = vmatprep.subr.mxu0 %v294
      %370 = vmatpush1.msra.mxu0 %v293
      %371 = vmatprep.subr.mxu0 %v296
      %372 = vmatpush1.msra.mxu0 %v295
      %373 = vmatprep.subr.mxu0 %v298
      %374 = vmatpush1.msra.mxu0 %v297
      %375 = vmatprep.subr.mxu0 %v300
      %376 = vmatpush1.msra.mxu0 %v299
      %377 = vmatprep.subr.mxu0 %v302
      %378 = vmatpush1.msra.mxu0 %v301
      %379 = vmatprep.mubr.f32.mxu0 %v232
      %380 = vmatmul.mubr.f32.gmra.mrb[0].mxu0 %v231
      %v381 = vpop.f32.mrb[0].mxu0
      %v382 = vadd.f32 %v308, %v381
      %v383 = vpop.f32.mrb[0].mxu0
      %v384 = vadd.f32 %v312, %v383
      %385 = vmatprep.mubr.f32.mxu0 %v234
      %386 = vmatmul.mubr.f32.gmra.mrb[0].mxu0 %v233
      %v387 = vpop.f32.mrb[0].mxu0
      %v388 = vadd.f32 %v308, %v387
      %v389 = vpop.f32.mrb[0].mxu0
      %v390 = vadd.f32 %v312, %v389
      %391 = vmatprep.mubr.f32.mxu0 %v236
      %392 = vmatmul.mubr.f32.gmra.mrb[0].mxu0 %v235
      %v393 = vpop.f32.mrb[0].mxu0
      %v394 = vadd.f32 %v308, %v393
      %v395 = vpop.f32.mrb[0].mxu0
      %v396 = vadd.f32 %v312, %v395
      %397 = vmatprep.mubr.f32.mxu0 %v238
      %398 = vmatmul.mubr.f32.gmra.mrb[0].mxu0 %v237
      %v399 = vpop.f32.mrb[0].mxu0
      %v400 = vadd.f32 %v308, %v399
      %v401 = vpop.f32.mrb[0].mxu0
      %v402 = vadd.f32 %v312, %v401
      %403 = vdwg.mxu0
      %v404 = vld [vmem:[%s222] sm:$0xff]
      %v405 = vld [vmem:[%s222 + $0x8] sm:$0xff]
      %v406 = vld [vmem:[%s222 + $0x10] sm:$0xff]
      %v407 = vld [vmem:[%s222 + $0x18] sm:$0xff]
      %v408 = vld [vmem:[%s222 + $0x20] sm:$0xff]
      %v409 = vld [vmem:[%s222 + $0x28] sm:$0xff]
      %v410 = vld [vmem:[%s222 + $0x30] sm:$0xff]
      %v411 = vld [vmem:[%s222 + $0x38] sm:$0xff]
      %v412 = vadd.f32 %v382, %v404
      %v413 = vadd.f32 %v384, %v405
      %v414 = vadd.f32 %v388, %v406
      %v415 = vadd.f32 %v390, %v407
      %v416 = vadd.f32 %v394, %v408
      %v417 = vadd.f32 %v396, %v409
      %v418 = vadd.f32 %v400, %v410
      %v419 = vadd.f32 %v402, %v411
      %v420 = vmax.f32 %v412, 0.0
      %v421 = vmax.f32 %v413, 0.0
      %v422 = vmax.f32 %v414, 0.0
      %v423 = vmax.f32 %v415, 0.0
      %v424 = vmax.f32 %v416, 0.0
      %v425 = vmax.f32 %v417, 0.0
      %v426 = vmax.f32 %v418, 0.0
      %v427 = vmax.f32 %v419, 0.0
      %428 = vst [vmem:[%s229] sm:$0xff] %v420
      %429 = vst [vmem:[%s229 + $0x8] sm:$0xff] %v421
      %430 = vst [vmem:[%s229 + $0x10] sm:$0xff] %v422
      %431 = vst [vmem:[%s229 + $0x18] sm:$0xff] %v423
      %432 = vst [vmem:[%s229 + $0x20] sm:$0xff] %v424
      %433 = vst [vmem:[%s229 + $0x28] sm:$0xff] %v425
      %434 = vst [vmem:[%s229 + $0x30] sm:$0xff] %v426
      %435 = vst [vmem:[%s229 + $0x38] sm:$0xff] %v427
      %s436 = smul.u32 4, %s15
      %p437 = scmp.lt.s32.totalorder %s436, 7
      %s438 = scalar_select %p437, %s436, 7
      %s439 = smul.addr %s438, 2
      %s440 = smul.addr %s439, 8
      %s441 = scalar_lea.vmem %s4, %s440
      // Predicated region
      $region37: #{fno2d_forward.6} parent=35 // pred_check
        %p442 = pneg %p127
      $region38: #{fno2d_forward.6} parent=35 // pred_check_branch
        %444 = sbr.rel (%p442) target = $region40
      $region39: #{fno2d_forward.6} parent=35 // pred_region
        %s445 = smul.u32 4, %s15
      $region40: #{fno2d_forward.6} parent=35 // pred_fallthru
        _
    $region36: #{fno2d_forward.6} parent=5 // pred_fallthru
      _
    %p446 = scmp.le.s32.totalorder 2, %s10
    // Predicated region
    $region41: #{fno2d_forward.6} parent=5 // pred_check
      %p447 = pneg %p446
    $region42: #{fno2d_forward.6} parent=5 // pred_check_branch
      %449 = sbr.rel (%p447) target = $region44
    $region43: #{fno2d_forward.6} parent=5 // pred_region
      %s450 = ssub.s32 %s10, 2
      // Predicated region
      $region45: #{fno2d_forward.6} parent=43 // pred_check
        %p451 = pneg %p133
      $region46: #{fno2d_forward.6} parent=43 // pred_check_branch
        %453 = sbr.rel (%p451) target = $region48
      $region47: #{fno2d_forward.6} parent=43 // pred_region
        %s454 = smul.u32 4, %s16
        %p455 = scmp.lt.s32.totalorder %s454, 7
        %s456 = scalar_select %p455, %s454, 7
        %s457 = smul.addr %s456, 2
        %s458 = smul.addr %s457, 8
        %s459 = scalar_lea.vmem %s4, %s458
      $region48: #{fno2d_forward.6} parent=43 // pred_fallthru
        _
    $region44: #{fno2d_forward.6} parent=5 // pred_fallthru
      _
  $region6: #{fno2d_forward.6} parent=0 // loop_footer
    %s14 = sadd.s32 1, %s10
  $region7: #{fno2d_forward.6} parent=0 // loop_footer_branch
    %9 = sbr.rel target = $region3
  $region8: #{fno2d_forward.6} parent=0 // loop_exit
    _

// kernel: fno2d_forward.9
$region0: #{fno2d_forward.9}
  #allocation0 [shape = 'u32[]', space=smem, size = 0x4, offset = 0x4, fixed_abs, tag = 'smem constant byte address 0x4 - core index']
  #allocation1 [shape = 'u32[144,128]{1,0:T(1,128)}', space=vmem, size = 0x12000, scoped, tag = 'internal scratch']
  %s0 = inlined_call_operand.vmem [shape: f32[64,256], index: 0, kind: input, shape index: {}]
  %s1 = inlined_call_operand.vmem [shape: f32[256,256], index: 1, kind: input, shape index: {}]
  %s2 = inlined_call_operand.vmem [shape: f32[1,256], index: 2, kind: input, shape index: {}]
  %s3 = inlined_call_operand.vmem [shape: f32[64,256], index: 3, kind: input, shape index: {}]
  %s4 = inlined_call_operand.vmem [shape: f32[256,1024], index: 4, kind: input, shape index: {}]
  %s5 = inlined_call_operand.vmem [shape: f32[1,1024], index: 5, kind: input, shape index: {}]
  %s6 = inlined_call_operand.vmem [shape: f32[1024,8], index: 6, kind: input, shape index: {}]
  %s7 = inlined_call_operand.vmem [shape: f32[1,8], index: 7, kind: input, shape index: {}]
  %s8 = inlined_call_operand.vmem [shape: f32[64,8], index: 8, kind: output, shape index: {}]
  %s9 = sld [smem:[#allocation0]]
  $region65: #{fno2d_forward.9} parent=0
    _
  %s11 = ssub.s32 1, %s9
  %s12 = scalar_select 0, %s11, %s9
  loop: start=0, step=1, limit=4
  $region2: #{fno2d_forward.9} parent=0 // loop_pre_header
    _
  $region3: #{fno2d_forward.9} parent=0 // loop_header
    %s14 = sphi 0, %s18
    %p15 = scmp.ge.s32.totalorder %s14, 4
    %s24 = sphi 0, %s26
    %s27 = sphi 0, %s24
    %s28 = sphi 0, %s27
    %s44 = sphi 0, %s28
    %s48 = sphi 0, %s48
    %s50 = sphi 0, %s48
    %s51 = sphi 0, %s50
    %s65 = sphi 0, %s51
    %s69 = sphi 0, %s69
    %s71 = sphi 0, %s69
    %s72 = sphi 0, %s71
    %s86 = sphi 0, %s72
    %s92 = sphi 0, %s94
    %s95 = sphi 0, %s92
    %s96 = sphi 0, %s95
    %s112 = sphi 0, %s96
    %s116 = sphi 0, %s116
    %s118 = sphi 0, %s116
    %s119 = sphi 0, %s118
    %s133 = sphi 0, %s119
    %s137 = sphi 0, %s137
    %s139 = sphi 0, %s137
    %s140 = sphi 0, %s139
    %s154 = sphi 0, %s140
    %s158 = sphi 0, %s158
    %s160 = sphi 0, %s158
    %s161 = sphi 0, %s160
    %s175 = sphi 0, %s161
    %s179 = sphi 0, %s179
    %s181 = sphi 0, %s179
    %s182 = sphi 0, %s181
    %s196 = sphi 0, %s182
    %s202 = sphi 0, %s204
    %s205 = sphi 0, %s202
    %s206 = sphi 0, %s205
    %s222 = sphi 0, %s206
  $region4: #{fno2d_forward.9} parent=0 // loop_header_branch
    %17 = sbr.rel (%p15) target = $region8
  $region5: #{fno2d_forward.9} parent=0 // loop_body
    %s19 = ssub.s32 %s14, 1
    %s20 = ssub.s32 %s14, 2
    %s21 = sadd.s32 %s14, 1
    %s22 = ssub.s32 %s14, %s21
    %p23 = scmp.eq.s32.totalorder %s22, 0
    %s25 = sadd.s32 %s24, 1
    %s26 = scalar_select %p23, %s24, %s25
    %p29 = pneg %p23
    %p30 = scmp.eq.s32.totalorder %s14, 1
    %p31 = por %p29, %p30
    %p32 = scmp.ne.s32.totalorder %s24, %s27
    %p33 = scmp.eq.s32.totalorder %s14, 0
    %p34 = por %p32, %p33
    %p35 = scmp.ne.s32.totalorder %s24, %s27
    %p36 = scmp.eq.s32.totalorder %s19, 1
    %p37 = por %p35, %p36
    %p38 = scmp.ne.s32.totalorder %s27, %s28
    %p39 = scmp.eq.s32.totalorder %s19, 0
    %p40 = por %p38, %p39
    %p41 = scmp.ne.s32.totalorder %s27, %s28
    %p42 = scmp.eq.s32.totalorder %s20, 1
    %p43 = por %p41, %p42
    %p45 = scmp.ne.s32.totalorder %s28, %s44
    %p46 = scmp.eq.s32.totalorder %s20, 0
    %p47 = por %p45, %p46
    %s49 = sadd.s32 %s48, 1
    %p52 = scmp.eq.s32.totalorder %s14, 1
    %p53 = scmp.ne.s32.totalorder %s48, %s50
    %p54 = scmp.eq.s32.totalorder %s14, 0
    %p55 = por %p53, %p54
    %p56 = scmp.ne.s32.totalorder %s48, %s50
    %p57 = scmp.eq.s32.totalorder %s19, 1
    %p58 = por %p56, %p57
    %p59 = scmp.ne.s32.totalorder %s50, %s51
    %p60 = scmp.eq.s32.totalorder %s19, 0
    %p61 = por %p59, %p60
    %p62 = scmp.ne.s32.totalorder %s50, %s51
    %p63 = scmp.eq.s32.totalorder %s20, 1
    %p64 = por %p62, %p63
    %p66 = scmp.ne.s32.totalorder %s51, %s65
    %p67 = scmp.eq.s32.totalorder %s20, 0
    %p68 = por %p66, %p67
    %s70 = sadd.s32 %s69, 1
    %p73 = scmp.eq.s32.totalorder %s14, 1
    %p74 = scmp.ne.s32.totalorder %s69, %s71
    %p75 = scmp.eq.s32.totalorder %s14, 0
    %p76 = por %p74, %p75
    %p77 = scmp.ne.s32.totalorder %s69, %s71
    %p78 = scmp.eq.s32.totalorder %s19, 1
    %p79 = por %p77, %p78
    %p80 = scmp.ne.s32.totalorder %s71, %s72
    %p81 = scmp.eq.s32.totalorder %s19, 0
    %p82 = por %p80, %p81
    %p83 = scmp.ne.s32.totalorder %s71, %s72
    %p84 = scmp.eq.s32.totalorder %s20, 1
    %p85 = por %p83, %p84
    %p87 = scmp.ne.s32.totalorder %s72, %s86
    %p88 = scmp.eq.s32.totalorder %s20, 0
    %p89 = por %p87, %p88
    %s90 = ssub.s32 %s14, %s21
    %p91 = scmp.eq.s32.totalorder %s90, 0
    %s93 = sadd.s32 %s92, 1
    %s94 = scalar_select %p91, %s92, %s93
    %p97 = pneg %p91
    %p98 = scmp.eq.s32.totalorder %s14, 1
    %p99 = por %p97, %p98
    %p100 = scmp.ne.s32.totalorder %s92, %s95
    %p101 = scmp.eq.s32.totalorder %s14, 0
    %p102 = por %p100, %p101
    %p103 = scmp.ne.s32.totalorder %s92, %s95
    %p104 = scmp.eq.s32.totalorder %s19, 1
    %p105 = por %p103, %p104
    %p106 = scmp.ne.s32.totalorder %s95, %s96
    %p107 = scmp.eq.s32.totalorder %s19, 0
    %p108 = por %p106, %p107
    %p109 = scmp.ne.s32.totalorder %s95, %s96
    %p110 = scmp.eq.s32.totalorder %s20, 1
    %p111 = por %p109, %p110
    %p113 = scmp.ne.s32.totalorder %s96, %s112
    %p114 = scmp.eq.s32.totalorder %s20, 0
    %p115 = por %p113, %p114
    %s117 = sadd.s32 %s116, 1
    %p120 = scmp.eq.s32.totalorder %s14, 1
    %p121 = scmp.ne.s32.totalorder %s116, %s118
    %p122 = scmp.eq.s32.totalorder %s14, 0
    %p123 = por %p121, %p122
    %p124 = scmp.ne.s32.totalorder %s116, %s118
    %p125 = scmp.eq.s32.totalorder %s19, 1
    %p126 = por %p124, %p125
    %p127 = scmp.ne.s32.totalorder %s118, %s119
    %p128 = scmp.eq.s32.totalorder %s19, 0
    %p129 = por %p127, %p128
    %p130 = scmp.ne.s32.totalorder %s118, %s119
    %p131 = scmp.eq.s32.totalorder %s20, 1
    %p132 = por %p130, %p131
    %p134 = scmp.ne.s32.totalorder %s119, %s133
    %p135 = scmp.eq.s32.totalorder %s20, 0
    %p136 = por %p134, %p135
    %s138 = sadd.s32 %s137, 1
    %p141 = scmp.eq.s32.totalorder %s14, 1
    %p142 = scmp.ne.s32.totalorder %s137, %s139
    %p143 = scmp.eq.s32.totalorder %s14, 0
    %p144 = por %p142, %p143
    %p145 = scmp.ne.s32.totalorder %s137, %s139
    %p146 = scmp.eq.s32.totalorder %s19, 1
    %p147 = por %p145, %p146
    %p148 = scmp.ne.s32.totalorder %s139, %s140
    %p149 = scmp.eq.s32.totalorder %s19, 0
    %p150 = por %p148, %p149
    %p151 = scmp.ne.s32.totalorder %s139, %s140
    %p152 = scmp.eq.s32.totalorder %s20, 1
    %p153 = por %p151, %p152
    %p155 = scmp.ne.s32.totalorder %s140, %s154
    %p156 = scmp.eq.s32.totalorder %s20, 0
    %p157 = por %p155, %p156
    %s159 = sadd.s32 %s158, 1
    %p162 = scmp.eq.s32.totalorder %s14, 1
    %p163 = scmp.ne.s32.totalorder %s158, %s160
    %p164 = scmp.eq.s32.totalorder %s14, 0
    %p165 = por %p163, %p164
    %p166 = scmp.ne.s32.totalorder %s158, %s160
    %p167 = scmp.eq.s32.totalorder %s19, 1
    %p168 = por %p166, %p167
    %p169 = scmp.ne.s32.totalorder %s160, %s161
    %p170 = scmp.eq.s32.totalorder %s19, 0
    %p171 = por %p169, %p170
    %p172 = scmp.ne.s32.totalorder %s160, %s161
    %p173 = scmp.eq.s32.totalorder %s20, 1
    %p174 = por %p172, %p173
    %p176 = scmp.ne.s32.totalorder %s161, %s175
    %p177 = scmp.eq.s32.totalorder %s20, 0
    %p178 = por %p176, %p177
    %s180 = sadd.s32 %s179, 1
    %p183 = scmp.eq.s32.totalorder %s14, 1
    %p184 = scmp.ne.s32.totalorder %s179, %s181
    %p185 = scmp.eq.s32.totalorder %s14, 0
    %p186 = por %p184, %p185
    %p187 = scmp.ne.s32.totalorder %s179, %s181
    %p188 = scmp.eq.s32.totalorder %s19, 1
    %p189 = por %p187, %p188
    %p190 = scmp.ne.s32.totalorder %s181, %s182
    %p191 = scmp.eq.s32.totalorder %s19, 0
    %p192 = por %p190, %p191
    %p193 = scmp.ne.s32.totalorder %s181, %s182
    %p194 = scmp.eq.s32.totalorder %s20, 1
    %p195 = por %p193, %p194
    %p197 = scmp.ne.s32.totalorder %s182, %s196
    %p198 = scmp.eq.s32.totalorder %s20, 0
    %p199 = por %p197, %p198
    %s200 = ssub.s32 %s14, %s21
    %p201 = scmp.eq.s32.totalorder %s200, 0
    %s203 = sadd.s32 %s202, 1
    %s204 = scalar_select %p201, %s202, %s203
    %p207 = pneg %p201
    %p208 = scmp.eq.s32.totalorder %s14, 1
    %p209 = por %p207, %p208
    %p210 = scmp.ne.s32.totalorder %s202, %s205
    %p211 = scmp.eq.s32.totalorder %s14, 0
    %p212 = por %p210, %p211
    %p213 = scmp.ne.s32.totalorder %s202, %s205
    %p214 = scmp.eq.s32.totalorder %s19, 1
    %p215 = por %p213, %p214
    %p216 = scmp.ne.s32.totalorder %s205, %s206
    %p217 = scmp.eq.s32.totalorder %s19, 0
    %p218 = por %p216, %p217
    %p219 = scmp.ne.s32.totalorder %s205, %s206
    %p220 = scmp.eq.s32.totalorder %s20, 1
    %p221 = por %p219, %p220
    %p223 = scmp.ne.s32.totalorder %s206, %s222
    %p224 = scmp.eq.s32.totalorder %s20, 0
    %p225 = por %p223, %p224
    %p226 = scmp.le.s32.totalorder 1, %s14
    %p227 = scmp.lt.s32.totalorder %s14, 3
    %p228 = pnand %p226, %p227
    %p229 = pneg %p228
    // Predicated region
    $region9: #{fno2d_forward.9} parent=5 // pred_check
      _
    $region10: #{fno2d_forward.9} parent=5 // pred_check_branch
      %231 = sbr.rel (%p228) target = $region12
    $region11: #{fno2d_forward.9} parent=5 // pred_region
      %s232 = ssub.s32 %s14, 1
      // Predicated region
      $region13: #{fno2d_forward.9} parent=11 // pred_check
        %p233 = pneg %p61
      $region14: #{fno2d_forward.9} parent=11 // pred_check_branch
        %235 = sbr.rel (%p233) target = $region16
      $region15: #{fno2d_forward.9} parent=11 // pred_region
        _
      $region16: #{fno2d_forward.9} parent=11 // pred_fallthru
        _
      // Predicated region
      $region17: #{fno2d_forward.9} parent=11 // pred_check
        %p236 = pneg %p82
      $region18: #{fno2d_forward.9} parent=11 // pred_check_branch
        %238 = sbr.rel (%p236) target = $region20
      $region19: #{fno2d_forward.9} parent=11 // pred_region
        _
      $region20: #{fno2d_forward.9} parent=11 // pred_fallthru
        _
      // Predicated region
      $region21: #{fno2d_forward.9} parent=11 // pred_check
        %p239 = pneg %p129
      $region22: #{fno2d_forward.9} parent=11 // pred_check_branch
        %241 = sbr.rel (%p239) target = $region24
      $region23: #{fno2d_forward.9} parent=11 // pred_region
        _
      $region24: #{fno2d_forward.9} parent=11 // pred_fallthru
        _
      // Predicated region
      $region25: #{fno2d_forward.9} parent=11 // pred_check
        %p242 = pneg %p150
      $region26: #{fno2d_forward.9} parent=11 // pred_check_branch
        %244 = sbr.rel (%p242) target = $region28
      $region27: #{fno2d_forward.9} parent=11 // pred_region
        _
      $region28: #{fno2d_forward.9} parent=11 // pred_fallthru
        _
      // Predicated region
      $region29: #{fno2d_forward.9} parent=11 // pred_check
        %p245 = pneg %p171
      $region30: #{fno2d_forward.9} parent=11 // pred_check_branch
        %247 = sbr.rel (%p245) target = $region32
      $region31: #{fno2d_forward.9} parent=11 // pred_region
        _
      $region32: #{fno2d_forward.9} parent=11 // pred_fallthru
        _
      // Predicated region
      $region33: #{fno2d_forward.9} parent=11 // pred_check
        %p248 = pneg %p192
      $region34: #{fno2d_forward.9} parent=11 // pred_check_branch
        %250 = sbr.rel (%p248) target = $region36
      $region35: #{fno2d_forward.9} parent=11 // pred_region
        _
      $region36: #{fno2d_forward.9} parent=11 // pred_fallthru
        _
    $region12: #{fno2d_forward.9} parent=5 // pred_fallthru
      _
    %p251 = scmp.lt.s32.totalorder %s14, 2
    // Predicated region
    $region37: #{fno2d_forward.9} parent=5 // pred_check
      %p252 = pneg %p251
    $region38: #{fno2d_forward.9} parent=5 // pred_check_branch
      %254 = sbr.rel (%p252) target = $region40
    $region39: #{fno2d_forward.9} parent=5 // pred_region
      // Predicated region
      $region41: #{fno2d_forward.9} parent=39 // pred_check
        %p255 = pneg %p34
      $region42: #{fno2d_forward.9} parent=39 // pred_check_branch
        %257 = sbr.rel (%p255) target = $region44
      $region43: #{fno2d_forward.9} parent=39 // pred_region
        %s258 = smul.u32 4, %s14
        %p259 = scmp.lt.s32.totalorder %s258, 7
        %s260 = scalar_select %p259, %s258, 7
        %s261 = smul.addr %s260, 2
        %s262 = smul.addr %s261, 8
        %s263 = scalar_lea.vmem %s0, %s262
        %s264 = smul.u32 4, %s14
      $region44: #{fno2d_forward.9} parent=39 // pred_fallthru
        _
      // Predicated region
      $region45: #{fno2d_forward.9} parent=39 // pred_check
        %p265 = pneg %p102
      $region46: #{fno2d_forward.9} parent=39 // pred_check_branch
        %267 = sbr.rel (%p265) target = $region48
      $region47: #{fno2d_forward.9} parent=39 // pred_region
        %s268 = smul.u32 4, %s14
        %p269 = scmp.lt.s32.totalorder %s268, 7
        %s270 = scalar_select %p269, %s268, 7
        %s271 = smul.addr %s270, 2
        %s272 = smul.addr %s271, 8
        %s273 = scalar_lea.vmem %s3, %s272
        %s274 = smul.u32 4, %s14
      $region48: #{fno2d_forward.9} parent=39 // pred_fallthru
        _
    $region40: #{fno2d_forward.9} parent=5 // pred_fallthru
      _
    %p275 = scmp.le.s32.totalorder 1, %s14
    %p276 = scmp.lt.s32.totalorder %s14, 3
    %p277 = pnand %p275, %p276
    %p278 = pneg %p277
    // Predicated region
    $region49: #{fno2d_forward.9} parent=5 // pred_check
      _
    $region50: #{fno2d_forward.9} parent=5 // pred_check_branch
      %280 = sbr.rel (%p277) target = $region52
    $region51: #{fno2d_forward.9} parent=5 // pred_region
      %s281 = ssub.s32 %s14, 1
      %s282 = smul.u32 4, %s19
      %p283 = scmp.lt.s32.totalorder %s282, 7
      %s284 = scalar_select %p283, %s282, 7
      %s285 = smul.addr %s284, 2
      %s286 = smul.addr %s285, 8
      %s287 = scalar_lea.vmem %s0, %s286
      %p288 = pneg %p40
      %p289 = pneg %p37
      %p290 = pneg %p61
      %p291 = pneg %p58
      %p292 = pneg %p82
      %p293 = pneg %p79
      %s294 = smul.u32 4, %s19
      %p295 = scmp.lt.s32.totalorder %s294, 7
      %s296 = scalar_select %p295, %s294, 7
      %s297 = smul.addr %s296, 2
      %s298 = smul.addr %s297, 8
      %s299 = scalar_lea.vmem %s3, %s298
      %p300 = pneg %p108
      %p301 = pneg %p105
      %p302 = pneg %p129
      %p303 = pneg %p126
      %p304 = pneg %p150
      %p305 = pneg %p147
      %p306 = pneg %p171
      %p307 = pneg %p168
      %p308 = pneg %p192
      %p309 = pneg %p189
      %p310 = pneg %p218
      %p311 = pneg %p215
      %s312 = smul.u32 4, %s19
      %p313 = scmp.lt.s32.totalorder %s312, 7
      %s314 = scalar_select %p313, %s312, 7
      %s315 = smul.addr %s314, 8
      %s316 = scalar_lea.vmem %s8, %s315
      %s317 = smul.u32 4, %s19
      %p318 = scmp.lt.s32.totalorder %s317, 7
      %s319 = scalar_select %p318, %s317, 7
      %s320 = smul.addr %s319, 2
      %s321 = smul.addr %s320, 8
      %s322 = scalar_lea.vmem %s0, %s321
      %s323 = smul.u32 4, %s19
      %s324 = smul.u32 4, %s19
      %p325 = scmp.lt.s32.totalorder %s324, 7
      %s326 = scalar_select %p325, %s324, 7
      %s327 = smul.addr %s326, 2
      %s328 = smul.addr %s327, 8
      %s329 = scalar_lea.vmem %s3, %s328
      %s330 = smul.u32 4, %s19
      %s331 = smul.u32 4, %s19
      %p332 = scmp.lt.s32.totalorder %s331, 7
      %s333 = scalar_select %p332, %s331, 7
      %s334 = smul.addr %s333, 8
      %s335 = scalar_lea.vmem %s8, %s334
      %s336 = smul.u32 4, %s19
      %v337 = vld [vmem:[%s322] sm:$0xff]
      %v338 = vld [vmem:[%s322 + $0x8] sm:$0xff]
      %v339 = vld [vmem:[%s322 + $0x10] sm:$0xff]
      %v340 = vld [vmem:[%s322 + $0x18] sm:$0xff]
      %v341 = vld [vmem:[%s322 + $0x20] sm:$0xff]
      %v342 = vld [vmem:[%s322 + $0x28] sm:$0xff]
      %v343 = vld [vmem:[%s322 + $0x30] sm:$0xff]
      %v344 = vld [vmem:[%s322 + $0x38] sm:$0xff]
      %v345 = vld [vmem:[%s1] sm:$0xff]
      %v346 = vld [vmem:[%s1 + $0x8] sm:$0xff]
      %v347 = vld [vmem:[%s1 + $0x10] sm:$0xff]
      %v348 = vld [vmem:[%s1 + $0x18] sm:$0xff]
      %v349 = vld [vmem:[%s1 + $0x20] sm:$0xff]
      %v350 = vld [vmem:[%s1 + $0x28] sm:$0xff]
      %v351 = vld [vmem:[%s1 + $0x30] sm:$0xff]
      %v352 = vld [vmem:[%s1 + $0x38] sm:$0xff]
      %v353 = vld [vmem:[%s1 + $0x40] sm:$0xff]
      %v354 = vld [vmem:[%s1 + $0x48] sm:$0xff]
      %v355 = vld [vmem:[%s1 + $0x50] sm:$0xff]
      %v356 = vld [vmem:[%s1 + $0x58] sm:$0xff]
      %v357 = vld [vmem:[%s1 + $0x60] sm:$0xff]
      %v358 = vld [vmem:[%s1 + $0x68] sm:$0xff]
      %v359 = vld [vmem:[%s1 + $0x70] sm:$0xff]
      %v360 = vld [vmem:[%s1 + $0x78] sm:$0xff]
      %v361 = vld [vmem:[%s1 + $0x80] sm:$0xff]
      %v362 = vld [vmem:[%s1 + $0x88] sm:$0xff]
      %v363 = vld [vmem:[%s1 + $0x90] sm:$0xff]
      %v364 = vld [vmem:[%s1 + $0x98] sm:$0xff]
      %v365 = vld [vmem:[%s1 + $0xa0] sm:$0xff]
      %v366 = vld [vmem:[%s1 + $0xa8] sm:$0xff]
      %v367 = vld [vmem:[%s1 + $0xb0] sm:$0xff]
      %v368 = vld [vmem:[%s1 + $0xb8] sm:$0xff]
      %v369 = vld [vmem:[%s1 + $0xc0] sm:$0xff]
      %v370 = vld [vmem:[%s1 + $0xc8] sm:$0xff]
      %v371 = vld [vmem:[%s1 + $0xd0] sm:$0xff]
      %v372 = vld [vmem:[%s1 + $0xd8] sm:$0xff]
      %v373 = vld [vmem:[%s1 + $0xe0] sm:$0xff]
      %v374 = vld [vmem:[%s1 + $0xe8] sm:$0xff]
      %v375 = vld [vmem:[%s1 + $0xf0] sm:$0xff]
      %v376 = vld [vmem:[%s1 + $0xf8] sm:$0xff]
      %v377 = vld [vmem:[%s1 + $0x100] sm:$0xff]
      %v378 = vld [vmem:[%s1 + $0x108] sm:$0xff]
      %v379 = vld [vmem:[%s1 + $0x110] sm:$0xff]
      %v380 = vld [vmem:[%s1 + $0x118] sm:$0xff]
      %v381 = vld [vmem:[%s1 + $0x120] sm:$0xff]
      %v382 = vld [vmem:[%s1 + $0x128] sm:$0xff]
      %v383 = vld [vmem:[%s1 + $0x130] sm:$0xff]
      %v384 = vld [vmem:[%s1 + $0x138] sm:$0xff]
      %v385 = vld [vmem:[%s1 + $0x140] sm:$0xff]
      %v386 = vld [vmem:[%s1 + $0x148] sm:$0xff]
      %v387 = vld [vmem:[%s1 + $0x150] sm:$0xff]
      %v388 = vld [vmem:[%s1 + $0x158] sm:$0xff]
      %v389 = vld [vmem:[%s1 + $0x160] sm:$0xff]
      %v390 = vld [vmem:[%s1 + $0x168] sm:$0xff]
      %v391 = vld [vmem:[%s1 + $0x170] sm:$0xff]
      %v392 = vld [vmem:[%s1 + $0x178] sm:$0xff]
      %v393 = vld [vmem:[%s1 + $0x180] sm:$0xff]
      %v394 = vld [vmem:[%s1 + $0x188] sm:$0xff]
      %v395 = vld [vmem:[%s1 + $0x190] sm:$0xff]
      %v396 = vld [vmem:[%s1 + $0x198] sm:$0xff]
      %v397 = vld [vmem:[%s1 + $0x1a0] sm:$0xff]
      %v398 = vld [vmem:[%s1 + $0x1a8] sm:$0xff]
      %v399 = vld [vmem:[%s1 + $0x1b0] sm:$0xff]
      %v400 = vld [vmem:[%s1 + $0x1b8] sm:$0xff]
      %v401 = vld [vmem:[%s1 + $0x1c0] sm:$0xff]
      %v402 = vld [vmem:[%s1 + $0x1c8] sm:$0xff]
      %v403 = vld [vmem:[%s1 + $0x1d0] sm:$0xff]
      %v404 = vld [vmem:[%s1 + $0x1d8] sm:$0xff]
      %v405 = vld [vmem:[%s1 + $0x1e0] sm:$0xff]
      %v406 = vld [vmem:[%s1 + $0x1e8] sm:$0xff]
      %v407 = vld [vmem:[%s1 + $0x1f0] sm:$0xff]
      %v408 = vld [vmem:[%s1 + $0x1f8] sm:$0xff]
      %v409 = vld [vmem:[%s2] sm:$0x3]
      %v411 = vlaneseq
      %v412 = vshrl.u32 %v411, 7
      %v413 = vsub.s32 0, %v412
      %v414 = vrot.slane %v409, %v413
      %v415 = vlaneseq
      %v416 = vshrl.u32 %v415, 7
      %v417 = vsub.s32 1, %v416
      %v418 = vrot.slane %v409, %v417
      %421 = vmatprep.subr.mxu0 %v346
      %422 = vmatpush1.msra.mxu0 %v345
      %423 = vmatprep.subr.mxu0 %v348
      %424 = vmatpush1.msra.mxu0 %v347
      %425 = vmatprep.subr.mxu0 %v350
      %426 = vmatpush1.msra.mxu0 %v349
      %427 = vmatprep.subr.mxu0 %v352
      %428 = vmatpush1.msra.mxu0 %v351
      %429 = vmatprep.subr.mxu0 %v354
      %430 = vmatpush1.msra.mxu0 %v353
      %431 = vmatprep.subr.mxu0 %v356
      %432 = vmatpush1.msra.mxu0 %v355
      %433 = vmatprep.subr.mxu0 %v358
      %434 = vmatpush1.msra.mxu0 %v357
      %435 = vmatprep.subr.mxu0 %v360
      %436 = vmatpush1.msra.mxu0 %v359
      %437 = vmatprep.subr.mxu0 %v362
      %438 = vmatpush1.msra.mxu0 %v361
      %439 = vmatprep.subr.mxu0 %v364
      %440 = vmatpush1.msra.mxu0 %v363
      %441 = vmatprep.subr.mxu0 %v366
      %442 = vmatpush1.msra.mxu0 %v365
      %443 = vmatprep.subr.mxu0 %v368
      %444 = vmatpush1.msra.mxu0 %v367
      %445 = vmatprep.subr.mxu0 %v370
      %446 = vmatpush1.msra.mxu0 %v369
      %447 = vmatprep.subr.mxu0 %v372
      %448 = vmatpush1.msra.mxu0 %v371
      %449 = vmatprep.subr.mxu0 %v374
      %450 = vmatpush1.msra.mxu0 %v373
      %451 = vmatprep.subr.mxu0 %v376
      %452 = vmatpush1.msra.mxu0 %v375
      %453 = vmatprep.subr.mxu0 %v378
      %454 = vmatpush1.msra.mxu0 %v377
      %455 = vmatprep.subr.mxu0 %v380
      %456 = vmatpush1.msra.mxu0 %v379
      %457 = vmatprep.subr.mxu0 %v382
      %458 = vmatpush1.msra.mxu0 %v381
      %459 = vmatprep.subr.mxu0 %v384
      %460 = vmatpush1.msra.mxu0 %v383
      %461 = vmatprep.subr.mxu0 %v386
      %462 = vmatpush1.msra.mxu0 %v385
      %463 = vmatprep.subr.mxu0 %v388
      %464 = vmatpush1.msra.mxu0 %v387
      %465 = vmatprep.subr.mxu0 %v390
      %466 = vmatpush1.msra.mxu0 %v389
      %467 = vmatprep.subr.mxu0 %v392
      %468 = vmatpush1.msra.mxu0 %v391
      %469 = vmatprep.subr.mxu0 %v394
      %470 = vmatpush1.msra.mxu0 %v393
      %471 = vmatprep.subr.mxu0 %v396
      %472 = vmatpush1.msra.mxu0 %v395
      %473 = vmatprep.subr.mxu0 %v398
      %474 = vmatpush1.msra.mxu0 %v397
      %475 = vmatprep.subr.mxu0 %v400
      %476 = vmatpush1.msra.mxu0 %v399
      %477 = vmatprep.subr.mxu0 %v402
      %478 = vmatpush1.msra.mxu0 %v401
      %479 = vmatprep.subr.mxu0 %v404
      %480 = vmatpush1.msra.mxu0 %v403
      %481 = vmatprep.subr.mxu0 %v406
      %482 = vmatpush1.msra.mxu0 %v405
      %483 = vmatprep.subr.mxu0 %v408
      %484 = vmatpush1.msra.mxu0 %v407
      %485 = vmatprep.mubr.f32.mxu0 %v338
      %486 = vmatmul.mubr.f32.gmra.mrb[0].mxu0 %v337
      %v487 = vpop.f32.mrb[0].mxu0
      %v488 = vadd.f32 %v414, %v487
      %v489 = vpop.f32.mrb[0].mxu0
      %v490 = vadd.f32 %v418, %v489
      %491 = vmatprep.mubr.f32.mxu0 %v340
      %492 = vmatmul.mubr.f32.gmra.mrb[0].mxu0 %v339
      %v493 = vpop.f32.mrb[0].mxu0
      %v494 = vadd.f32 %v414, %v493
      %v495 = vpop.f32.mrb[0].mxu0
      %v496 = vadd.f32 %v418, %v495
      %497 = vmatprep.mubr.f32.mxu0 %v342
      %498 = vmatmul.mubr.f32.gmra.mrb[0].mxu0 %v341
      %v499 = vpop.f32.mrb[0].mxu0
      %v500 = vadd.f32 %v414, %v499
      %v501 = vpop.f32.mrb[0].mxu0
      %v502 = vadd.f32 %v418, %v501
      %503 = vmatprep.mubr.f32.mxu0 %v344
      %504 = vmatmul.mubr.f32.gmra.mrb[0].mxu0 %v343
      %v505 = vpop.f32.mrb[0].mxu0
      %v506 = vadd.f32 %v414, %v505
      %v507 = vpop.f32.mrb[0].mxu0
      %v508 = vadd.f32 %v418, %v507
      %509 = vdwg.mxu0
      %v510 = vld [vmem:[%s329] sm:$0xff]
      %v511 = vld [vmem:[%s329 + $0x8] sm:$0xff]
      %v512 = vld [vmem:[%s329 + $0x10] sm:$0xff]
      %v513 = vld [vmem:[%s329 + $0x18] sm:$0xff]
      %v514 = vld [vmem:[%s329 + $0x20] sm:$0xff]
      %v515 = vld [vmem:[%s329 + $0x28] sm:$0xff]
      %v516 = vld [vmem:[%s329 + $0x30] sm:$0xff]
      %v517 = vld [vmem:[%s329 + $0x38] sm:$0xff]
      %v518 = vadd.f32 %v488, %v510
      %v519 = vadd.f32 %v490, %v511
      %v520 = vadd.f32 %v494, %v512
      %v521 = vadd.f32 %v496, %v513
      %v522 = vadd.f32 %v500, %v514
      %v523 = vadd.f32 %v502, %v515
      %v524 = vadd.f32 %v506, %v516
      %v525 = vadd.f32 %v508, %v517
      %v526 = vld [vmem:[%s4] sm:$0xff]
      %v527 = vld [vmem:[%s4 + $0x8] sm:$0xff]
      %v528 = vld [vmem:[%s4 + $0x10] sm:$0xff]
      %v529 = vld [vmem:[%s4 + $0x18] sm:$0xff]
      %v530 = vld [vmem:[%s4 + $0x20] sm:$0xff]
      %v531 = vld [vmem:[%s4 + $0x28] sm:$0xff]
      %v532 = vld [vmem:[%s4 + $0x30] sm:$0xff]
      %v533 = vld [vmem:[%s4 + $0x38] sm:$0xff]
      %v534 = vld [vmem:[%s4 + $0x40] sm:$0xff]
      %v535 = vld [vmem:[%s4 + $0x48] sm:$0xff]
      %v536 = vld [vmem:[%s4 + $0x50] sm:$0xff]
      %v537 = vld [vmem:[%s4 + $0x58] sm:$0xff]
      %v538 = vld [vmem:[%s4 + $0x60] sm:$0xff]
      %v539 = vld [vmem:[%s4 + $0x68] sm:$0xff]
      %v540 = vld [vmem:[%s4 + $0x70] sm:$0xff]
      %v541 = vld [vmem:[%s4 + $0x78] sm:$0xff]
      %v542 = vld [vmem:[%s4 + $0x80] sm:$0xff]
      %v543 = vld [vmem:[%s4 + $0x88] sm:$0xff]
      %v544 = vld [vmem:[%s4 + $0x90] sm:$0xff]
      %v545 = vld [vmem:[%s4 + $0x98] sm:$0xff]
      %v546 = vld [vmem:[%s4 + $0xa0] sm:$0xff]
      %v547 = vld [vmem:[%s4 + $0xa8] sm:$0xff]
      %v548 = vld [vmem:[%s4 + $0xb0] sm:$0xff]
      %v549 = vld [vmem:[%s4 + $0xb8] sm:$0xff]
      %v550 = vld [vmem:[%s4 + $0xc0] sm:$0xff]
      %v551 = vld [vmem:[%s4 + $0xc8] sm:$0xff]
      %v552 = vld [vmem:[%s4 + $0xd0] sm:$0xff]
      %v553 = vld [vmem:[%s4 + $0xd8] sm:$0xff]
      %v554 = vld [vmem:[%s4 + $0xe0] sm:$0xff]
      %v555 = vld [vmem:[%s4 + $0xe8] sm:$0xff]
      %v556 = vld [vmem:[%s4 + $0xf0] sm:$0xff]
      %v557 = vld [vmem:[%s4 + $0xf8] sm:$0xff]
      %v558 = vld [vmem:[%s4 + $0x100] sm:$0xff]
      %v559 = vld [vmem:[%s4 + $0x108] sm:$0xff]
      %v560 = vld [vmem:[%s4 + $0x110] sm:$0xff]
      %v561 = vld [vmem:[%s4 + $0x118] sm:$0xff]
      %v562 = vld [vmem:[%s4 + $0x120] sm:$0xff]
      %v563 = vld [vmem:[%s4 + $0x128] sm:$0xff]
      %v564 = vld [vmem:[%s4 + $0x130] sm:$0xff]
      %v565 = vld [vmem:[%s4 + $0x138] sm:$0xff]
      %v566 = vld [vmem:[%s4 + $0x140] sm:$0xff]
      %v567 = vld [vmem:[%s4 + $0x148] sm:$0xff]
      %v568 = vld [vmem:[%s4 + $0x150] sm:$0xff]
      %v569 = vld [vmem:[%s4 + $0x158] sm:$0xff]
      %v570 = vld [vmem:[%s4 + $0x160] sm:$0xff]
      %v571 = vld [vmem:[%s4 + $0x168] sm:$0xff]
      %v572 = vld [vmem:[%s4 + $0x170] sm:$0xff]
      %v573 = vld [vmem:[%s4 + $0x178] sm:$0xff]
      %v574 = vld [vmem:[%s4 + $0x180] sm:$0xff]
      %v575 = vld [vmem:[%s4 + $0x188] sm:$0xff]
      %v576 = vld [vmem:[%s4 + $0x190] sm:$0xff]
      %v577 = vld [vmem:[%s4 + $0x198] sm:$0xff]
      %v578 = vld [vmem:[%s4 + $0x1a0] sm:$0xff]
      %v579 = vld [vmem:[%s4 + $0x1a8] sm:$0xff]
      %v580 = vld [vmem:[%s4 + $0x1b0] sm:$0xff]
      %v581 = vld [vmem:[%s4 + $0x1b8] sm:$0xff]
      %v582 = vld [vmem:[%s4 + $0x1c0] sm:$0xff]
      %v583 = vld [vmem:[%s4 + $0x1c8] sm:$0xff]
      %v584 = vld [vmem:[%s4 + $0x1d0] sm:$0xff]
      %v585 = vld [vmem:[%s4 + $0x1d8] sm:$0xff]
      %v586 = vld [vmem:[%s4 + $0x1e0] sm:$0xff]
      %v587 = vld [vmem:[%s4 + $0x1e8] sm:$0xff]
      %v588 = vld [vmem:[%s4 + $0x1f0] sm:$0xff]
      %v589 = vld [vmem:[%s4 + $0x1f8] sm:$0xff]
      %v590 = vld [vmem:[%s4 + $0x200] sm:$0xff]
      %v591 = vld [vmem:[%s4 + $0x208] sm:$0xff]
      %v592 = vld [vmem:[%s4 + $0x210] sm:$0xff]
      %v593 = vld [vmem:[%s4 + $0x218] sm:$0xff]
      %v594 = vld [vmem:[%s4 + $0x220] sm:$0xff]
      %v595 = vld [vmem:[%s4 + $0x228] sm:$0xff]
      %v596 = vld [vmem:[%s4 + $0x230] sm:$0xff]
      %v597 = vld [vmem:[%s4 + $0x238] sm:$0xff]
      %v598 = vld [vmem:[%s4 + $0x240] sm:$0xff]
      %v599 = vld [vmem:[%s4 + $0x248] sm:$0xff]
      %v600 = vld [vmem:[%s4 + $0x250] sm:$0xff]
      %v601 = vld [vmem:[%s4 + $0x258] sm:$0xff]
      %v602 = vld [vmem:[%s4 + $0x260] sm:$0xff]
      %v603 = vld [vmem:[%s4 + $0x268] sm:$0xff]
      %v604 = vld [vmem:[%s4 + $0x270] sm:$0xff]
      %v605 = vld [vmem:[%s4 + $0x278] sm:$0xff]
      %v606 = vld [vmem:[%s4 + $0x280] sm:$0xff]
      %v607 = vld [vmem:[%s4 + $0x288] sm:$0xff]
      %v608 = vld [vmem:[%s4 + $0x290] sm:$0xff]
      %v609 = vld [vmem:[%s4 + $0x298] sm:$0xff]
      %v610 = vld [vmem:[%s4 + $0x2a0] sm:$0xff]
      %v611 = vld [vmem:[%s4 + $0x2a8] sm:$0xff]
      %v612 = vld [vmem:[%s4 + $0x2b0] sm:$0xff]
      %v613 = vld [vmem:[%s4 + $0x2b8] sm:$0xff]
      %v614 = vld [vmem:[%s4 + $0x2c0] sm:$0xff]
      %v615 = vld [vmem:[%s4 + $0x2c8] sm:$0xff]
      %v616 = vld [vmem:[%s4 + $0x2d0] sm:$0xff]
      %v617 = vld [vmem:[%s4 + $0x2d8] sm:$0xff]
      %v618 = vld [vmem:[%s4 + $0x2e0] sm:$0xff]
      %v619 = vld [vmem:[%s4 + $0x2e8] sm:$0xff]
      %v620 = vld [vmem:[%s4 + $0x2f0] sm:$0xff]
      %v621 = vld [vmem:[%s4 + $0x2f8] sm:$0xff]
      %v622 = vld [vmem:[%s4 + $0x300] sm:$0xff]
      %v623 = vld [vmem:[%s4 + $0x308] sm:$0xff]
      %v624 = vld [vmem:[%s4 + $0x310] sm:$0xff]
      %v625 = vld [vmem:[%s4 + $0x318] sm:$0xff]
      %v626 = vld [vmem:[%s4 + $0x320] sm:$0xff]
      %v627 = vld [vmem:[%s4 + $0x328] sm:$0xff]
      %v628 = vld [vmem:[%s4 + $0x330] sm:$0xff]
      %v629 = vld [vmem:[%s4 + $0x338] sm:$0xff]
      %v630 = vld [vmem:[%s4 + $0x340] sm:$0xff]
      %v631 = vld [vmem:[%s4 + $0x348] sm:$0xff]
      %v632 = vld [vmem:[%s4 + $0x350] sm:$0xff]
      %v633 = vld [vmem:[%s4 + $0x358] sm:$0xff]
      %v634 = vld [vmem:[%s4 + $0x360] sm:$0xff]
      %v635 = vld [vmem:[%s4 + $0x368] sm:$0xff]
      %v636 = vld [vmem:[%s4 + $0x370] sm:$0xff]
      %v637 = vld [vmem:[%s4 + $0x378] sm:$0xff]
      %v638 = vld [vmem:[%s4 + $0x380] sm:$0xff]
      %v639 = vld [vmem:[%s4 + $0x388] sm:$0xff]
      %v640 = vld [vmem:[%s4 + $0x390] sm:$0xff]
      %v641 = vld [vmem:[%s4 + $0x398] sm:$0xff]
      %v642 = vld [vmem:[%s4 + $0x3a0] sm:$0xff]
      %v643 = vld [vmem:[%s4 + $0x3a8] sm:$0xff]
      %v644 = vld [vmem:[%s4 + $0x3b0] sm:$0xff]
      %v645 = vld [vmem:[%s4 + $0x3b8] sm:$0xff]
      %v646 = vld [vmem:[%s4 + $0x3c0] sm:$0xff]
      %v647 = vld [vmem:[%s4 + $0x3c8] sm:$0xff]
      %v648 = vld [vmem:[%s4 + $0x3d0] sm:$0xff]
      %v649 = vld [vmem:[%s4 + $0x3d8] sm:$0xff]
      %v650 = vld [vmem:[%s4 + $0x3e0] sm:$0xff]
      %v651 = vld [vmem:[%s4 + $0x3e8] sm:$0xff]
      %v652 = vld [vmem:[%s4 + $0x3f0] sm:$0xff]
      %v653 = vld [vmem:[%s4 + $0x3f8] sm:$0xff]
      %v654 = vld [vmem:[%s4 + $0x400] sm:$0xff]
      %v655 = vld [vmem:[%s4 + $0x408] sm:$0xff]
      %v656 = vld [vmem:[%s4 + $0x410] sm:$0xff]
      %v657 = vld [vmem:[%s4 + $0x418] sm:$0xff]
      %v658 = vld [vmem:[%s4 + $0x420] sm:$0xff]
      %v659 = vld [vmem:[%s4 + $0x428] sm:$0xff]
      %v660 = vld [vmem:[%s4 + $0x430] sm:$0xff]
      %v661 = vld [vmem:[%s4 + $0x438] sm:$0xff]
      %v662 = vld [vmem:[%s4 + $0x440] sm:$0xff]
      %v663 = vld [vmem:[%s4 + $0x448] sm:$0xff]
      %v664 = vld [vmem:[%s4 + $0x450] sm:$0xff]
      %v665 = vld [vmem:[%s4 + $0x458] sm:$0xff]
      %v666 = vld [vmem:[%s4 + $0x460] sm:$0xff]
      %v667 = vld [vmem:[%s4 + $0x468] sm:$0xff]
      %v668 = vld [vmem:[%s4 + $0x470] sm:$0xff]
      %v669 = vld [vmem:[%s4 + $0x478] sm:$0xff]
      %v670 = vld [vmem:[%s4 + $0x480] sm:$0xff]
      %v671 = vld [vmem:[%s4 + $0x488] sm:$0xff]
      %v672 = vld [vmem:[%s4 + $0x490] sm:$0xff]
      %v673 = vld [vmem:[%s4 + $0x498] sm:$0xff]
      %v674 = vld [vmem:[%s4 + $0x4a0] sm:$0xff]
      %v675 = vld [vmem:[%s4 + $0x4a8] sm:$0xff]
      %v676 = vld [vmem:[%s4 + $0x4b0] sm:$0xff]
      %v677 = vld [vmem:[%s4 + $0x4b8] sm:$0xff]
      %v678 = vld [vmem:[%s4 + $0x4c0] sm:$0xff]
      %v679 = vld [vmem:[%s4 + $0x4c8] sm:$0xff]
      %v680 = vld [vmem:[%s4 + $0x4d0] sm:$0xff]
      %v681 = vld [vmem:[%s4 + $0x4d8] sm:$0xff]
      %v682 = vld [vmem:[%s4 + $0x4e0] sm:$0xff]
      %v683 = vld [vmem:[%s4 + $0x4e8] sm:$0xff]
      %v684 = vld [vmem:[%s4 + $0x4f0] sm:$0xff]
      %v685 = vld [vmem:[%s4 + $0x4f8] sm:$0xff]
      %v686 = vld [vmem:[%s4 + $0x500] sm:$0xff]
      %v687 = vld [vmem:[%s4 + $0x508] sm:$0xff]
      %v688 = vld [vmem:[%s4 + $0x510] sm:$0xff]
      %v689 = vld [vmem:[%s4 + $0x518] sm:$0xff]
      %v690 = vld [vmem:[%s4 + $0x520] sm:$0xff]
      %v691 = vld [vmem:[%s4 + $0x528] sm:$0xff]
      %v692 = vld [vmem:[%s4 + $0x530] sm:$0xff]
      %v693 = vld [vmem:[%s4 + $0x538] sm:$0xff]
      %v694 = vld [vmem:[%s4 + $0x540] sm:$0xff]
      %v695 = vld [vmem:[%s4 + $0x548] sm:$0xff]
      %v696 = vld [vmem:[%s4 + $0x550] sm:$0xff]
      %v697 = vld [vmem:[%s4 + $0x558] sm:$0xff]
      %v698 = vld [vmem:[%s4 + $0x560] sm:$0xff]
      %v699 = vld [vmem:[%s4 + $0x568] sm:$0xff]
      %v700 = vld [vmem:[%s4 + $0x570] sm:$0xff]
      %v701 = vld [vmem:[%s4 + $0x578] sm:$0xff]
      %v702 = vld [vmem:[%s4 + $0x580] sm:$0xff]
      %v703 = vld [vmem:[%s4 + $0x588] sm:$0xff]
      %v704 = vld [vmem:[%s4 + $0x590] sm:$0xff]
      %v705 = vld [vmem:[%s4 + $0x598] sm:$0xff]
      %v706 = vld [vmem:[%s4 + $0x5a0] sm:$0xff]
      %v707 = vld [vmem:[%s4 + $0x5a8] sm:$0xff]
      %v708 = vld [vmem:[%s4 + $0x5b0] sm:$0xff]
      %v709 = vld [vmem:[%s4 + $0x5b8] sm:$0xff]
      %v710 = vld [vmem:[%s4 + $0x5c0] sm:$0xff]
      %v711 = vld [vmem:[%s4 + $0x5c8] sm:$0xff]
      %v712 = vld [vmem:[%s4 + $0x5d0] sm:$0xff]
      %v713 = vld [vmem:[%s4 + $0x5d8] sm:$0xff]
      %v714 = vld [vmem:[%s4 + $0x5e0] sm:$0xff]
      %v715 = vld [vmem:[%s4 + $0x5e8] sm:$0xff]
      %v716 = vld [vmem:[%s4 + $0x5f0] sm:$0xff]
      %v717 = vld [vmem:[%s4 + $0x5f8] sm:$0xff]
      %v718 = vld [vmem:[%s4 + $0x600] sm:$0xff]
      %v719 = vld [vmem:[%s4 + $0x608] sm:$0xff]
      %v720 = vld [vmem:[%s4 + $0x610] sm:$0xff]
      %v721 = vld [vmem:[%s4 + $0x618] sm:$0xff]
      %v722 = vld [vmem:[%s4 + $0x620] sm:$0xff]
      %v723 = vld [vmem:[%s4 + $0x628] sm:$0xff]
      %v724 = vld [vmem:[%s4 + $0x630] sm:$0xff]
      %v725 = vld [vmem:[%s4 + $0x638] sm:$0xff]
      %v726 = vld [vmem:[%s4 + $0x640] sm:$0xff]
      %v727 = vld [vmem:[%s4 + $0x648] sm:$0xff]
      %v728 = vld [vmem:[%s4 + $0x650] sm:$0xff]
      %v729 = vld [vmem:[%s4 + $0x658] sm:$0xff]
      %v730 = vld [vmem:[%s4 + $0x660] sm:$0xff]
      %v731 = vld [vmem:[%s4 + $0x668] sm:$0xff]
      %v732 = vld [vmem:[%s4 + $0x670] sm:$0xff]
      %v733 = vld [vmem:[%s4 + $0x678] sm:$0xff]
      %v734 = vld [vmem:[%s4 + $0x680] sm:$0xff]
      %v735 = vld [vmem:[%s4 + $0x688] sm:$0xff]
      %v736 = vld [vmem:[%s4 + $0x690] sm:$0xff]
      %v737 = vld [vmem:[%s4 + $0x698] sm:$0xff]
      %v738 = vld [vmem:[%s4 + $0x6a0] sm:$0xff]
      %v739 = vld [vmem:[%s4 + $0x6a8] sm:$0xff]
      %v740 = vld [vmem:[%s4 + $0x6b0] sm:$0xff]
      %v741 = vld [vmem:[%s4 + $0x6b8] sm:$0xff]
      %v742 = vld [vmem:[%s4 + $0x6c0] sm:$0xff]
      %v743 = vld [vmem:[%s4 + $0x6c8] sm:$0xff]
      %v744 = vld [vmem:[%s4 + $0x6d0] sm:$0xff]
      %v745 = vld [vmem:[%s4 + $0x6d8] sm:$0xff]
      %v746 = vld [vmem:[%s4 + $0x6e0] sm:$0xff]
      %v747 = vld [vmem:[%s4 + $0x6e8] sm:$0xff]
      %v748 = vld [vmem:[%s4 + $0x6f0] sm:$0xff]
      %v749 = vld [vmem:[%s4 + $0x6f8] sm:$0xff]
      %v750 = vld [vmem:[%s4 + $0x700] sm:$0xff]
      %v751 = vld [vmem:[%s4 + $0x708] sm:$0xff]
      %v752 = vld [vmem:[%s4 + $0x710] sm:$0xff]
      %v753 = vld [vmem:[%s4 + $0x718] sm:$0xff]
      %v754 = vld [vmem:[%s4 + $0x720] sm:$0xff]
      %v755 = vld [vmem:[%s4 + $0x728] sm:$0xff]
      %v756 = vld [vmem:[%s4 + $0x730] sm:$0xff]
      %v757 = vld [vmem:[%s4 + $0x738] sm:$0xff]
      %v758 = vld [vmem:[%s4 + $0x740] sm:$0xff]
      %v759 = vld [vmem:[%s4 + $0x748] sm:$0xff]
      %v760 = vld [vmem:[%s4 + $0x750] sm:$0xff]
      %v761 = vld [vmem:[%s4 + $0x758] sm:$0xff]
      %v762 = vld [vmem:[%s4 + $0x760] sm:$0xff]
      %v763 = vld [vmem:[%s4 + $0x768] sm:$0xff]
      %v764 = vld [vmem:[%s4 + $0x770] sm:$0xff]
      %v765 = vld [vmem:[%s4 + $0x778] sm:$0xff]
      %v766 = vld [vmem:[%s4 + $0x780] sm:$0xff]
      %v767 = vld [vmem:[%s4 + $0x788] sm:$0xff]
      %v768 = vld [vmem:[%s4 + $0x790] sm:$0xff]
      %v769 = vld [vmem:[%s4 + $0x798] sm:$0xff]
      %v770 = vld [vmem:[%s4 + $0x7a0] sm:$0xff]
      %v771 = vld [vmem:[%s4 + $0x7a8] sm:$0xff]
      %v772 = vld [vmem:[%s4 + $0x7b0] sm:$0xff]
      %v773 = vld [vmem:[%s4 + $0x7b8] sm:$0xff]
      %v774 = vld [vmem:[%s4 + $0x7c0] sm:$0xff]
      %v775 = vld [vmem:[%s4 + $0x7c8] sm:$0xff]
      %v776 = vld [vmem:[%s4 + $0x7d0] sm:$0xff]
      %v777 = vld [vmem:[%s4 + $0x7d8] sm:$0xff]
      %v778 = vld [vmem:[%s4 + $0x7e0] sm:$0xff]
      %v779 = vld [vmem:[%s4 + $0x7e8] sm:$0xff]
      %v780 = vld [vmem:[%s4 + $0x7f0] sm:$0xff]
      %v781 = vld [vmem:[%s4 + $0x7f8] sm:$0xff]
      %v782 = vld [vmem:[%s5] sm:$0xff]
      %v784 = vlaneseq
      %v785 = vshrl.u32 %v784, 7
      %v786 = vsub.s32 0, %v785
      %v787 = vrot.slane %v782, %v786
      %v788 = vlaneseq
      %v789 = vshrl.u32 %v788, 7
      %v790 = vsub.s32 1, %v789
      %v791 = vrot.slane %v782, %v790
      %v792 = vlaneseq
      %v793 = vshrl.u32 %v792, 7
      %v794 = vsub.s32 2, %v793
      %v795 = vrot.slane %v782, %v794
      %v796 = vlaneseq
      %v797 = vshrl.u32 %v796, 7
      %v798 = vsub.s32 3, %v797
      %v799 = vrot.slane %v782, %v798
      %v800 = vlaneseq
      %v801 = vshrl.u32 %v800, 7
      %v802 = vsub.s32 4, %v801
      %v803 = vrot.slane %v782, %v802
      %v804 = vlaneseq
      %v805 = vshrl.u32 %v804, 7
      %v806 = vsub.s32 5, %v805
      %v807 = vrot.slane %v782, %v806
      %v808 = vlaneseq
      %v809 = vshrl.u32 %v808, 7
      %v810 = vsub.s32 6, %v809
      %v811 = vrot.slane %v782, %v810
      %v812 = vlaneseq
      %v813 = vshrl.u32 %v812, 7
      %v814 = vsub.s32 7, %v813
      %v815 = vrot.slane %v782, %v814
      %824 = vmatprep.subr.mxu0 %v527
      %825 = vmatpush1.msra.mxu0 %v526
      %826 = vmatprep.subr.mxu0 %v535
      %827 = vmatpush1.msra.mxu0 %v534
      %828 = vmatprep.subr.mxu0 %v543
      %829 = vmatpush1.msra.mxu0 %v542
      %830 = vmatprep.subr.mxu0 %v551
      %831 = vmatpush1.msra.mxu0 %v550
      %832 = vmatprep.subr.mxu0 %v559
      %833 = vmatpush1.msra.mxu0 %v558
      %834 = vmatprep.subr.mxu0 %v567
      %835 = vmatpush1.msra.mxu0 %v566
      %836 = vmatprep.subr.mxu0 %v575
      %837 = vmatpush1.msra.mxu0 %v574
      %838 = vmatprep.subr.mxu0 %v583
      %839 = vmatpush1.msra.mxu0 %v582
      %840 = vmatprep.subr.mxu0 %v591
      %841 = vmatpush1.msra.mxu0 %v590
      %842 = vmatprep.subr.mxu0 %v599
      %843 = vmatpush1.msra.mxu0 %v598
      %844 = vmatprep.subr.mxu0 %v607
      %845 = vmatpush1.msra.mxu0 %v606
      %846 = vmatprep.subr.mxu0 %v615
      %847 = vmatpush1.msra.mxu0 %v614
      %848 = vmatprep.subr.mxu0 %v623
      %849 = vmatpush1.msra.mxu0 %v622
      %850 = vmatprep.subr.mxu0 %v631
      %851 = vmatpush1.msra.mxu0 %v630
      %852 = vmatprep.subr.mxu0 %v639
      %853 = vmatpush1.msra.mxu0 %v638
      %854 = vmatprep.subr.mxu0 %v647
      %855 = vmatpush1.msra.mxu0 %v646
      %856 = vmatprep.subr.mxu0 %v655
      %857 = vmatpush1.msra.mxu0 %v654
      %858 = vmatprep.subr.mxu0 %v663
      %859 = vmatpush1.msra.mxu0 %v662
      %860 = vmatprep.subr.mxu0 %v671
      %861 = vmatpush1.msra.mxu0 %v670
      %862 = vmatprep.subr.mxu0 %v679
      %863 = vmatpush1.msra.mxu0 %v678
      %864 = vmatprep.subr.mxu0 %v687
      %865 = vmatpush1.msra.mxu0 %v686
      %866 = vmatprep.subr.mxu0 %v695
      %867 = vmatpush1.msra.mxu0 %v694
      %868 = vmatprep.subr.mxu0 %v703
      %869 = vmatpush1.msra.mxu0 %v702
      %870 = vmatprep.subr.mxu0 %v711
      %871 = vmatpush1.msra.mxu0 %v710
      %872 = vmatprep.subr.mxu0 %v719
      %873 = vmatpush1.msra.mxu0 %v718
      %874 = vmatprep.subr.mxu0 %v727
      %875 = vmatpush1.msra.mxu0 %v726
      %876 = vmatprep.subr.mxu0 %v735
      %877 = vmatpush1.msra.mxu0 %v734
      %878 = vmatprep.subr.mxu0 %v743
      %879 = vmatpush1.msra.mxu0 %v742
      %880 = vmatprep.subr.mxu0 %v751
      %881 = vmatpush1.msra.mxu0 %v750
      %882 = vmatprep.subr.mxu0 %v759
      %883 = vmatpush1.msra.mxu0 %v758
      %884 = vmatprep.subr.mxu0 %v767
      %885 = vmatpush1.msra.mxu0 %v766
      %886 = vmatprep.subr.mxu0 %v775
      %887 = vmatpush1.msra.mxu0 %v774
      %888 = vmatprep.mubr.f32.mxu0 %v519
      %889 = vmatmul.mubr.f32.gmra.mrb[0].mxu0 %v518
      %v890 = vpop.f32.mrb[0].mxu0
      %v891 = vadd.f32 %v787, %v890
      %v892 = vpop.f32.mrb[0].mxu0
      %v893 = vadd.f32 %v791, %v892
      %894 = vmatprep.mubr.f32.mxu0 %v521
      %895 = vmatmul.mubr.f32.gmra.mrb[0].mxu0 %v520
      %v896 = vpop.f32.mrb[0].mxu0
      %v897 = vadd.f32 %v787, %v896
      %v898 = vpop.f32.mrb[0].mxu0
      %v899 = vadd.f32 %v791, %v898
      %900 = vmatprep.mubr.f32.mxu0 %v523
      %901 = vmatmul.mubr.f32.gmra.mrb[0].mxu0 %v522
      %v902 = vpop.f32.mrb[0].mxu0
      %v903 = vadd.f32 %v787, %v902
      %v904 = vpop.f32.mrb[0].mxu0
      %v905 = vadd.f32 %v791, %v904
      %906 = vmatprep.mubr.f32.mxu0 %v525
      %907 = vmatmul.mubr.f32.gmra.mrb[0].mxu0 %v524
      %v908 = vpop.f32.mrb[0].mxu0
      %v909 = vadd.f32 %v787, %v908
      %v910 = vpop.f32.mrb[0].mxu0
      %v911 = vadd.f32 %v791, %v910
      %912 = vdwg.mxu0
      %913 = vmatprep.subr.mxu0 %v529
      %914 = vmatpush1.msra.mxu0 %v528
      %915 = vmatprep.subr.mxu0 %v537
      %916 = vmatpush1.msra.mxu0 %v536
      %917 = vmatprep.subr.mxu0 %v545
      %918 = vmatpush1.msra.mxu0 %v544
      %919 = vmatprep.subr.mxu0 %v553
      %920 = vmatpush1.msra.mxu0 %v552
      %921 = vmatprep.subr.mxu0 %v561
      %922 = vmatpush1.msra.mxu0 %v560
      %923 = vmatprep.subr.mxu0 %v569
      %924 = vmatpush1.msra.mxu0 %v568
      %925 = vmatprep.subr.mxu0 %v577
      %926 = vmatpush1.msra.mxu0 %v576
      %927 = vmatprep.subr.mxu0 %v585
      %928 = vmatpush1.msra.mxu0 %v584
      %929 = vmatprep.subr.mxu0 %v593
      %930 = vmatpush1.msra.mxu0 %v592
      %931 = vmatprep.subr.mxu0 %v601
      %932 = vmatpush1.msra.mxu0 %v600
      %933 = vmatprep.subr.mxu0 %v609
      %934 = vmatpush1.msra.mxu0 %v608
      %935 = vmatprep.subr.mxu0 %v617
      %936 = vmatpush1.msra.mxu0 %v616
      %937 = vmatprep.subr.mxu0 %v625
      %938 = vmatpush1.msra.mxu0 %v624
      %939 = vmatprep.subr.mxu0 %v633
      %940 = vmatpush1.msra.mxu0 %v632
      %941 = vmatprep.subr.mxu0 %v641
      %942 = vmatpush1.msra.mxu0 %v640
      %943 = vmatprep.subr.mxu0 %v649
      %944 = vmatpush1.msra.mxu0 %v648
      %945 = vmatprep.subr.mxu0 %v657
      %946 = vmatpush1.msra.mxu0 %v656
      %947 = vmatprep.subr.mxu0 %v665
      %948 = vmatpush1.msra.mxu0 %v664
      %949 = vmatprep.subr.mxu0 %v673
      %950 = vmatpush1.msra.mxu0 %v672
      %951 = vmatprep.subr.mxu0 %v681
      %952 = vmatpush1.msra.mxu0 %v680
      %953 = vmatprep.subr.mxu0 %v689
      %954 = vmatpush1.msra.mxu0 %v688
      %955 = vmatprep.subr.mxu0 %v697
      %956 = vmatpush1.msra.mxu0 %v696
      %957 = vmatprep.subr.mxu0 %v705
      %958 = vmatpush1.msra.mxu0 %v704
      %959 = vmatprep.subr.mxu0 %v713
      %960 = vmatpush1.msra.mxu0 %v712
      %961 = vmatprep.subr.mxu0 %v721
      %962 = vmatpush1.msra.mxu0 %v720
      %963 = vmatprep.subr.mxu0 %v729
      %964 = vmatpush1.msra.mxu0 %v728
      %965 = vmatprep.subr.mxu0 %v737
      %966 = vmatpush1.msra.mxu0 %v736
      %967 = vmatprep.subr.mxu0 %v745
      %968 = vmatpush1.msra.mxu0 %v744
      %969 = vmatprep.subr.mxu0 %v753
      %970 = vmatpush1.msra.mxu0 %v752
      %971 = vmatprep.subr.mxu0 %v761
      %972 = vmatpush1.msra.mxu0 %v760
      %973 = vmatprep.subr.mxu0 %v769
      %974 = vmatpush1.msra.mxu0 %v768
      %975 = vmatprep.subr.mxu0 %v777
      %976 = vmatpush1.msra.mxu0 %v776
      %977 = vmatprep.mubr.f32.mxu0 %v519
      %978 = vmatmul.mubr.f32.gmra.mrb[0].mxu0 %v518
      %v979 = vpop.f32.mrb[0].mxu0
      %v980 = vadd.f32 %v795, %v979
      %v981 = vpop.f32.mrb[0].mxu0
      %v982 = vadd.f32 %v799, %v981
      %983 = vmatprep.mubr.f32.mxu0 %v521
      %984 = vmatmul.mubr.f32.gmra.mrb[0].mxu0 %v520
      %v985 = vpop.f32.mrb[0].mxu0
      %v986 = vadd.f32 %v795, %v985
      %v987 = vpop.f32.mrb[0].mxu0
      %v988 = vadd.f32 %v799, %v987
      %989 = vmatprep.mubr.f32.mxu0 %v523
      %990 = vmatmul.mubr.f32.gmra.mrb[0].mxu0 %v522
      %v991 = vpop.f32.mrb[0].mxu0
      %v992 = vadd.f32 %v795, %v991
      %v993 = vpop.f32.mrb[0].mxu0
      %v994 = vadd.f32 %v799, %v993
      %995 = vmatprep.mubr.f32.mxu0 %v525
      %996 = vmatmul.mubr.f32.gmra.mrb[0].mxu0 %v524
      %v997 = vpop.f32.mrb[0].mxu0
      %v998 = vadd.f32 %v795, %v997
      %v999 = vpop.f32.mrb[0].mxu0
      %v1000 = vadd.f32 %v799, %v999
      %1001 = vdwg.mxu0
      %1002 = vmatprep.subr.mxu0 %v531
      %1003 = vmatpush1.msra.mxu0 %v530
      %1004 = vmatprep.subr.mxu0 %v539
      %1005 = vmatpush1.msra.mxu0 %v538
      %1006 = vmatprep.subr.mxu0 %v547
      %1007 = vmatpush1.msra.mxu0 %v546
      %1008 = vmatprep.subr.mxu0 %v555
      %1009 = vmatpush1.msra.mxu0 %v554
      %1010 = vmatprep.subr.mxu0 %v563
      %1011 = vmatpush1.msra.mxu0 %v562
      %1012 = vmatprep.subr.mxu0 %v571
      %1013 = vmatpush1.msra.mxu0 %v570
      %1014 = vmatprep.subr.mxu0 %v579
      %1015 = vmatpush1.msra.mxu0 %v578
      %1016 = vmatprep.subr.mxu0 %v587
      %1017 = vmatpush1.msra.mxu0 %v586
      %1018 = vmatprep.subr.mxu0 %v595
      %1019 = vmatpush1.msra.mxu0 %v594
      %1020 = vmatprep.subr.mxu0 %v603
      %1021 = vmatpush1.msra.mxu0 %v602
      %1022 = vmatprep.subr.mxu0 %v611
      %1023 = vmatpush1.msra.mxu0 %v610
      %1024 = vmatprep.subr.mxu0 %v619
      %1025 = vmatpush1.msra.mxu0 %v618
      %1026 = vmatprep.subr.mxu0 %v627
      %1027 = vmatpush1.msra.mxu0 %v626
      %1028 = vmatprep.subr.mxu0 %v635
      %1029 = vmatpush1.msra.mxu0 %v634
      %1030 = vmatprep.subr.mxu0 %v643
      %1031 = vmatpush1.msra.mxu0 %v642
      %1032 = vmatprep.subr.mxu0 %v651
      %1033 = vmatpush1.msra.mxu0 %v650
      %1034 = vmatprep.subr.mxu0 %v659
      %1035 = vmatpush1.msra.mxu0 %v658
      %1036 = vmatprep.subr.mxu0 %v667
      %1037 = vmatpush1.msra.mxu0 %v666
      %1038 = vmatprep.subr.mxu0 %v675
      %1039 = vmatpush1.msra.mxu0 %v674
      %1040 = vmatprep.subr.mxu0 %v683
      %1041 = vmatpush1.msra.mxu0 %v682
      %1042 = vmatprep.subr.mxu0 %v691
      %1043 = vmatpush1.msra.mxu0 %v690
      %1044 = vmatprep.subr.mxu0 %v699
      %1045 = vmatpush1.msra.mxu0 %v698
      %1046 = vmatprep.subr.mxu0 %v707
      %1047 = vmatpush1.msra.mxu0 %v706
      %1048 = vmatprep.subr.mxu0 %v715
      %1049 = vmatpush1.msra.mxu0 %v714
      %1050 = vmatprep.subr.mxu0 %v723
      %1051 = vmatpush1.msra.mxu0 %v722
      %1052 = vmatprep.subr.mxu0 %v731
      %1053 = vmatpush1.msra.mxu0 %v730
      %1054 = vmatprep.subr.mxu0 %v739
      %1055 = vmatpush1.msra.mxu0 %v738
      %1056 = vmatprep.subr.mxu0 %v747
      %1057 = vmatpush1.msra.mxu0 %v746
      %1058 = vmatprep.subr.mxu0 %v755
      %1059 = vmatpush1.msra.mxu0 %v754
      %1060 = vmatprep.subr.mxu0 %v763
      %1061 = vmatpush1.msra.mxu0 %v762
      %1062 = vmatprep.subr.mxu0 %v771
      %1063 = vmatpush1.msra.mxu0 %v770
      %1064 = vmatprep.subr.mxu0 %v779
      %1065 = vmatpush1.msra.mxu0 %v778
      %1066 = vmatprep.mubr.f32.mxu0 %v519
      %1067 = vmatmul.mubr.f32.gmra.mrb[0].mxu0 %v518
      %v1068 = vpop.f32.mrb[0].mxu0
      %v1069 = vadd.f32 %v803, %v1068
      %v1070 = vpop.f32.mrb[0].mxu0
      %v1071 = vadd.f32 %v807, %v1070
      %1072 = vmatprep.mubr.f32.mxu0 %v521
      %1073 = vmatmul.mubr.f32.gmra.mrb[0].mxu0 %v520
      %v1074 = vpop.f32.mrb[0].mxu0
      %v1075 = vadd.f32 %v803, %v1074
      %v1076 = vpop.f32.mrb[0].mxu0
      %v1077 = vadd.f32 %v807, %v1076
      %1078 = vmatprep.mubr.f32.mxu0 %v523
      %1079 = vmatmul.mubr.f32.gmra.mrb[0].mxu0 %v522
      %v1080 = vpop.f32.mrb[0].mxu0
      %v1081 = vadd.f32 %v803, %v1080
      %v1082 = vpop.f32.mrb[0].mxu0
      %v1083 = vadd.f32 %v807, %v1082
      %1084 = vmatprep.mubr.f32.mxu0 %v525
      %1085 = vmatmul.mubr.f32.gmra.mrb[0].mxu0 %v524
      %v1086 = vpop.f32.mrb[0].mxu0
      %v1087 = vadd.f32 %v803, %v1086
      %v1088 = vpop.f32.mrb[0].mxu0
      %v1089 = vadd.f32 %v807, %v1088
      %1090 = vdwg.mxu0
      %1091 = vmatprep.subr.mxu0 %v533
      %1092 = vmatpush1.msra.mxu0 %v532
      %1093 = vmatprep.subr.mxu0 %v541
      %1094 = vmatpush1.msra.mxu0 %v540
      %1095 = vmatprep.subr.mxu0 %v549
      %1096 = vmatpush1.msra.mxu0 %v548
      %1097 = vmatprep.subr.mxu0 %v557
      %1098 = vmatpush1.msra.mxu0 %v556
      %1099 = vmatprep.subr.mxu0 %v565
      %1100 = vmatpush1.msra.mxu0 %v564
      %1101 = vmatprep.subr.mxu0 %v573
      %1102 = vmatpush1.msra.mxu0 %v572
      %1103 = vmatprep.subr.mxu0 %v581
      %1104 = vmatpush1.msra.mxu0 %v580
      %1105 = vmatprep.subr.mxu0 %v589
      %1106 = vmatpush1.msra.mxu0 %v588
      %1107 = vmatprep.subr.mxu0 %v597
      %1108 = vmatpush1.msra.mxu0 %v596
      %1109 = vmatprep.subr.mxu0 %v605
      %1110 = vmatpush1.msra.mxu0 %v604
      %1111 = vmatprep.subr.mxu0 %v613
      %1112 = vmatpush1.msra.mxu0 %v612
      %1113 = vmatprep.subr.mxu0 %v621
      %1114 = vmatpush1.msra.mxu0 %v620
      %1115 = vmatprep.subr.mxu0 %v629
      %1116 = vmatpush1.msra.mxu0 %v628
      %1117 = vmatprep.subr.mxu0 %v637
      %1118 = vmatpush1.msra.mxu0 %v636
      %1119 = vmatprep.subr.mxu0 %v645
      %1120 = vmatpush1.msra.mxu0 %v644
      %1121 = vmatprep.subr.mxu0 %v653
      %1122 = vmatpush1.msra.mxu0 %v652
      %1123 = vmatprep.subr.mxu0 %v661
      %1124 = vmatpush1.msra.mxu0 %v660
      %1125 = vmatprep.subr.mxu0 %v669
      %1126 = vmatpush1.msra.mxu0 %v668
      %1127 = vmatprep.subr.mxu0 %v677
      %1128 = vmatpush1.msra.mxu0 %v676
      %1129 = vmatprep.subr.mxu0 %v685
      %1130 = vmatpush1.msra.mxu0 %v684
      %1131 = vmatprep.subr.mxu0 %v693
      %1132 = vmatpush1.msra.mxu0 %v692
      %1133 = vmatprep.subr.mxu0 %v701
      %1134 = vmatpush1.msra.mxu0 %v700
      %1135 = vmatprep.subr.mxu0 %v709
      %1136 = vmatpush1.msra.mxu0 %v708
      %1137 = vmatprep.subr.mxu0 %v717
      %1138 = vmatpush1.msra.mxu0 %v716
      %1139 = vmatprep.subr.mxu0 %v725
      %1140 = vmatpush1.msra.mxu0 %v724
      %1141 = vmatprep.subr.mxu0 %v733
      %1142 = vmatpush1.msra.mxu0 %v732
      %1143 = vmatprep.subr.mxu0 %v741
      %1144 = vmatpush1.msra.mxu0 %v740
      %1145 = vmatprep.subr.mxu0 %v749
      %1146 = vmatpush1.msra.mxu0 %v748
      %1147 = vmatprep.subr.mxu0 %v757
      %1148 = vmatpush1.msra.mxu0 %v756
      %1149 = vmatprep.subr.mxu0 %v765
      %1150 = vmatpush1.msra.mxu0 %v764
      %1151 = vmatprep.subr.mxu0 %v773
      %1152 = vmatpush1.msra.mxu0 %v772
      %1153 = vmatprep.subr.mxu0 %v781
      %1154 = vmatpush1.msra.mxu0 %v780
      %1155 = vmatprep.mubr.f32.mxu0 %v519
      %1156 = vmatmul.mubr.f32.gmra.mrb[0].mxu0 %v518
      %v1157 = vpop.f32.mrb[0].mxu0
      %v1158 = vadd.f32 %v811, %v1157
      %v1159 = vpop.f32.mrb[0].mxu0
      %v1160 = vadd.f32 %v815, %v1159
      %1161 = vmatprep.mubr.f32.mxu0 %v521
      %1162 = vmatmul.mubr.f32.gmra.mrb[0].mxu0 %v520
      %v1163 = vpop.f32.mrb[0].mxu0
      %v1164 = vadd.f32 %v811, %v1163
      %v1165 = vpop.f32.mrb[0].mxu0
      %v1166 = vadd.f32 %v815, %v1165
      %1167 = vmatprep.mubr.f32.mxu0 %v523
      %1168 = vmatmul.mubr.f32.gmra.mrb[0].mxu0 %v522
      %v1169 = vpop.f32.mrb[0].mxu0
      %v1170 = vadd.f32 %v811, %v1169
      %v1171 = vpop.f32.mrb[0].mxu0
      %v1172 = vadd.f32 %v815, %v1171
      %1173 = vmatprep.mubr.f32.mxu0 %v525
      %1174 = vmatmul.mubr.f32.gmra.mrb[0].mxu0 %v524
      %v1175 = vpop.f32.mrb[0].mxu0
      %v1176 = vadd.f32 %v811, %v1175
      %v1177 = vpop.f32.mrb[0].mxu0
      %v1178 = vadd.f32 %v815, %v1177
      %1179 = vdwg.mxu0
      %v1180 = vmax.f32 %v891, 0.0
      %v1181 = vmax.f32 %v893, 0.0
      %v1182 = vmax.f32 %v980, 0.0
      %v1183 = vmax.f32 %v982, 0.0
      %v1184 = vmax.f32 %v1069, 0.0
      %v1185 = vmax.f32 %v1071, 0.0
      %v1186 = vmax.f32 %v1158, 0.0
      %v1187 = vmax.f32 %v1160, 0.0
      %v1188 = vmax.f32 %v897, 0.0
      %v1189 = vmax.f32 %v899, 0.0
      %v1190 = vmax.f32 %v986, 0.0
      %v1191 = vmax.f32 %v988, 0.0
      %v1192 = vmax.f32 %v1075, 0.0
      %v1193 = vmax.f32 %v1077, 0.0
      %v1194 = vmax.f32 %v1164, 0.0
      %v1195 = vmax.f32 %v1166, 0.0
      %v1196 = vmax.f32 %v903, 0.0
      %v1197 = vmax.f32 %v905, 0.0
      %v1198 = vmax.f32 %v992, 0.0
      %v1199 = vmax.f32 %v994, 0.0
      %v1200 = vmax.f32 %v1081, 0.0
      %v1201 = vmax.f32 %v1083, 0.0
      %v1202 = vmax.f32 %v1170, 0.0
      %v1203 = vmax.f32 %v1172, 0.0
      %v1204 = vmax.f32 %v909, 0.0
      %v1205 = vmax.f32 %v911, 0.0
      %v1206 = vmax.f32 %v998, 0.0
      %v1207 = vmax.f32 %v1000, 0.0
      %v1208 = vmax.f32 %v1087, 0.0
      %v1209 = vmax.f32 %v1089, 0.0
      %v1210 = vmax.f32 %v1176, 0.0
      %v1211 = vmax.f32 %v1178, 0.0
      %v1212 = vld [vmem:[%s6] sm:$0xff]
      %v1213 = vld [vmem:[%s6 + $0x8] sm:$0xff]
      %v1214 = vld [vmem:[%s6 + $0x10] sm:$0xff]
      %v1215 = vld [vmem:[%s6 + $0x18] sm:$0xff]
      %v1216 = vld [vmem:[%s6 + $0x20] sm:$0xff]
      %v1217 = vld [vmem:[%s6 + $0x28] sm:$0xff]
      %v1218 = vld [vmem:[%s6 + $0x30] sm:$0xff]
      %v1219 = vld [vmem:[%s6 + $0x38] sm:$0xff]
      %v1220 = vld [vmem:[%s6 + $0x40] sm:$0xff]
      %v1221 = vld [vmem:[%s6 + $0x48] sm:$0xff]
      %v1222 = vld [vmem:[%s6 + $0x50] sm:$0xff]
      %v1223 = vld [vmem:[%s6 + $0x58] sm:$0xff]
      %v1224 = vld [vmem:[%s6 + $0x60] sm:$0xff]
      %v1225 = vld [vmem:[%s6 + $0x68] sm:$0xff]
      %v1226 = vld [vmem:[%s6 + $0x70] sm:$0xff]
      %v1227 = vld [vmem:[%s6 + $0x78] sm:$0xff]
      %v1228 = vld [vmem:[%s6 + $0x80] sm:$0xff]
      %v1229 = vld [vmem:[%s6 + $0x88] sm:$0xff]
      %v1230 = vld [vmem:[%s6 + $0x90] sm:$0xff]
      %v1231 = vld [vmem:[%s6 + $0x98] sm:$0xff]
      %v1232 = vld [vmem:[%s6 + $0xa0] sm:$0xff]
      %v1233 = vld [vmem:[%s6 + $0xa8] sm:$0xff]
      %v1234 = vld [vmem:[%s6 + $0xb0] sm:$0xff]
      %v1235 = vld [vmem:[%s6 + $0xb8] sm:$0xff]
      %v1236 = vld [vmem:[%s6 + $0xc0] sm:$0xff]
      %v1237 = vld [vmem:[%s6 + $0xc8] sm:$0xff]
      %v1238 = vld [vmem:[%s6 + $0xd0] sm:$0xff]
      %v1239 = vld [vmem:[%s6 + $0xd8] sm:$0xff]
      %v1240 = vld [vmem:[%s6 + $0xe0] sm:$0xff]
      %v1241 = vld [vmem:[%s6 + $0xe8] sm:$0xff]
      %v1242 = vld [vmem:[%s6 + $0xf0] sm:$0xff]
      %v1243 = vld [vmem:[%s6 + $0xf8] sm:$0xff]
      %v1244 = vld [vmem:[%s6 + $0x100] sm:$0xff]
      %v1245 = vld [vmem:[%s6 + $0x108] sm:$0xff]
      %v1246 = vld [vmem:[%s6 + $0x110] sm:$0xff]
      %v1247 = vld [vmem:[%s6 + $0x118] sm:$0xff]
      %v1248 = vld [vmem:[%s6 + $0x120] sm:$0xff]
      %v1249 = vld [vmem:[%s6 + $0x128] sm:$0xff]
      %v1250 = vld [vmem:[%s6 + $0x130] sm:$0xff]
      %v1251 = vld [vmem:[%s6 + $0x138] sm:$0xff]
      %v1252 = vld [vmem:[%s6 + $0x140] sm:$0xff]
      %v1253 = vld [vmem:[%s6 + $0x148] sm:$0xff]
      %v1254 = vld [vmem:[%s6 + $0x150] sm:$0xff]
      %v1255 = vld [vmem:[%s6 + $0x158] sm:$0xff]
      %v1256 = vld [vmem:[%s6 + $0x160] sm:$0xff]
      %v1257 = vld [vmem:[%s6 + $0x168] sm:$0xff]
      %v1258 = vld [vmem:[%s6 + $0x170] sm:$0xff]
      %v1259 = vld [vmem:[%s6 + $0x178] sm:$0xff]
      %v1260 = vld [vmem:[%s6 + $0x180] sm:$0xff]
      %v1261 = vld [vmem:[%s6 + $0x188] sm:$0xff]
      %v1262 = vld [vmem:[%s6 + $0x190] sm:$0xff]
      %v1263 = vld [vmem:[%s6 + $0x198] sm:$0xff]
      %v1264 = vld [vmem:[%s6 + $0x1a0] sm:$0xff]
      %v1265 = vld [vmem:[%s6 + $0x1a8] sm:$0xff]
      %v1266 = vld [vmem:[%s6 + $0x1b0] sm:$0xff]
      %v1267 = vld [vmem:[%s6 + $0x1b8] sm:$0xff]
      %v1268 = vld [vmem:[%s6 + $0x1c0] sm:$0xff]
      %v1269 = vld [vmem:[%s6 + $0x1c8] sm:$0xff]
      %v1270 = vld [vmem:[%s6 + $0x1d0] sm:$0xff]
      %v1271 = vld [vmem:[%s6 + $0x1d8] sm:$0xff]
      %v1272 = vld [vmem:[%s6 + $0x1e0] sm:$0xff]
      %v1273 = vld [vmem:[%s6 + $0x1e8] sm:$0xff]
      %v1274 = vld [vmem:[%s6 + $0x1f0] sm:$0xff]
      %v1275 = vld [vmem:[%s6 + $0x1f8] sm:$0xff]
      %v1276 = vld [vmem:[%s6 + $0x200] sm:$0xff]
      %v1277 = vld [vmem:[%s6 + $0x208] sm:$0xff]
      %v1278 = vld [vmem:[%s6 + $0x210] sm:$0xff]
      %v1279 = vld [vmem:[%s6 + $0x218] sm:$0xff]
      %v1280 = vld [vmem:[%s6 + $0x220] sm:$0xff]
      %v1281 = vld [vmem:[%s6 + $0x228] sm:$0xff]
      %v1282 = vld [vmem:[%s6 + $0x230] sm:$0xff]
      %v1283 = vld [vmem:[%s6 + $0x238] sm:$0xff]
      %v1284 = vld [vmem:[%s6 + $0x240] sm:$0xff]
      %v1285 = vld [vmem:[%s6 + $0x248] sm:$0xff]
      %v1286 = vld [vmem:[%s6 + $0x250] sm:$0xff]
      %v1287 = vld [vmem:[%s6 + $0x258] sm:$0xff]
      %v1288 = vld [vmem:[%s6 + $0x260] sm:$0xff]
      %v1289 = vld [vmem:[%s6 + $0x268] sm:$0xff]
      %v1290 = vld [vmem:[%s6 + $0x270] sm:$0xff]
      %v1291 = vld [vmem:[%s6 + $0x278] sm:$0xff]
      %v1292 = vld [vmem:[%s6 + $0x280] sm:$0xff]
      %v1293 = vld [vmem:[%s6 + $0x288] sm:$0xff]
      %v1294 = vld [vmem:[%s6 + $0x290] sm:$0xff]
      %v1295 = vld [vmem:[%s6 + $0x298] sm:$0xff]
      %v1296 = vld [vmem:[%s6 + $0x2a0] sm:$0xff]
      %v1297 = vld [vmem:[%s6 + $0x2a8] sm:$0xff]
      %v1298 = vld [vmem:[%s6 + $0x2b0] sm:$0xff]
      %v1299 = vld [vmem:[%s6 + $0x2b8] sm:$0xff]
      %v1300 = vld [vmem:[%s6 + $0x2c0] sm:$0xff]
      %v1301 = vld [vmem:[%s6 + $0x2c8] sm:$0xff]
      %v1302 = vld [vmem:[%s6 + $0x2d0] sm:$0xff]
      %v1303 = vld [vmem:[%s6 + $0x2d8] sm:$0xff]
      %v1304 = vld [vmem:[%s6 + $0x2e0] sm:$0xff]
      %v1305 = vld [vmem:[%s6 + $0x2e8] sm:$0xff]
      %v1306 = vld [vmem:[%s6 + $0x2f0] sm:$0xff]
      %v1307 = vld [vmem:[%s6 + $0x2f8] sm:$0xff]
      %v1308 = vld [vmem:[%s6 + $0x300] sm:$0xff]
      %v1309 = vld [vmem:[%s6 + $0x308] sm:$0xff]
      %v1310 = vld [vmem:[%s6 + $0x310] sm:$0xff]
      %v1311 = vld [vmem:[%s6 + $0x318] sm:$0xff]
      %v1312 = vld [vmem:[%s6 + $0x320] sm:$0xff]
      %v1313 = vld [vmem:[%s6 + $0x328] sm:$0xff]
      %v1314 = vld [vmem:[%s6 + $0x330] sm:$0xff]
      %v1315 = vld [vmem:[%s6 + $0x338] sm:$0xff]
      %v1316 = vld [vmem:[%s6 + $0x340] sm:$0xff]
      %v1317 = vld [vmem:[%s6 + $0x348] sm:$0xff]
      %v1318 = vld [vmem:[%s6 + $0x350] sm:$0xff]
      %v1319 = vld [vmem:[%s6 + $0x358] sm:$0xff]
      %v1320 = vld [vmem:[%s6 + $0x360] sm:$0xff]
      %v1321 = vld [vmem:[%s6 + $0x368] sm:$0xff]
      %v1322 = vld [vmem:[%s6 + $0x370] sm:$0xff]
      %v1323 = vld [vmem:[%s6 + $0x378] sm:$0xff]
      %v1324 = vld [vmem:[%s6 + $0x380] sm:$0xff]
      %v1325 = vld [vmem:[%s6 + $0x388] sm:$0xff]
      %v1326 = vld [vmem:[%s6 + $0x390] sm:$0xff]
      %v1327 = vld [vmem:[%s6 + $0x398] sm:$0xff]
      %v1328 = vld [vmem:[%s6 + $0x3a0] sm:$0xff]
      %v1329 = vld [vmem:[%s6 + $0x3a8] sm:$0xff]
      %v1330 = vld [vmem:[%s6 + $0x3b0] sm:$0xff]
      %v1331 = vld [vmem:[%s6 + $0x3b8] sm:$0xff]
      %v1332 = vld [vmem:[%s6 + $0x3c0] sm:$0xff]
      %v1333 = vld [vmem:[%s6 + $0x3c8] sm:$0xff]
      %v1334 = vld [vmem:[%s6 + $0x3d0] sm:$0xff]
      %v1335 = vld [vmem:[%s6 + $0x3d8] sm:$0xff]
      %v1336 = vld [vmem:[%s6 + $0x3e0] sm:$0xff]
      %v1337 = vld [vmem:[%s6 + $0x3e8] sm:$0xff]
      %v1338 = vld [vmem:[%s6 + $0x3f0] sm:$0xff]
      %v1339 = vld [vmem:[%s6 + $0x3f8] sm:$0xff]
      %v1340 = vld [vmem:[%s7] sm:$0x1]
      %v1342 = vlaneseq
      %v1343 = vshrl.u32 %v1342, 7
      %v1344 = vsub.s32 0, %v1343
      %v1345 = vrot.slane %v1340, %v1344
      %1347 = vmatprep.subr.mxu0 0.0
      %1348 = vmatpush1.msra.mxu0 %v1212
      %1349 = vmatprep.subr.mxu0 0.0
      %1350 = vmatpush1.msra.mxu0 %v1213
      %1351 = vmatprep.subr.mxu0 0.0
      %1352 = vmatpush1.msra.mxu0 %v1214
      %1353 = vmatprep.subr.mxu0 0.0
      %1354 = vmatpush1.msra.mxu0 %v1215
      %1355 = vmatprep.subr.mxu0 0.0
      %1356 = vmatpush1.msra.mxu0 %v1216
      %1357 = vmatprep.subr.mxu0 0.0
      %1358 = vmatpush1.msra.mxu0 %v1217
      %1359 = vmatprep.subr.mxu0 0.0
      %1360 = vmatpush1.msra.mxu0 %v1218
      %1361 = vmatprep.subr.mxu0 0.0
      %1362 = vmatpush1.msra.mxu0 %v1219
      %1363 = vmatprep.subr.mxu0 0.0
      %1364 = vmatpush1.msra.mxu0 %v1220
      %1365 = vmatprep.subr.mxu0 0.0
      %1366 = vmatpush1.msra.mxu0 %v1221
      %1367 = vmatprep.subr.mxu0 0.0
      %1368 = vmatpush1.msra.mxu0 %v1222
      %1369 = vmatprep.subr.mxu0 0.0
      %1370 = vmatpush1.msra.mxu0 %v1223
      %1371 = vmatprep.subr.mxu0 0.0
      %1372 = vmatpush1.msra.mxu0 %v1224
      %1373 = vmatprep.subr.mxu0 0.0
      %1374 = vmatpush1.msra.mxu0 %v1225
      %1375 = vmatprep.subr.mxu0 0.0
      %1376 = vmatpush1.msra.mxu0 %v1226
      %1377 = vmatprep.subr.mxu0 0.0
      %1378 = vmatpush1.msra.mxu0 %v1227
      %1379 = vmatprep.subr.mxu0 0.0
      %1380 = vmatpush1.msra.mxu0 %v1228
      %1381 = vmatprep.subr.mxu0 0.0
      %1382 = vmatpush1.msra.mxu0 %v1229
      %1383 = vmatprep.subr.mxu0 0.0
      %1384 = vmatpush1.msra.mxu0 %v1230
      %1385 = vmatprep.subr.mxu0 0.0
      %1386 = vmatpush1.msra.mxu0 %v1231
      %1387 = vmatprep.subr.mxu0 0.0
      %1388 = vmatpush1.msra.mxu0 %v1232
      %1389 = vmatprep.subr.mxu0 0.0
      %1390 = vmatpush1.msra.mxu0 %v1233
      %1391 = vmatprep.subr.mxu0 0.0
      %1392 = vmatpush1.msra.mxu0 %v1234
      %1393 = vmatprep.subr.mxu0 0.0
      %1394 = vmatpush1.msra.mxu0 %v1235
      %1395 = vmatprep.subr.mxu0 0.0
      %1396 = vmatpush1.msra.mxu0 %v1236
      %1397 = vmatprep.subr.mxu0 0.0
      %1398 = vmatpush1.msra.mxu0 %v1237
      %1399 = vmatprep.subr.mxu0 0.0
      %1400 = vmatpush1.msra.mxu0 %v1238
      %1401 = vmatprep.subr.mxu0 0.0
      %1402 = vmatpush1.msra.mxu0 %v1239
      %1403 = vmatprep.subr.mxu0 0.0
      %1404 = vmatpush1.msra.mxu0 %v1240
      %1405 = vmatprep.subr.mxu0 0.0
      %1406 = vmatpush1.msra.mxu0 %v1241
      %1407 = vmatprep.subr.mxu0 0.0
      %1408 = vmatpush1.msra.mxu0 %v1242
      %1409 = vmatprep.subr.mxu0 0.0
      %1410 = vmatpush1.msra.mxu0 %v1243
      %1411 = vmatprep.mubr.f32.mxu0 %v1181
      %1412 = vmatmul.mubr.f32.gmra.mrb[0].mxu0 %v1180
      %v1413 = vpop.f32.mrb[0].mxu0
      %v1414 = vadd.f32 %v1345, %v1413
      %v1415 = vpop.f32.mrb[0].mxu0
      %1416 = vmatprep.mubr.f32.mxu0 %v1189
      %1417 = vmatmul.mubr.f32.gmra.mrb[0].mxu0 %v1188
      %v1418 = vpop.f32.mrb[0].mxu0
      %v1419 = vadd.f32 %v1345, %v1418
      %v1420 = vpop.f32.mrb[0].mxu0
      %1421 = vmatprep.mubr.f32.mxu0 %v1197
      %1422 = vmatmul.mubr.f32.gmra.mrb[0].mxu0 %v1196
      %v1423 = vpop.f32.mrb[0].mxu0
      %v1424 = vadd.f32 %v1345, %v1423
      %v1425 = vpop.f32.mrb[0].mxu0
      %1426 = vmatprep.mubr.f32.mxu0 %v1205
      %1427 = vmatmul.mubr.f32.gmra.mrb[0].mxu0 %v1204
      %v1428 = vpop.f32.mrb[0].mxu0
      %v1429 = vadd.f32 %v1345, %v1428
      %v1430 = vpop.f32.mrb[0].mxu0
      %1431 = vdwg.mxu0
      %1432 = vmatprep.subr.mxu0 0.0
      %1433 = vmatpush1.msra.mxu0 %v1244
      %1434 = vmatprep.subr.mxu0 0.0
      %1435 = vmatpush1.msra.mxu0 %v1245
      %1436 = vmatprep.subr.mxu0 0.0
      %1437 = vmatpush1.msra.mxu0 %v1246
      %1438 = vmatprep.subr.mxu0 0.0
      %1439 = vmatpush1.msra.mxu0 %v1247
      %1440 = vmatprep.subr.mxu0 0.0
      %1441 = vmatpush1.msra.mxu0 %v1248
      %1442 = vmatprep.subr.mxu0 0.0
      %1443 = vmatpush1.msra.mxu0 %v1249
      %1444 = vmatprep.subr.mxu0 0.0
      %1445 = vmatpush1.msra.mxu0 %v1250
      %1446 = vmatprep.subr.mxu0 0.0
      %1447 = vmatpush1.msra.mxu0 %v1251
      %1448 = vmatprep.subr.mxu0 0.0
      %1449 = vmatpush1.msra.mxu0 %v1252
      %1450 = vmatprep.subr.mxu0 0.0
      %1451 = vmatpush1.msra.mxu0 %v1253
      %1452 = vmatprep.subr.mxu0 0.0
      %1453 = vmatpush1.msra.mxu0 %v1254
      %1454 = vmatprep.subr.mxu0 0.0
      %1455 = vmatpush1.msra.mxu0 %v1255
      %1456 = vmatprep.subr.mxu0 0.0
      %1457 = vmatpush1.msra.mxu0 %v1256
      %1458 = vmatprep.subr.mxu0 0.0
      %1459 = vmatpush1.msra.mxu0 %v1257
      %1460 = vmatprep.subr.mxu0 0.0
      %1461 = vmatpush1.msra.mxu0 %v1258
      %1462 = vmatprep.subr.mxu0 0.0
      %1463 = vmatpush1.msra.mxu0 %v1259
      %1464 = vmatprep.subr.mxu0 0.0
      %1465 = vmatpush1.msra.mxu0 %v1260
      %1466 = vmatprep.subr.mxu0 0.0
      %1467 = vmatpush1.msra.mxu0 %v1261
      %1468 = vmatprep.subr.mxu0 0.0
      %1469 = vmatpush1.msra.mxu0 %v1262
      %1470 = vmatprep.subr.mxu0 0.0
      %1471 = vmatpush1.msra.mxu0 %v1263
      %1472 = vmatprep.subr.mxu0 0.0
      %1473 = vmatpush1.msra.mxu0 %v1264
      %1474 = vmatprep.subr.mxu0 0.0
      %1475 = vmatpush1.msra.mxu0 %v1265
      %1476 = vmatprep.subr.mxu0 0.0
      %1477 = vmatpush1.msra.mxu0 %v1266
      %1478 = vmatprep.subr.mxu0 0.0
      %1479 = vmatpush1.msra.mxu0 %v1267
      %1480 = vmatprep.subr.mxu0 0.0
      %1481 = vmatpush1.msra.mxu0 %v1268
      %1482 = vmatprep.subr.mxu0 0.0
      %1483 = vmatpush1.msra.mxu0 %v1269
      %1484 = vmatprep.subr.mxu0 0.0
      %1485 = vmatpush1.msra.mxu0 %v1270
      %1486 = vmatprep.subr.mxu0 0.0
      %1487 = vmatpush1.msra.mxu0 %v1271
      %1488 = vmatprep.subr.mxu0 0.0
      %1489 = vmatpush1.msra.mxu0 %v1272
      %1490 = vmatprep.subr.mxu0 0.0
      %1491 = vmatpush1.msra.mxu0 %v1273
      %1492 = vmatprep.subr.mxu0 0.0
      %1493 = vmatpush1.msra.mxu0 %v1274
      %1494 = vmatprep.subr.mxu0 0.0
      %1495 = vmatpush1.msra.mxu0 %v1275
      %1496 = vmatprep.mubr.f32.mxu0 %v1183
      %1497 = vmatmul.mubr.f32.gmra.mrb[0].mxu0 %v1182
      %v1498 = vpop.f32.mrb[0].mxu0
      %v1499 = vadd.f32 %v1414, %v1498
      %v1500 = vpop.f32.mrb[0].mxu0
      %1501 = vmatprep.mubr.f32.mxu0 %v1191
      %1502 = vmatmul.mubr.f32.gmra.mrb[0].mxu0 %v1190
      %v1503 = vpop.f32.mrb[0].mxu0
      %v1504 = vadd.f32 %v1419, %v1503
      %v1505 = vpop.f32.mrb[0].mxu0
      %1506 = vmatprep.mubr.f32.mxu0 %v1199
      %1507 = vmatmul.mubr.f32.gmra.mrb[0].mxu0 %v1198
      %v1508 = vpop.f32.mrb[0].mxu0
      %v1509 = vadd.f32 %v1424, %v1508
      %v1510 = vpop.f32.mrb[0].mxu0
      %1511 = vmatprep.mubr.f32.mxu0 %v1207
      %1512 = vmatmul.mubr.f32.gmra.mrb[0].mxu0 %v1206
      %v1513 = vpop.f32.mrb[0].mxu0
      %v1514 = vadd.f32 %v1429, %v1513
      %v1515 = vpop.f32.mrb[0].mxu0
      %1516 = vdwg.mxu0
      %1517 = vmatprep.subr.mxu0 0.0
      %1518 = vmatpush1.msra.mxu0 %v1276
      %1519 = vmatprep.subr.mxu0 0.0
      %1520 = vmatpush1.msra.mxu0 %v1277
      %1521 = vmatprep.subr.mxu0 0.0
      %1522 = vmatpush1.msra.mxu0 %v1278
      %1523 = vmatprep.subr.mxu0 0.0
      %1524 = vmatpush1.msra.mxu0 %v1279
      %1525 = vmatprep.subr.mxu0 0.0
      %1526 = vmatpush1.msra.mxu0 %v1280
      %1527 = vmatprep.subr.mxu0 0.0
      %1528 = vmatpush1.msra.mxu0 %v1281
      %1529 = vmatprep.subr.mxu0 0.0
      %1530 = vmatpush1.msra.mxu0 %v1282
      %1531 = vmatprep.subr.mxu0 0.0
      %1532 = vmatpush1.msra.mxu0 %v1283
      %1533 = vmatprep.subr.mxu0 0.0
      %1534 = vmatpush1.msra.mxu0 %v1284
      %1535 = vmatprep.subr.mxu0 0.0
      %1536 = vmatpush1.msra.mxu0 %v1285
      %1537 = vmatprep.subr.mxu0 0.0
      %1538 = vmatpush1.msra.mxu0 %v1286
      %1539 = vmatprep.subr.mxu0 0.0
      %1540 = vmatpush1.msra.mxu0 %v1287
      %1541 = vmatprep.subr.mxu0 0.0
      %1542 = vmatpush1.msra.mxu0 %v1288
      %1543 = vmatprep.subr.mxu0 0.0
      %1544 = vmatpush1.msra.mxu0 %v1289
      %1545 = vmatprep.subr.mxu0 0.0
      %1546 = vmatpush1.msra.mxu0 %v1290
      %1547 = vmatprep.subr.mxu0 0.0
      %1548 = vmatpush1.msra.mxu0 %v1291
      %1549 = vmatprep.subr.mxu0 0.0
      %1550 = vmatpush1.msra.mxu0 %v1292
      %1551 = vmatprep.subr.mxu0 0.0
      %1552 = vmatpush1.msra.mxu0 %v1293
      %1553 = vmatprep.subr.mxu0 0.0
      %1554 = vmatpush1.msra.mxu0 %v1294
      %1555 = vmatprep.subr.mxu0 0.0
      %1556 = vmatpush1.msra.mxu0 %v1295
      %1557 = vmatprep.subr.mxu0 0.0
      %1558 = vmatpush1.msra.mxu0 %v1296
      %1559 = vmatprep.subr.mxu0 0.0
      %1560 = vmatpush1.msra.mxu0 %v1297
      %1561 = vmatprep.subr.mxu0 0.0
      %1562 = vmatpush1.msra.mxu0 %v1298
      %1563 = vmatprep.subr.mxu0 0.0
      %1564 = vmatpush1.msra.mxu0 %v1299
      %1565 = vmatprep.subr.mxu0 0.0
      %1566 = vmatpush1.msra.mxu0 %v1300
      %1567 = vmatprep.subr.mxu0 0.0
      %1568 = vmatpush1.msra.mxu0 %v1301
      %1569 = vmatprep.subr.mxu0 0.0
      %1570 = vmatpush1.msra.mxu0 %v1302
      %1571 = vmatprep.subr.mxu0 0.0
      %1572 = vmatpush1.msra.mxu0 %v1303
      %1573 = vmatprep.subr.mxu0 0.0
      %1574 = vmatpush1.msra.mxu0 %v1304
      %1575 = vmatprep.subr.mxu0 0.0
      %1576 = vmatpush1.msra.mxu0 %v1305
      %1577 = vmatprep.subr.mxu0 0.0
      %1578 = vmatpush1.msra.mxu0 %v1306
      %1579 = vmatprep.subr.mxu0 0.0
      %1580 = vmatpush1.msra.mxu0 %v1307
      %1581 = vmatprep.mubr.f32.mxu0 %v1185
      %1582 = vmatmul.mubr.f32.gmra.mrb[0].mxu0 %v1184
      %v1583 = vpop.f32.mrb[0].mxu0
      %v1584 = vadd.f32 %v1499, %v1583
      %v1585 = vpop.f32.mrb[0].mxu0
      %1586 = vmatprep.mubr.f32.mxu0 %v1193
      %1587 = vmatmul.mubr.f32.gmra.mrb[0].mxu0 %v1192
      %v1588 = vpop.f32.mrb[0].mxu0
      %v1589 = vadd.f32 %v1504, %v1588
      %v1590 = vpop.f32.mrb[0].mxu0
      %1591 = vmatprep.mubr.f32.mxu0 %v1201
      %1592 = vmatmul.mubr.f32.gmra.mrb[0].mxu0 %v1200
      %v1593 = vpop.f32.mrb[0].mxu0
      %v1594 = vadd.f32 %v1509, %v1593
      %v1595 = vpop.f32.mrb[0].mxu0
      %1596 = vmatprep.mubr.f32.mxu0 %v1209
      %1597 = vmatmul.mubr.f32.gmra.mrb[0].mxu0 %v1208
      %v1598 = vpop.f32.mrb[0].mxu0
      %v1599 = vadd.f32 %v1514, %v1598
      %v1600 = vpop.f32.mrb[0].mxu0
      %1601 = vdwg.mxu0
      %1602 = vmatprep.subr.mxu0 0.0
      %1603 = vmatpush1.msra.mxu0 %v1308
      %1604 = vmatprep.subr.mxu0 0.0
      %1605 = vmatpush1.msra.mxu0 %v1309
      %1606 = vmatprep.subr.mxu0 0.0
      %1607 = vmatpush1.msra.mxu0 %v1310
      %1608 = vmatprep.subr.mxu0 0.0
      %1609 = vmatpush1.msra.mxu0 %v1311
      %1610 = vmatprep.subr.mxu0 0.0
      %1611 = vmatpush1.msra.mxu0 %v1312
      %1612 = vmatprep.subr.mxu0 0.0
      %1613 = vmatpush1.msra.mxu0 %v1313
      %1614 = vmatprep.subr.mxu0 0.0
      %1615 = vmatpush1.msra.mxu0 %v1314
      %1616 = vmatprep.subr.mxu0 0.0
      %1617 = vmatpush1.msra.mxu0 %v1315
      %1618 = vmatprep.subr.mxu0 0.0
      %1619 = vmatpush1.msra.mxu0 %v1316
      %1620 = vmatprep.subr.mxu0 0.0
      %1621 = vmatpush1.msra.mxu0 %v1317
      %1622 = vmatprep.subr.mxu0 0.0
      %1623 = vmatpush1.msra.mxu0 %v1318
      %1624 = vmatprep.subr.mxu0 0.0
      %1625 = vmatpush1.msra.mxu0 %v1319
      %1626 = vmatprep.subr.mxu0 0.0
      %1627 = vmatpush1.msra.mxu0 %v1320
      %1628 = vmatprep.subr.mxu0 0.0
      %1629 = vmatpush1.msra.mxu0 %v1321
      %1630 = vmatprep.subr.mxu0 0.0
      %1631 = vmatpush1.msra.mxu0 %v1322
      %1632 = vmatprep.subr.mxu0 0.0
      %1633 = vmatpush1.msra.mxu0 %v1323
      %1634 = vmatprep.subr.mxu0 0.0
      %1635 = vmatpush1.msra.mxu0 %v1324
      %1636 = vmatprep.subr.mxu0 0.0
      %1637 = vmatpush1.msra.mxu0 %v1325
      %1638 = vmatprep.subr.mxu0 0.0
      %1639 = vmatpush1.msra.mxu0 %v1326
      %1640 = vmatprep.subr.mxu0 0.0
      %1641 = vmatpush1.msra.mxu0 %v1327
      %1642 = vmatprep.subr.mxu0 0.0
      %1643 = vmatpush1.msra.mxu0 %v1328
      %1644 = vmatprep.subr.mxu0 0.0
      %1645 = vmatpush1.msra.mxu0 %v1329
      %1646 = vmatprep.subr.mxu0 0.0
      %1647 = vmatpush1.msra.mxu0 %v1330
      %1648 = vmatprep.subr.mxu0 0.0
      %1649 = vmatpush1.msra.mxu0 %v1331
      %1650 = vmatprep.subr.mxu0 0.0
      %1651 = vmatpush1.msra.mxu0 %v1332
      %1652 = vmatprep.subr.mxu0 0.0
      %1653 = vmatpush1.msra.mxu0 %v1333
      %1654 = vmatprep.subr.mxu0 0.0
      %1655 = vmatpush1.msra.mxu0 %v1334
      %1656 = vmatprep.subr.mxu0 0.0
      %1657 = vmatpush1.msra.mxu0 %v1335
      %1658 = vmatprep.subr.mxu0 0.0
      %1659 = vmatpush1.msra.mxu0 %v1336
      %1660 = vmatprep.subr.mxu0 0.0
      %1661 = vmatpush1.msra.mxu0 %v1337
      %1662 = vmatprep.subr.mxu0 0.0
      %1663 = vmatpush1.msra.mxu0 %v1338
      %1664 = vmatprep.subr.mxu0 0.0
      %1665 = vmatpush1.msra.mxu0 %v1339
      %1666 = vmatprep.mubr.f32.mxu0 %v1187
      %1667 = vmatmul.mubr.f32.gmra.mrb[0].mxu0 %v1186
      %v1668 = vpop.f32.mrb[0].mxu0
      %v1669 = vadd.f32 %v1584, %v1668
      %v1670 = vpop.f32.mrb[0].mxu0
      %1671 = vmatprep.mubr.f32.mxu0 %v1195
      %1672 = vmatmul.mubr.f32.gmra.mrb[0].mxu0 %v1194
      %v1673 = vpop.f32.mrb[0].mxu0
      %v1674 = vadd.f32 %v1589, %v1673
      %v1675 = vpop.f32.mrb[0].mxu0
      %1676 = vmatprep.mubr.f32.mxu0 %v1203
      %1677 = vmatmul.mubr.f32.gmra.mrb[0].mxu0 %v1202
      %v1678 = vpop.f32.mrb[0].mxu0
      %v1679 = vadd.f32 %v1594, %v1678
      %v1680 = vpop.f32.mrb[0].mxu0
      %1681 = vmatprep.mubr.f32.mxu0 %v1211
      %1682 = vmatmul.mubr.f32.gmra.mrb[0].mxu0 %v1210
      %v1683 = vpop.f32.mrb[0].mxu0
      %v1684 = vadd.f32 %v1599, %v1683
      %v1685 = vpop.f32.mrb[0].mxu0
      %1686 = vdwg.mxu0
      %vm1687 = vcmask 64512
      %1688 = vst.msk [vmem:[%s335] sm:$0xff] %vm1687, %v1669
      %1689 = vst.msk [vmem:[%s335 + $0x8] sm:$0xff] %vm1687, %v1674
      %1690 = vst.msk [vmem:[%s335 + $0x10] sm:$0xff] %vm1687, %v1679
      %1691 = vst.msk [vmem:[%s335 + $0x18] sm:$0xff] %vm1687, %v1684
      %s1692 = smul.u32 4, %s19
      %p1693 = scmp.lt.s32.totalorder %s1692, 7
      %s1694 = scalar_select %p1693, %s1692, 7
      %s1695 = smul.addr %s1694, 8
      %s1696 = scalar_lea.vmem %s8, %s1695
      // Predicated region
      $region53: #{fno2d_forward.9} parent=51 // pred_check
        %p1697 = pneg %p215
      $region54: #{fno2d_forward.9} parent=51 // pred_check_branch
        %1699 = sbr.rel (%p1697) target = $region56
      $region55: #{fno2d_forward.9} parent=51 // pred_region
        %s1700 = smul.u32 4, %s19
      $region56: #{fno2d_forward.9} parent=51 // pred_fallthru
        _
    $region52: #{fno2d_forward.9} parent=5 // pred_fallthru
      _
    %p1701 = scmp.le.s32.totalorder 2, %s14
    // Predicated region
    $region57: #{fno2d_forward.9} parent=5 // pred_check
      %p1702 = pneg %p1701
    $region58: #{fno2d_forward.9} parent=5 // pred_check_branch
      %1704 = sbr.rel (%p1702) target = $region60
    $region59: #{fno2d_forward.9} parent=5 // pred_region
      %s1705 = ssub.s32 %s14, 2
      // Predicated region
      $region61: #{fno2d_forward.9} parent=59 // pred_check
        %p1706 = pneg %p221
      $region62: #{fno2d_forward.9} parent=59 // pred_check_branch
        %1708 = sbr.rel (%p1706) target = $region64
      $region63: #{fno2d_forward.9} parent=59 // pred_region
        %s1709 = smul.u32 4, %s20
        %p1710 = scmp.lt.s32.totalorder %s1709, 7
        %s1711 = scalar_select %p1710, %s1709, 7
        %s1712 = smul.addr %s1711, 8
        %s1713 = scalar_lea.vmem %s8, %s1712
      $region64: #{fno2d_forward.9} parent=59 // pred_fallthru
        _
    $region60: #{fno2d_forward.9} parent=5 // pred_fallthru
      _
  $region6: #{fno2d_forward.9} parent=0 // loop_footer
    %s18 = sadd.s32 1, %s14
  $region7: #{fno2d_forward.9} parent=0 // loop_footer_branch
    %13 = sbr.rel target = $region3
  $region8: #{fno2d_forward.9} parent=0 // loop_exit
    _

</llo_original>
